<compile_context>
chip_gen: v5e
topology: v5e:2x2
jax: 0.10.0
libtpu: 0.0.40
codegen_flags: <defaults>
</compile_context>

<pallas_src>
import functools

import numpy as np
import jax
import jax.numpy as jnp
from jax import lax
from jax.experimental import pallas as pl
from jax.experimental.pallas import tpu as pltpu


_COMPUTE_DTYPE = jnp.bfloat16   # MXU operand dtype (accumulation stays f32)


def _st_lstm_kernel(patch_ref, cm_ref, wbig_ref, wol_ref, out_ref, mem_pad_ref,
                    *, Bb, H, W, NH, K, out_pad):
    """One batch chunk: all gates + c/m update + conv_o/conv_last + h."""
    pad = K // 2
    Mb = Bb * H * W
    C2 = 2 * NH

    # --- one big MXU matmul: gate pre-activations, order [i,i',f,f',g,g',o];
    #     forget bias already folded in via the ones-column / bias-row. -------
    pre = jnp.dot(patch_ref[...], wbig_ref[...],
                  preferred_element_type=jnp.float32)            # (Mb, 7*NH)

    gates_sig = jax.nn.sigmoid(pre[:, :4 * NH])                  # [i|i'|f|f']
    i_all = gates_sig[:, :C2]
    f_all = gates_sig[:, C2:]
    g_all = jnp.tanh(pre[:, 4 * NH:6 * NH])                      # [g|g']
    o_pre = pre[:, 6 * NH:]                                      # o_x + o_h

    cm = cm_ref[...].astype(jnp.float32)                         # [c_t | m_t]
    mem = f_all * cm + i_all * g_all                             # [c_new|m_new]

    # --- zero-halo scratch for conv_o.  The interior is fully overwritten
    #     every step, so only the border strips need zeroing.  Not gated on
    #     program_id==0: with a "parallel" grid axis each TensorCore has its
    #     own scratch and a once-only init would leave one core's halo dirty.
    if pad > 0:
        zr = jnp.zeros((Bb, pad, W + 2 * pad, C2), jnp.float32)
        zc = jnp.zeros((Bb, H + 2 * pad, pad, C2), jnp.float32)
        mem_pad_ref[:, 0:pad, :, :] = zr
        mem_pad_ref[:, pad + H:2 * pad + H, :, :] = zr
        mem_pad_ref[:, :, 0:pad, :] = zc
        mem_pad_ref[:, :, pad + W:2 * pad + W, :] = zc
    mem_pad_ref[:, pad:pad + H, pad:pad + W, :] = mem.reshape(Bb, H, W, C2)

    # --- conv_o + conv_last fused into ONE deep matmul:
    #     (Mb, K*K*2NH) slab @ (K*K*2NH, 2NH); output cols [o_conv | last]. ---
    windows = [mem_pad_ref[:, dy:dy + H, dx:dx + W, :].reshape(Mb, C2)
               for dy in range(K) for dx in range(K)]
    slab = jnp.concatenate(windows, axis=-1).astype(wol_ref.dtype)
    ol = jnp.dot(slab, wol_ref[...], preferred_element_type=jnp.float32)

    o_t = jax.nn.sigmoid(o_pre + ol[:, :NH])
    h_new = o_t * jnp.tanh(ol[:, NH:])

    # --- single lane-dense store: [c_new | m_new | h_new | zero pad] --------
    out = jnp.concatenate([mem, h_new], axis=-1)
    if out_pad:
        out = jnp.concatenate(
            [out, jnp.zeros((Mb, out_pad), jnp.float32)], axis=-1)
    out_ref[...] = out.astype(out_ref.dtype)


def prepare_st_lstm_weights(params, *, num_hidden, filter_size,
                            forget_bias=1.0, compute_dtype=_COMPUTE_DTYPE):
    """Fuse / reorder the five conv weights for the kernel.

    Pure XLA; hoist this out of a PredRNN time loop (compute once per layer).
    Returns:
      w_big : (K*K*(Cin+2NH)+1, 7*NH)  gate-column order [i,i',f,f',g,g',o];
              the last row is the forget-bias row (pairs with the ones column
              appended to the patches).
      wol   : (K*K*2NH, 2*NH)  columns [conv_o | conv_last-at-centre-tap].
    """
    wx, wh, wm, wo, wl = params
    NH, K = num_hidden, filter_size
    Cin = wx.shape[2]
    Px, Ph, Pm = K * K * Cin, K * K * NH, K * K * NH

    wx2 = wx.reshape(Px, 7 * NH)    # x gate order: i,f,g,i',f',g',o
    wh2 = wh.reshape(Ph, 4 * NH)    # h gate order: i,f,g,o
    wm2 = wm.reshape(Pm, 3 * NH)    # m gate order: i',f',g'
    gx = lambda g: wx2[:, g * NH:(g + 1) * NH]
    gh = lambda g: wh2[:, g * NH:(g + 1) * NH]
    gm = lambda g: wm2[:, g * NH:(g + 1) * NH]
    zh = jnp.zeros((Ph, NH), wx2.dtype)
    zm = jnp.zeros((Pm, NH), wx2.dtype)
    wx_ord = jnp.concatenate(
        [gx(0), gx(3), gx(1), gx(4), gx(2), gx(5), gx(6)], axis=1)
    wh_ord = jnp.concatenate([gh(0), zh, gh(1), zh, gh(2), zh, gh(3)], axis=1)
    wm_ord = jnp.concatenate([zm, gm(0), zm, gm(1), zm, gm(2), zm], axis=1)
    bias_row = jnp.concatenate(
        [jnp.zeros((1, 2 * NH), wx2.dtype),
         jnp.full((1, 2 * NH), forget_bias, wx2.dtype),
         jnp.zeros((1, 3 * NH), wx2.dtype)], axis=1)
    w_big = jnp.concatenate([wx_ord, wh_ord, wm_ord, bias_row], axis=0)

    wo_flat = wo.reshape(K * K * 2 * NH, NH)
    centre = (K // 2) * K + (K // 2)
    wl_rows = jnp.zeros((K * K * 2 * NH, NH), wl.dtype)
    wl_rows = wl_rows.at[centre * 2 * NH:(centre + 1) * 2 * NH, :].set(wl)
    wol = jnp.concatenate([wo_flat, wl_rows], axis=1)

    return w_big.astype(compute_dtype), wol.astype(compute_dtype)


def st_lstm_cell(x, h, c, m, params, *, filter_size, forget_bias=1.0):
    """Pallas SpatioTemporalLSTMCell forward.  NHWC activations, HWIO weights."""
    B, H, W, Cin = x.shape
    NH = h.shape[-1]
    K = filter_size
    assert K % 2 == 1, "only odd filter_size supported (matches 'SAME' padding)"
    pad = K // 2

    w_big, wol = prepare_st_lstm_weights(
        params, num_hidden=NH, filter_size=K, forget_bias=forget_bias)

    # ---- wrapper-side im2col, emitted in bf16 (halves patch HBM traffic) ---
    def im2col(a):
        Bc, Hc, Wc, C = a.shape
        ap = jnp.pad(a, ((0, 0), (pad, pad), (pad, pad), (0, 0)))
        taps = [ap[:, dy:dy + Hc, dx:dx + Wc, :]
                for dy in range(K) for dx in range(K)]
        return jnp.concatenate(taps, axis=-1).reshape(Bc * Hc * Wc, K * K * C)

    M = B * H * W
    patches = jnp.concatenate(
        [im2col(x), im2col(h), im2col(m), jnp.ones((M, 1), x.dtype)],
        axis=-1).astype(_COMPUTE_DTYPE)                       # (M, Pb)
    Pb = patches.shape[-1]

    cm = jnp.concatenate([c, m], axis=-1).reshape(M, 2 * NH)  # [c_t | m_t] f32

    # ---- batch chunking: prefer >= 2 grid steps (v7x dual-TC + pipelining)
    #      under a row cap sized for the 64 MiB v7x VMEM budget. -------------
    ROW_CAP = 4096
    bb = None
    for want_two_steps in (True, False):
        if bb is not None:
            break
        for d in range(B, 0, -1):
            rows = d * H * W
            if B % d or rows > ROW_CAP or rows % 16:
                continue
            if want_two_steps and B // d < 2:
                continue
            bb = d
            break
    if bb is None:
        bb = B   # TODO(synk): spatial (row-of-H) tiling with halo for huge H*W
    nb = B // bb
    Mb = bb * H * W

    OUT_W = ((3 * NH + 127) // 128) * 128     # lane-dense output width
    out_pad = OUT_W - 3 * NH

    kernel = functools.partial(_st_lstm_kernel, Bb=bb, H=H, W=W, NH=NH, K=K,
                               out_pad=out_pad)

    # Explicit VMEM budget: double-buffered streamed operands + scratch +
    # rough in-kernel intermediates; capped at the v7x 64 MiB physical VMEM.
    est = (2 * Mb * Pb * 2 + 2 * Mb * 2 * NH * 4 + 2 * Pb * 7 * NH * 2
           + 2 * K * K * 2 * NH * 2 * NH * 2 + 2 * Mb * OUT_W * 4
           + bb * (H + 2 * pad) * (W + 2 * pad) * 2 * NH * 4
           + Mb * (7 * NH + (K * K + 1) * 2 * NH + 4 * NH) * 4)
    vmem_limit = int(min(64 * 2**20, max(32 * 2**20, 2 * est)))

    grid_spec = pltpu.PrefetchScalarGridSpec(
        num_scalar_prefetch=0,
        grid=(nb,),
        in_specs=[
            pl.BlockSpec((Mb, Pb), lambda b: (b, 0)),
            pl.BlockSpec((Mb, 2 * NH), lambda b: (b, 0)),
            pl.BlockSpec((Pb, 7 * NH), lambda b: (0, 0)),
            pl.BlockSpec((K * K * 2 * NH, 2 * NH), lambda b: (0, 0)),
        ],
        out_specs=pl.BlockSpec((Mb, OUT_W), lambda b: (b, 0)),
        scratch_shapes=[
            pltpu.VMEM((bb, H + 2 * pad, W + 2 * pad, 2 * NH), jnp.float32)],
    )

    out = pl.pallas_call(
        kernel,
        out_shape=jax.ShapeDtypeStruct((M, OUT_W), x.dtype),
        grid_spec=grid_spec,
        compiler_params=pltpu.CompilerParams(
            dimension_semantics=("parallel",),
            vmem_limit_bytes=vmem_limit),
    )(patches, cm, w_big, wol)

    out = out.reshape(B, H, W, OUT_W)
    c_new = out[..., :NH]
    m_new = out[..., NH:2 * NH]
    h_new = out[..., 2 * NH:3 * NH]
    return h_new, c_new, m_new


def st_lstm_cell_ref(x, h, c, m, params, *, filter_size, forget_bias=1.0):
    """Pure-JAX reference (mirrors the PyTorch forward, NHWC)."""
    wx, wh, wm, wo, wl = params
    NH = h.shape[-1]
    dn = ('NHWC', 'HWIO', 'NHWC')
    conv = lambda inp, w: lax.conv_general_dilated(
        inp, w, (1, 1), 'SAME', dimension_numbers=dn)

    x_c, h_c, m_c = conv(x, wx), conv(h, wh), conv(m, wm)
    sp = lambda a, i: a[..., i * NH:(i + 1) * NH]

    i_t = jax.nn.sigmoid(sp(x_c, 0) + sp(h_c, 0))
    f_t = jax.nn.sigmoid(sp(x_c, 1) + sp(h_c, 1) + forget_bias)
    g_t = jnp.tanh(sp(x_c, 2) + sp(h_c, 2))
    c_new = f_t * c + i_t * g_t

    i_tp = jax.nn.sigmoid(sp(x_c, 3) + sp(m_c, 0))
    f_tp = jax.nn.sigmoid(sp(x_c, 4) + sp(m_c, 1) + forget_bias)
    g_tp = jnp.tanh(sp(x_c, 5) + sp(m_c, 2))
    m_new = f_tp * m + i_tp * g_tp

    mem = jnp.concatenate([c_new, m_new], axis=-1)
    o_t = jax.nn.sigmoid(sp(x_c, 6) + sp(h_c, 3) + conv(mem, wo))
    h_new = o_t * jnp.tanh(jnp.einsum('bhwc,cd->bhwd', mem, wl))
    return h_new, c_new, m_new


if __name__ == "__main__":
    # Module config (layer_norm=False, stride=1).
    B, Cin, NH, H, W, K = 2, 4, 32, 16, 16, 3

    key = jax.random.PRNGKey(0)
    ks = jax.random.split(key, 9)
    f32 = jnp.float32

    x_t = jax.random.normal(ks[0], (B, H, W, Cin), f32)
    h_t = jax.random.normal(ks[1], (B, H, W, NH), f32)
    c_t = jax.random.normal(ks[2], (B, H, W, NH), f32)
    m_t = jax.random.normal(ks[3], (B, H, W, NH), f32)

    scale = 0.1
    wx = scale * jax.random.normal(ks[4], (K, K, Cin, 7 * NH), f32)
    wh = scale * jax.random.normal(ks[5], (K, K, NH, 4 * NH), f32)
    wm = scale * jax.random.normal(ks[6], (K, K, NH, 3 * NH), f32)
    wo = scale * jax.random.normal(ks[7], (K, K, 2 * NH, NH), f32)
    wl = scale * jax.random.normal(ks[8], (2 * NH, NH), f32)  # 1x1 conv_last
    params = (wx, wh, wm, wo, wl)

    h_new, c_new, m_new = st_lstm_cell(x_t, h_t, c_t, m_t, params,
                                       filter_size=K)
    jax.block_until_ready((h_new, c_new, m_new))

    h_ref, c_ref, m_ref = st_lstm_cell_ref(x_t, h_t, c_t, m_t, params,
                                           filter_size=K)
    # Tolerance loosened vs. the f32-MXU version: the kernel feeds the MXU
    # bf16 operands (f32 accumulation), the reference is pure f32.
    np.testing.assert_allclose(np.asarray(h_new), np.asarray(h_ref),
                               rtol=5e-2, atol=1e-1)
    np.testing.assert_allclose(np.asarray(c_new), np.asarray(c_ref),
                               rtol=5e-2, atol=1e-1)
    np.testing.assert_allclose(np.asarray(m_new), np.asarray(m_ref),
                               rtol=5e-2, atol=1e-1)

    print("KERNEL_OK")
</pallas_src>

<mosaic_0001>
module attributes {stable_mosaic.version = 11 : i64} {
  func.func @_st_lstm_kernel(%arg0: i32, %arg1: memref<256x613xbf16, #tpu.memory_space<vmem>>, %arg2: memref<256x64xf32, #tpu.memory_space<vmem>>, %arg3: memref<613x224xbf16, #tpu.memory_space<vmem>>, %arg4: memref<576x64xbf16, #tpu.memory_space<vmem>>, %arg5: memref<256x128xf32, #tpu.memory_space<vmem>>, %arg6: memref<1x18x18x64xf32, #tpu.memory_space<vmem>>) attributes {dimension_semantics = [#tpu.dimension_semantics<parallel>], iteration_bounds = array<i64: 2>, scalar_prefetch = 0 : i64, scratch_operands = 1 : i64, tpu.core_type = #tpu.core_type<tc>, window_params = [{transform_indices = @transform_0, window_bounds = array<i64: 256, 613>}, {transform_indices = @transform_1, window_bounds = array<i64: 256, 64>}, {pipeline_mode = #tpu.pipeline_mode<synchronous>, transform_indices = @transform_2, window_bounds = array<i64: 613, 224>}, {pipeline_mode = #tpu.pipeline_mode<synchronous>, transform_indices = @transform_3, window_bounds = array<i64: 576, 64>}, {transform_indices = @transform_4, window_bounds = array<i64: 256, 128>}]} {
    %c0 = arith.constant 0 : index
    %c0_0 = arith.constant 0 : index
    %0 = vector.load %arg1[%c0, %c0_0] : memref<256x613xbf16, #tpu.memory_space<vmem>>, vector<256x613xbf16>
    %c0_1 = arith.constant 0 : index
    %c0_2 = arith.constant 0 : index
    %1 = vector.load %arg3[%c0_1, %c0_2] : memref<613x224xbf16, #tpu.memory_space<vmem>>, vector<613x224xbf16>
    %cst = arith.constant dense<0.000000e+00> : vector<256x224xf32>
    %2 = tpu.matmul %0, %1, %cst {dimension_numbers = #tpu.dot_dimension_numbers<[1], [0], [0], [1], [0, 0, 1, 1], [], []>} : vector<256x613xbf16>, vector<613x224xbf16>, vector<256x224xf32> -> vector<256x224xf32>
    %3 = vector.extract_strided_slice %2 {offsets = [0, 0], sizes = [256, 128], strides = [1, 1]} : vector<256x224xf32> to vector<256x128xf32>
    %4 = arith.negf %3 : vector<256x128xf32>
    %5 = math.exp %4 : vector<256x128xf32>
    %cst_3 = arith.constant 1.000000e+00 : f32
    %6 = vector.broadcast %cst_3 : f32 to vector<256x128xf32>
    %7 = arith.addf %6, %5 : vector<256x128xf32>
    %8 = arith.divf %6, %7 : vector<256x128xf32>
    %9 = vector.extract_strided_slice %8 {offsets = [0, 0], sizes = [256, 64], strides = [1, 1]} : vector<256x128xf32> to vector<256x64xf32>
    %10 = vector.extract_strided_slice %8 {offsets = [0, 64], sizes = [256, 64], strides = [1, 1]} : vector<256x128xf32> to vector<256x64xf32>
    %11 = vector.extract_strided_slice %2 {offsets = [0, 128], sizes = [256, 64], strides = [1, 1]} : vector<256x224xf32> to vector<256x64xf32>
    %12 = math.tanh %11 : vector<256x64xf32>
    %13 = vector.extract_strided_slice %2 {offsets = [0, 192], sizes = [256, 32], strides = [1, 1]} : vector<256x224xf32> to vector<256x32xf32>
    %c0_4 = arith.constant 0 : index
    %c0_5 = arith.constant 0 : index
    %14 = vector.load %arg2[%c0_4, %c0_5] : memref<256x64xf32, #tpu.memory_space<vmem>>, vector<256x64xf32>
    %15 = arith.mulf %10, %14 : vector<256x64xf32>
    %16 = arith.mulf %9, %12 : vector<256x64xf32>
    %17 = arith.addf %15, %16 : vector<256x64xf32>
    %cst_6 = arith.constant 0.000000e+00 : f32
    %18 = vector.broadcast %cst_6 : f32 to vector<1x1x18x64xf32>
    %cst_7 = arith.constant 0.000000e+00 : f32
    %19 = vector.broadcast %cst_7 : f32 to vector<1x18x1x64xf32>
    %c0_8 = arith.constant 0 : index
    %c0_9 = arith.constant 0 : index
    %c0_10 = arith.constant 0 : index
    %c0_11 = arith.constant 0 : index
    %20 = vector.load %arg6[%c0_8, %c0_9, %c0_10, %c0_11] : memref<1x18x18x64xf32, #tpu.memory_space<vmem>>, vector<1x1x18x64xf32>
    tpu.vector_store %arg6[%c0_8, %c0_9, %c0_10, %c0_11], %18 {strides = array<i32>} : memref<1x18x18x64xf32, #tpu.memory_space<vmem>>, vector<1x1x18x64xf32>,
    %c0_12 = arith.constant 0 : index
    %c17 = arith.constant 17 : index
    %c0_13 = arith.constant 0 : index
    %c0_14 = arith.constant 0 : index
    %21 = vector.load %arg6[%c0_12, %c17, %c0_13, %c0_14] : memref<1x18x18x64xf32, #tpu.memory_space<vmem>>, vector<1x1x18x64xf32>
    tpu.vector_store %arg6[%c0_12, %c17, %c0_13, %c0_14], %18 {strides = array<i32>} : memref<1x18x18x64xf32, #tpu.memory_space<vmem>>, vector<1x1x18x64xf32>,
    %c0_15 = arith.constant 0 : index
    %c0_16 = arith.constant 0 : index
    %c0_17 = arith.constant 0 : index
    %c0_18 = arith.constant 0 : index
    %22 = vector.load %arg6[%c0_15, %c0_16, %c0_17, %c0_18] : memref<1x18x18x64xf32, #tpu.memory_space<vmem>>, vector<1x18x1x64xf32>
    tpu.vector_store %arg6[%c0_15, %c0_16, %c0_17, %c0_18], %19 {strides = array<i32>} : memref<1x18x18x64xf32, #tpu.memory_space<vmem>>, vector<1x18x1x64xf32>,
    %c0_19 = arith.constant 0 : index
    %c0_20 = arith.constant 0 : index
    %c17_21 = arith.constant 17 : index
    %c0_22 = arith.constant 0 : index
    %23 = vector.load %arg6[%c0_19, %c0_20, %c17_21, %c0_22] : memref<1x18x18x64xf32, #tpu.memory_space<vmem>>, vector<1x18x1x64xf32>
    tpu.vector_store %arg6[%c0_19, %c0_20, %c17_21, %c0_22], %19 {strides = array<i32>} : memref<1x18x18x64xf32, #tpu.memory_space<vmem>>, vector<1x18x1x64xf32>,
    %24 = vector.shape_cast %17 : vector<256x64xf32> to vector<1x16x16x64xf32>
    %c0_23 = arith.constant 0 : index
    %c1 = arith.constant 1 : index
    %c1_24 = arith.constant 1 : index
    %c0_25 = arith.constant 0 : index
    %25 = vector.load %arg6[%c0_23, %c1, %c1_24, %c0_25] : memref<1x18x18x64xf32, #tpu.memory_space<vmem>>, vector<1x16x16x64xf32>
    tpu.vector_store %arg6[%c0_23, %c1, %c1_24, %c0_25], %24 {strides = array<i32>} : memref<1x18x18x64xf32, #tpu.memory_space<vmem>>, vector<1x16x16x64xf32>,
    %c0_26 = arith.constant 0 : index
    %c0_27 = arith.constant 0 : index
    %c0_28 = arith.constant 0 : index
    %c0_29 = arith.constant 0 : index
    %26 = vector.load %arg6[%c0_26, %c0_27, %c0_28, %c0_29] : memref<1x18x18x64xf32, #tpu.memory_space<vmem>>, vector<1x16x16x64xf32>
    %27 = vector.shape_cast %26 : vector<1x16x16x64xf32> to vector<256x64xf32>
    %c0_30 = arith.constant 0 : index
    %c0_31 = arith.constant 0 : index
    %c1_32 = arith.constant 1 : index
    %c0_33 = arith.constant 0 : index
    %28 = vector.load %arg6[%c0_30, %c0_31, %c1_32, %c0_33] : memref<1x18x18x64xf32, #tpu.memory_space<vmem>>, vector<1x16x16x64xf32>
    %29 = vector.shape_cast %28 : vector<1x16x16x64xf32> to vector<256x64xf32>
    %c0_34 = arith.constant 0 : index
    %c0_35 = arith.constant 0 : index
    %c2 = arith.constant 2 : index
    %c0_36 = arith.constant 0 : index
    %30 = vector.load %arg6[%c0_34, %c0_35, %c2, %c0_36] : memref<1x18x18x64xf32, #tpu.memory_space<vmem>>, vector<1x16x16x64xf32>
    %31 = vector.shape_cast %30 : vector<1x16x16x64xf32> to vector<256x64xf32>
    %c0_37 = arith.constant 0 : index
    %c1_38 = arith.constant 1 : index
    %c0_39 = arith.constant 0 : index
    %c0_40 = arith.constant 0 : index
    %32 = vector.load %arg6[%c0_37, %c1_38, %c0_39, %c0_40] : memref<1x18x18x64xf32, #tpu.memory_space<vmem>>, vector<1x16x16x64xf32>
    %33 = vector.shape_cast %32 : vector<1x16x16x64xf32> to vector<256x64xf32>
    %c0_41 = arith.constant 0 : index
    %c1_42 = arith.constant 1 : index
    %c1_43 = arith.constant 1 : index
    %c0_44 = arith.constant 0 : index
    %34 = vector.load %arg6[%c0_41, %c1_42, %c1_43, %c0_44] : memref<1x18x18x64xf32, #tpu.memory_space<vmem>>, vector<1x16x16x64xf32>
    %35 = vector.shape_cast %34 : vector<1x16x16x64xf32> to vector<256x64xf32>
    %c0_45 = arith.constant 0 : index
    %c1_46 = arith.constant 1 : index
    %c2_47 = arith.constant 2 : index
    %c0_48 = arith.constant 0 : index
    %36 = vector.load %arg6[%c0_45, %c1_46, %c2_47, %c0_48] : memref<1x18x18x64xf32, #tpu.memory_space<vmem>>, vector<1x16x16x64xf32>
    %37 = vector.shape_cast %36 : vector<1x16x16x64xf32> to vector<256x64xf32>
    %c0_49 = arith.constant 0 : index
    %c2_50 = arith.constant 2 : index
    %c0_51 = arith.constant 0 : index
    %c0_52 = arith.constant 0 : index
    %38 = vector.load %arg6[%c0_49, %c2_50, %c0_51, %c0_52] : memref<1x18x18x64xf32, #tpu.memory_space<vmem>>, vector<1x16x16x64xf32>
    %39 = vector.shape_cast %38 : vector<1x16x16x64xf32> to vector<256x64xf32>
    %c0_53 = arith.constant 0 : index
    %c2_54 = arith.constant 2 : index
    %c1_55 = arith.constant 1 : index
    %c0_56 = arith.constant 0 : index
    %40 = vector.load %arg6[%c0_53, %c2_54, %c1_55, %c0_56] : memref<1x18x18x64xf32, #tpu.memory_space<vmem>>, vector<1x16x16x64xf32>
    %41 = vector.shape_cast %40 : vector<1x16x16x64xf32> to vector<256x64xf32>
    %c0_57 = arith.constant 0 : index
    %c2_58 = arith.constant 2 : index
    %c2_59 = arith.constant 2 : index
    %c0_60 = arith.constant 0 : index
    %42 = vector.load %arg6[%c0_57, %c2_58, %c2_59, %c0_60] : memref<1x18x18x64xf32, #tpu.memory_space<vmem>>, vector<1x16x16x64xf32>
    %43 = vector.shape_cast %42 : vector<1x16x16x64xf32> to vector<256x64xf32>
    %44 = tpu.concatenate %27, %29, %31, %33, %35, %37, %39, %41, %43 in 1 : vector<256x64xf32>, vector<256x64xf32>, vector<256x64xf32>, vector<256x64xf32>, vector<256x64xf32>, vector<256x64xf32>, vector<256x64xf32>, vector<256x64xf32>, vector<256x64xf32> -> vector<256x576xf32>
    %45 = arith.truncf %44 : vector<256x576xf32> to vector<256x576xbf16>
    %c0_61 = arith.constant 0 : index
    %c0_62 = arith.constant 0 : index
    %46 = vector.load %arg4[%c0_61, %c0_62] : memref<576x64xbf16, #tpu.memory_space<vmem>>, vector<576x64xbf16>
    %cst_63 = arith.constant dense<0.000000e+00> : vector<256x64xf32>
    %47 = tpu.matmul %45, %46, %cst_63 {dimension_numbers = #tpu.dot_dimension_numbers<[1], [0], [0], [1], [0, 0, 1, 1], [], []>} : vector<256x576xbf16>, vector<576x64xbf16>, vector<256x64xf32> -> vector<256x64xf32>
    %48 = vector.extract_strided_slice %47 {offsets = [0, 0], sizes = [256, 32], strides = [1, 1]} : vector<256x64xf32> to vector<256x32xf32>
    %49 = arith.addf %13, %48 : vector<256x32xf32>
    %50 = arith.negf %49 : vector<256x32xf32>
    %51 = math.exp %50 : vector<256x32xf32>
    %cst_64 = arith.constant 1.000000e+00 : f32
    %52 = vector.broadcast %cst_64 : f32 to vector<256x32xf32>
    %53 = arith.addf %52, %51 : vector<256x32xf32>
    %54 = arith.divf %52, %53 : vector<256x32xf32>
    %55 = vector.extract_strided_slice %47 {offsets = [0, 32], sizes = [256, 32], strides = [1, 1]} : vector<256x64xf32> to vector<256x32xf32>
    %56 = math.tanh %55 : vector<256x32xf32>
    %57 = arith.mulf %54, %56 : vector<256x32xf32>
    %58 = tpu.concatenate %17, %57 in 1 : vector<256x64xf32>, vector<256x32xf32> -> vector<256x96xf32>
    %cst_65 = arith.constant 0.000000e+00 : f32
    %59 = vector.broadcast %cst_65 : f32 to vector<256x32xf32>
    %60 = tpu.concatenate %58, %59 in 1 : vector<256x96xf32>, vector<256x32xf32> -> vector<256x128xf32>
    %c0_66 = arith.constant 0 : index
    %c0_67 = arith.constant 0 : index
    %61 = vector.load %arg5[%c0_66, %c0_67] : memref<256x128xf32, #tpu.memory_space<vmem>>, vector<256x128xf32>
    tpu.vector_store %arg5[%c0_66, %c0_67], %60 {strides = array<i32>} : memref<256x128xf32, #tpu.memory_space<vmem>>, vector<256x128xf32>,
    return
  }
  func.func @transform_0(%arg0: i32) -> (i32, i32) {
    %c0_i32 = arith.constant 0 : i32
    %c0_i32_0 = arith.constant 0 : i32
    return %arg0, %c0_i32 : i32, i32
  }
  func.func @transform_1(%arg0: i32) -> (i32, i32) {
    %c0_i32 = arith.constant 0 : i32
    %c0_i32_0 = arith.constant 0 : i32
    return %arg0, %c0_i32 : i32, i32
  }
  func.func @transform_2(%arg0: i32) -> (i32, i32) {
    %c0_i32 = arith.constant 0 : i32
    %c0_i32_0 = arith.constant 0 : i32
    %c0_i32_1 = arith.constant 0 : i32
    return %c0_i32, %c0_i32_0 : i32, i32
  }
  func.func @transform_3(%arg0: i32) -> (i32, i32) {
    %c0_i32 = arith.constant 0 : i32
    %c0_i32_0 = arith.constant 0 : i32
    %c0_i32_1 = arith.constant 0 : i32
    return %c0_i32, %c0_i32_0 : i32, i32
  }
  func.func @transform_4(%arg0: i32) -> (i32, i32) {
    %c0_i32 = arith.constant 0 : i32
    %c0_i32_0 = arith.constant 0 : i32
    return %arg0, %c0_i32 : i32, i32
  }
}

</mosaic_0001>

<llo_original>
// kernel: tpu_custom_call.1
$region0: #{tpu_custom_call.1}
  #allocation0 [shape = 'u32[]', space=smem, size = 0x4, offset = 0x4, fixed_abs, tag = 'smem constant byte address 0x4 - core index']
  #allocation1 [shape = 'u32[72,128]{1,0:T(1,128)}', space=vmem, size = 0x9000, scoped, tag = 'internal scratch']
  #allocation2 [shape = 'f32[1,18,18,64]{3,2,1,0:T(8,128)}', space=vmem, size = 0x36000, scoped, tag = 'scratch operand']
  %s0 = inlined_call_operand.vmem [shape: bf16[512,613], index: 0, kind: input, shape index: {}]
  %s1 = inlined_call_operand.vmem [shape: f32[512,64], index: 1, kind: input, shape index: {}]
  %s2 = inlined_call_operand.vmem [shape: bf16[613,224], index: 2, kind: input, shape index: {}]
  %s3 = inlined_call_operand.vmem [shape: bf16[576,64], index: 3, kind: input, shape index: {}]
  %s4 = inlined_call_operand.hbm [shape: f32[512,128], index: 4, kind: output, shape index: {}]
  %s5 = sld [smem:[#allocation0]]
  $region49: #{tpu_custom_call.1} parent=0
    _
  %s7 = ssub.s32 1, %s5
  %s8 = scalar_select 0, %s7, %s5
  $region1: #{tpu_custom_call.1} parent=0
    #allocation3 [shape = 'u8[262144]{0}', space=vmem, size = 0x40000, scoped, tag = 'output window, operand 0']
    #allocation4 [shape = 's32[2]{0}', space=sflag, size = 0x8, scoped, tag = 'scoped memory for tpu_custom_call.1']
    %9 = vsyncpa [#allocation4], 0
    %s10 = scalar_lea.sflag [#allocation4], 1
    %11 = vsyncpa %s10, 0
    loop: start=0, step=1, limit=4
    $region2: #{tpu_custom_call.1} parent=1 // loop_pre_header
      _
    $region3: #{tpu_custom_call.1} parent=1 // loop_header
      %s13 = sphi 0, %s17
      %p14 = scmp.ge.s32.totalorder %s13, 4
      %s23 = sphi 0, %s25
      %s26 = sphi 0, %s23
      %s27 = sphi 0, %s26
      %s43 = sphi 0, %s27
      %s49 = sphi 0, %s51
      %s52 = sphi 0, %s49
      %s53 = sphi 0, %s52
      %s69 = sphi 0, %s53
      %s73 = sphi 0, %s73
      %s75 = sphi 0, %s73
      %s76 = sphi 0, %s75
      %s90 = sphi 0, %s76
      %s94 = sphi 0, %s94
      %s96 = sphi 0, %s94
      %s97 = sphi 0, %s96
      %s111 = sphi 0, %s97
      %s117 = sphi 0, %s119
      %s120 = sphi 0, %s117
      %s121 = sphi 0, %s120
      %s137 = sphi 0, %s121
    $region4: #{tpu_custom_call.1} parent=1 // loop_header_branch
      %16 = sbr.rel (%p14) target = $region8
    $region5: #{tpu_custom_call.1} parent=1 // loop_body
      %s18 = ssub.s32 %s13, 1
      %s19 = ssub.s32 %s13, 2
      %s20 = sadd.s32 %s13, 1
      %s21 = ssub.s32 %s13, %s20
      %p22 = scmp.eq.s32.totalorder %s21, 0
      %s24 = sadd.s32 %s23, 1
      %s25 = scalar_select %p22, %s23, %s24
      %p28 = pneg %p22
      %p29 = scmp.eq.s32.totalorder %s13, 1
      %p30 = por %p28, %p29
      %p31 = scmp.ne.s32.totalorder %s23, %s26
      %p32 = scmp.eq.s32.totalorder %s13, 0
      %p33 = por %p31, %p32
      %p34 = scmp.ne.s32.totalorder %s23, %s26
      %p35 = scmp.eq.s32.totalorder %s18, 1
      %p36 = por %p34, %p35
      %p37 = scmp.ne.s32.totalorder %s26, %s27
      %p38 = scmp.eq.s32.totalorder %s18, 0
      %p39 = por %p37, %p38
      %p40 = scmp.ne.s32.totalorder %s26, %s27
      %p41 = scmp.eq.s32.totalorder %s19, 1
      %p42 = por %p40, %p41
      %p44 = scmp.ne.s32.totalorder %s27, %s43
      %p45 = scmp.eq.s32.totalorder %s19, 0
      %p46 = por %p44, %p45
      %s47 = ssub.s32 %s13, %s20
      %p48 = scmp.eq.s32.totalorder %s47, 0
      %s50 = sadd.s32 %s49, 1
      %s51 = scalar_select %p48, %s49, %s50
      %p54 = pneg %p48
      %p55 = scmp.eq.s32.totalorder %s13, 1
      %p56 = por %p54, %p55
      %p57 = scmp.ne.s32.totalorder %s49, %s52
      %p58 = scmp.eq.s32.totalorder %s13, 0
      %p59 = por %p57, %p58
      %p60 = scmp.ne.s32.totalorder %s49, %s52
      %p61 = scmp.eq.s32.totalorder %s18, 1
      %p62 = por %p60, %p61
      %p63 = scmp.ne.s32.totalorder %s52, %s53
      %p64 = scmp.eq.s32.totalorder %s18, 0
      %p65 = por %p63, %p64
      %p66 = scmp.ne.s32.totalorder %s52, %s53
      %p67 = scmp.eq.s32.totalorder %s19, 1
      %p68 = por %p66, %p67
      %p70 = scmp.ne.s32.totalorder %s53, %s69
      %p71 = scmp.eq.s32.totalorder %s19, 0
      %p72 = por %p70, %p71
      %s74 = sadd.s32 %s73, 1
      %p77 = scmp.eq.s32.totalorder %s13, 1
      %p78 = scmp.ne.s32.totalorder %s73, %s75
      %p79 = scmp.eq.s32.totalorder %s13, 0
      %p80 = por %p78, %p79
      %p81 = scmp.ne.s32.totalorder %s73, %s75
      %p82 = scmp.eq.s32.totalorder %s18, 1
      %p83 = por %p81, %p82
      %p84 = scmp.ne.s32.totalorder %s75, %s76
      %p85 = scmp.eq.s32.totalorder %s18, 0
      %p86 = por %p84, %p85
      %p87 = scmp.ne.s32.totalorder %s75, %s76
      %p88 = scmp.eq.s32.totalorder %s19, 1
      %p89 = por %p87, %p88
      %p91 = scmp.ne.s32.totalorder %s76, %s90
      %p92 = scmp.eq.s32.totalorder %s19, 0
      %p93 = por %p91, %p92
      %s95 = sadd.s32 %s94, 1
      %p98 = scmp.eq.s32.totalorder %s13, 1
      %p99 = scmp.ne.s32.totalorder %s94, %s96
      %p100 = scmp.eq.s32.totalorder %s13, 0
      %p101 = por %p99, %p100
      %p102 = scmp.ne.s32.totalorder %s94, %s96
      %p103 = scmp.eq.s32.totalorder %s18, 1
      %p104 = por %p102, %p103
      %p105 = scmp.ne.s32.totalorder %s96, %s97
      %p106 = scmp.eq.s32.totalorder %s18, 0
      %p107 = por %p105, %p106
      %p108 = scmp.ne.s32.totalorder %s96, %s97
      %p109 = scmp.eq.s32.totalorder %s19, 1
      %p110 = por %p108, %p109
      %p112 = scmp.ne.s32.totalorder %s97, %s111
      %p113 = scmp.eq.s32.totalorder %s19, 0
      %p114 = por %p112, %p113
      %s115 = ssub.s32 %s13, %s20
      %p116 = scmp.eq.s32.totalorder %s115, 0
      %s118 = sadd.s32 %s117, 1
      %s119 = scalar_select %p116, %s117, %s118
      %p122 = pneg %p116
      %p123 = scmp.eq.s32.totalorder %s13, 1
      %p124 = por %p122, %p123
      %p125 = scmp.ne.s32.totalorder %s117, %s120
      %p126 = scmp.eq.s32.totalorder %s13, 0
      %p127 = por %p125, %p126
      %p128 = scmp.ne.s32.totalorder %s117, %s120
      %p129 = scmp.eq.s32.totalorder %s18, 1
      %p130 = por %p128, %p129
      %p131 = scmp.ne.s32.totalorder %s120, %s121
      %p132 = scmp.eq.s32.totalorder %s18, 0
      %p133 = por %p131, %p132
      %p134 = scmp.ne.s32.totalorder %s120, %s121
      %p135 = scmp.eq.s32.totalorder %s19, 1
      %p136 = por %p134, %p135
      %p138 = scmp.ne.s32.totalorder %s121, %s137
      %p139 = scmp.eq.s32.totalorder %s19, 0
      %p140 = por %p138, %p139
      %p141 = scmp.le.s32.totalorder 1, %s13
      %p142 = scmp.lt.s32.totalorder %s13, 3
      %p143 = pnand %p141, %p142
      %p144 = pneg %p143
      // Predicated region
      $region9: #{tpu_custom_call.1} parent=5 // pred_check
        _
      $region10: #{tpu_custom_call.1} parent=5 // pred_check_branch
        %146 = sbr.rel (%p143) target = $region12
      $region11: #{tpu_custom_call.1} parent=5 // pred_region
        %s147 = ssub.s32 %s13, 1
        // Predicated region
        $region13: #{tpu_custom_call.1} parent=11 // pred_check
          %p148 = pneg %p86
        $region14: #{tpu_custom_call.1} parent=11 // pred_check_branch
          %150 = sbr.rel (%p148) target = $region16
        $region15: #{tpu_custom_call.1} parent=11 // pred_region
          _
        $region16: #{tpu_custom_call.1} parent=11 // pred_fallthru
          _
        // Predicated region
        $region17: #{tpu_custom_call.1} parent=11 // pred_check
          %p151 = pneg %p107
        $region18: #{tpu_custom_call.1} parent=11 // pred_check_branch
          %153 = sbr.rel (%p151) target = $region20
        $region19: #{tpu_custom_call.1} parent=11 // pred_region
          _
        $region20: #{tpu_custom_call.1} parent=11 // pred_fallthru
          _
      $region12: #{tpu_custom_call.1} parent=5 // pred_fallthru
        _
      %p154 = scmp.lt.s32.totalorder %s13, 2
      // Predicated region
      $region21: #{tpu_custom_call.1} parent=5 // pred_check
        %p155 = pneg %p154
      $region22: #{tpu_custom_call.1} parent=5 // pred_check_branch
        %157 = sbr.rel (%p155) target = $region24
      $region23: #{tpu_custom_call.1} parent=5 // pred_region
        // Predicated region
        $region25: #{tpu_custom_call.1} parent=23 // pred_check
          %p158 = pneg %p33
        $region26: #{tpu_custom_call.1} parent=23 // pred_check_branch
          %160 = sbr.rel (%p158) target = $region28
        $region27: #{tpu_custom_call.1} parent=23 // pred_region
          %s161 = smul.u32 32, %s13
          %p162 = scmp.lt.s32.totalorder %s161, 63
          %s163 = scalar_select %p162, %s161, 63
          %s164 = smul.addr %s163, 5
          %s165 = smul.addr %s164, 4
          %s166 = scalar_lea.vmem %s0, %s165
          %s167 = smul.u32 32, %s13
        $region28: #{tpu_custom_call.1} parent=23 // pred_fallthru
          _
        // Predicated region
        $region29: #{tpu_custom_call.1} parent=23 // pred_check
          %p168 = pneg %p59
        $region30: #{tpu_custom_call.1} parent=23 // pred_check_branch
          %170 = sbr.rel (%p168) target = $region32
        $region31: #{tpu_custom_call.1} parent=23 // pred_region
          %s171 = smul.u32 32, %s13
          %p172 = scmp.lt.s32.totalorder %s171, 63
          %s173 = scalar_select %p172, %s171, 63
          %s174 = smul.addr %s173, 8
          %s175 = scalar_lea.vmem %s1, %s174
          %s176 = smul.u32 32, %s13
        $region32: #{tpu_custom_call.1} parent=23 // pred_fallthru
          _
      $region24: #{tpu_custom_call.1} parent=5 // pred_fallthru
        _
      %p177 = scmp.le.s32.totalorder 1, %s13
      %p178 = scmp.lt.s32.totalorder %s13, 3
      %p179 = pnand %p177, %p178
      %p180 = pneg %p179
      // Predicated region
      $region33: #{tpu_custom_call.1} parent=5 // pred_check
        _
      $region34: #{tpu_custom_call.1} parent=5 // pred_check_branch
        %182 = sbr.rel (%p179) target = $region36
      $region35: #{tpu_custom_call.1} parent=5 // pred_region
        %s183 = ssub.s32 %s13, 1
        %s184 = smul.u32 32, %s18
        %p185 = scmp.lt.s32.totalorder %s184, 63
        %s186 = scalar_select %p185, %s184, 63
        %s187 = smul.addr %s186, 5
        %s188 = smul.addr %s187, 4
        %s189 = scalar_lea.vmem %s0, %s188
        %p190 = pneg %p39
        %p191 = pneg %p36
        %s192 = smul.u32 32, %s18
        %p193 = scmp.lt.s32.totalorder %s192, 63
        %s194 = scalar_select %p193, %s192, 63
        %s195 = smul.addr %s194, 8
        %s196 = scalar_lea.vmem %s1, %s195
        %p197 = pneg %p65
        %p198 = pneg %p62
        %p199 = pneg %p86
        %p200 = pneg %p83
        %p201 = pneg %p107
        %p202 = pneg %p104
        %p203 = pneg %p133
        %p204 = pneg %p130
        %s205 = sand.u32 %s120, 1
        %s206 = scalar_lea.sflag [#allocation4], %s205
        %s207 = sand.u32 %s120, 1
        %s208 = smul.addr %s207, 256
        %s209 = scalar_lea.vmem [#allocation3], %s208
        %s210 = smul.u32 32, %s18
        %p211 = scmp.lt.s32.totalorder %s210, 63
        %s212 = scalar_select %p211, %s210, 63
        %s213 = smul.addr %s212, 5
        %s214 = smul.addr %s213, 4
        %s215 = scalar_lea.vmem %s0, %s214
        %s216 = smul.u32 32, %s18
        %s217 = smul.u32 32, %s18
        %p218 = scmp.lt.s32.totalorder %s217, 63
        %s219 = scalar_select %p218, %s217, 63
        %s220 = smul.addr %s219, 8
        %s221 = scalar_lea.vmem %s1, %s220
        %s222 = smul.u32 32, %s18
        %s223 = smul.u32 32, %s18
        %v225 = vld [vmem:[%s215] sm:$0xff]
        %v226 = vld [vmem:[%s215 + $0x8] sm:$0xff]
        %v227 = vld [vmem:[%s215 + $0x10] sm:$0xf]
        %v228 = vld [vmem:[%s215 + $0x14] sm:$0xff]
        %v229 = vld [vmem:[%s215 + $0x1c] sm:$0xff]
        %v230 = vld [vmem:[%s215 + $0x24] sm:$0xf]
        %v231 = vld [vmem:[%s215 + $0x28] sm:$0xff]
        %v232 = vld [vmem:[%s215 + $0x30] sm:$0xff]
        %v233 = vld [vmem:[%s215 + $0x38] sm:$0xf]
        %v234 = vld [vmem:[%s215 + $0x3c] sm:$0xff]
        %v235 = vld [vmem:[%s215 + $0x44] sm:$0xff]
        %v236 = vld [vmem:[%s215 + $0x4c] sm:$0xf]
        %v237 = vld [vmem:[%s215 + $0x50] sm:$0xff]
        %v238 = vld [vmem:[%s215 + $0x58] sm:$0xff]
        %v239 = vld [vmem:[%s215 + $0x60] sm:$0xf]
        %v240 = vld [vmem:[%s215 + $0x64] sm:$0xff]
        %v241 = vld [vmem:[%s215 + $0x6c] sm:$0xff]
        %v242 = vld [vmem:[%s215 + $0x74] sm:$0xf]
        %v243 = vld [vmem:[%s215 + $0x78] sm:$0xff]
        %v244 = vld [vmem:[%s215 + $0x80] sm:$0xff]
        %v245 = vld [vmem:[%s215 + $0x88] sm:$0xf]
        %v246 = vld [vmem:[%s215 + $0x8c] sm:$0xff]
        %v247 = vld [vmem:[%s215 + $0x94] sm:$0xff]
        %v248 = vld [vmem:[%s215 + $0x9c] sm:$0xf]
        %v249 = vld [vmem:[%s215 + $0xa0] sm:$0xff]
        %v250 = vld [vmem:[%s215 + $0xa8] sm:$0xff]
        %v251 = vld [vmem:[%s215 + $0xb0] sm:$0xf]
        %v252 = vld [vmem:[%s215 + $0xb4] sm:$0xff]
        %v253 = vld [vmem:[%s215 + $0xbc] sm:$0xff]
        %v254 = vld [vmem:[%s215 + $0xc4] sm:$0xf]
        %v255 = vld [vmem:[%s215 + $0xc8] sm:$0xff]
        %v256 = vld [vmem:[%s215 + $0xd0] sm:$0xff]
        %v257 = vld [vmem:[%s215 + $0xd8] sm:$0xf]
        %v258 = vld [vmem:[%s215 + $0xdc] sm:$0xff]
        %v259 = vld [vmem:[%s215 + $0xe4] sm:$0xff]
        %v260 = vld [vmem:[%s215 + $0xec] sm:$0xf]
        %v261 = vld [vmem:[%s215 + $0xf0] sm:$0xff]
        %v262 = vld [vmem:[%s215 + $0xf8] sm:$0xff]
        %v263 = vld [vmem:[%s215 + $0x100] sm:$0xf]
        %v264 = vld [vmem:[%s215 + $0x104] sm:$0xff]
        %v265 = vld [vmem:[%s215 + $0x10c] sm:$0xff]
        %v266 = vld [vmem:[%s215 + $0x114] sm:$0xf]
        %v267 = vld [vmem:[%s215 + $0x118] sm:$0xff]
        %v268 = vld [vmem:[%s215 + $0x120] sm:$0xff]
        %v269 = vld [vmem:[%s215 + $0x128] sm:$0xf]
        %v270 = vld [vmem:[%s215 + $0x12c] sm:$0xff]
        %v271 = vld [vmem:[%s215 + $0x134] sm:$0xff]
        %v272 = vld [vmem:[%s215 + $0x13c] sm:$0xf]
        %v273 = vld [vmem:[%s215 + $0x140] sm:$0xff]
        %v274 = vld [vmem:[%s215 + $0x148] sm:$0xff]
        %v275 = vld [vmem:[%s215 + $0x150] sm:$0xf]
        %v276 = vld [vmem:[%s215 + $0x154] sm:$0xff]
        %v277 = vld [vmem:[%s215 + $0x15c] sm:$0xff]
        %v278 = vld [vmem:[%s215 + $0x164] sm:$0xf]
        %v279 = vld [vmem:[%s215 + $0x168] sm:$0xff]
        %v280 = vld [vmem:[%s215 + $0x170] sm:$0xff]
        %v281 = vld [vmem:[%s215 + $0x178] sm:$0xf]
        %v282 = vld [vmem:[%s215 + $0x17c] sm:$0xff]
        %v283 = vld [vmem:[%s215 + $0x184] sm:$0xff]
        %v284 = vld [vmem:[%s215 + $0x18c] sm:$0xf]
        %v285 = vld [vmem:[%s215 + $0x190] sm:$0xff]
        %v286 = vld [vmem:[%s215 + $0x198] sm:$0xff]
        %v287 = vld [vmem:[%s215 + $0x1a0] sm:$0xf]
        %v288 = vld [vmem:[%s215 + $0x1a4] sm:$0xff]
        %v289 = vld [vmem:[%s215 + $0x1ac] sm:$0xff]
        %v290 = vld [vmem:[%s215 + $0x1b4] sm:$0xf]
        %v291 = vld [vmem:[%s215 + $0x1b8] sm:$0xff]
        %v292 = vld [vmem:[%s215 + $0x1c0] sm:$0xff]
        %v293 = vld [vmem:[%s215 + $0x1c8] sm:$0xf]
        %v294 = vld [vmem:[%s215 + $0x1cc] sm:$0xff]
        %v295 = vld [vmem:[%s215 + $0x1d4] sm:$0xff]
        %v296 = vld [vmem:[%s215 + $0x1dc] sm:$0xf]
        %v297 = vld [vmem:[%s215 + $0x1e0] sm:$0xff]
        %v298 = vld [vmem:[%s215 + $0x1e8] sm:$0xff]
        %v299 = vld [vmem:[%s215 + $0x1f0] sm:$0xf]
        %v300 = vld [vmem:[%s215 + $0x1f4] sm:$0xff]
        %v301 = vld [vmem:[%s215 + $0x1fc] sm:$0xff]
        %v302 = vld [vmem:[%s215 + $0x204] sm:$0xf]
        %v303 = vld [vmem:[%s215 + $0x208] sm:$0xff]
        %v304 = vld [vmem:[%s215 + $0x210] sm:$0xff]
        %v305 = vld [vmem:[%s215 + $0x218] sm:$0xf]
        %v306 = vld [vmem:[%s215 + $0x21c] sm:$0xff]
        %v307 = vld [vmem:[%s215 + $0x224] sm:$0xff]
        %v308 = vld [vmem:[%s215 + $0x22c] sm:$0xf]
        %v309 = vld [vmem:[%s215 + $0x230] sm:$0xff]
        %v310 = vld [vmem:[%s215 + $0x238] sm:$0xff]
        %v311 = vld [vmem:[%s215 + $0x240] sm:$0xf]
        %v312 = vld [vmem:[%s215 + $0x244] sm:$0xff]
        %v313 = vld [vmem:[%s215 + $0x24c] sm:$0xff]
        %v314 = vld [vmem:[%s215 + $0x254] sm:$0xf]
        %v315 = vld [vmem:[%s215 + $0x258] sm:$0xff]
        %v316 = vld [vmem:[%s215 + $0x260] sm:$0xff]
        %v317 = vld [vmem:[%s215 + $0x268] sm:$0xf]
        %v318 = vld [vmem:[%s215 + $0x26c] sm:$0xff]
        %v319 = vld [vmem:[%s215 + $0x274] sm:$0xff]
        %v320 = vld [vmem:[%s215 + $0x27c] sm:$0xf]
        %v321 = vld [vmem:[%s2] sm:$0xff]
        %v322 = vld [vmem:[%s2 + $0x8] sm:$0xff]
        %v323 = vld [vmem:[%s2 + $0x10] sm:$0xff]
        %v324 = vld [vmem:[%s2 + $0x18] sm:$0xff]
        %v325 = vld [vmem:[%s2 + $0x20] sm:$0xff]
        %v326 = vld [vmem:[%s2 + $0x28] sm:$0xff]
        %v327 = vld [vmem:[%s2 + $0x30] sm:$0xff]
        %v328 = vld [vmem:[%s2 + $0x38] sm:$0xff]
        %v329 = vld [vmem:[%s2 + $0x40] sm:$0xff]
        %v330 = vld [vmem:[%s2 + $0x48] sm:$0xff]
        %v331 = vld [vmem:[%s2 + $0x50] sm:$0xff]
        %v332 = vld [vmem:[%s2 + $0x58] sm:$0xff]
        %v333 = vld [vmem:[%s2 + $0x60] sm:$0xff]
        %v334 = vld [vmem:[%s2 + $0x68] sm:$0xff]
        %v335 = vld [vmem:[%s2 + $0x70] sm:$0xff]
        %v336 = vld [vmem:[%s2 + $0x78] sm:$0xff]
        %v337 = vld [vmem:[%s2 + $0x80] sm:$0xff]
        %v338 = vld [vmem:[%s2 + $0x88] sm:$0xff]
        %v339 = vld [vmem:[%s2 + $0x90] sm:$0xff]
        %v340 = vld [vmem:[%s2 + $0x98] sm:$0xff]
        %v341 = vld [vmem:[%s2 + $0xa0] sm:$0xff]
        %v342 = vld [vmem:[%s2 + $0xa8] sm:$0xff]
        %v343 = vld [vmem:[%s2 + $0xb0] sm:$0xff]
        %v344 = vld [vmem:[%s2 + $0xb8] sm:$0xff]
        %v345 = vld [vmem:[%s2 + $0xc0] sm:$0xff]
        %v346 = vld [vmem:[%s2 + $0xc8] sm:$0xff]
        %v347 = vld [vmem:[%s2 + $0xd0] sm:$0xff]
        %v348 = vld [vmem:[%s2 + $0xd8] sm:$0xff]
        %v349 = vld [vmem:[%s2 + $0xe0] sm:$0xff]
        %v350 = vld [vmem:[%s2 + $0xe8] sm:$0xff]
        %v351 = vld [vmem:[%s2 + $0xf0] sm:$0xff]
        %v352 = vld [vmem:[%s2 + $0xf8] sm:$0xff]
        %v353 = vld [vmem:[%s2 + $0x100] sm:$0xff]
        %v354 = vld [vmem:[%s2 + $0x108] sm:$0xff]
        %v355 = vld [vmem:[%s2 + $0x110] sm:$0xff]
        %v356 = vld [vmem:[%s2 + $0x118] sm:$0xff]
        %v357 = vld [vmem:[%s2 + $0x120] sm:$0xff]
        %v358 = vld [vmem:[%s2 + $0x128] sm:$0xff]
        %v359 = vld [vmem:[%s2 + $0x130] sm:$0xff]
        %v360 = vld [vmem:[%s2 + $0x138] sm:$0xff]
        %v361 = vld [vmem:[%s2 + $0x140] sm:$0xff]
        %v362 = vld [vmem:[%s2 + $0x148] sm:$0xff]
        %v363 = vld [vmem:[%s2 + $0x150] sm:$0xff]
        %v364 = vld [vmem:[%s2 + $0x158] sm:$0xff]
        %v365 = vld [vmem:[%s2 + $0x160] sm:$0xff]
        %v366 = vld [vmem:[%s2 + $0x168] sm:$0xff]
        %v367 = vld [vmem:[%s2 + $0x170] sm:$0xff]
        %v368 = vld [vmem:[%s2 + $0x178] sm:$0xff]
        %v369 = vld [vmem:[%s2 + $0x180] sm:$0xff]
        %v370 = vld [vmem:[%s2 + $0x188] sm:$0xff]
        %v371 = vld [vmem:[%s2 + $0x190] sm:$0xff]
        %v372 = vld [vmem:[%s2 + $0x198] sm:$0xff]
        %v373 = vld [vmem:[%s2 + $0x1a0] sm:$0xff]
        %v374 = vld [vmem:[%s2 + $0x1a8] sm:$0xff]
        %v375 = vld [vmem:[%s2 + $0x1b0] sm:$0xff]
        %v376 = vld [vmem:[%s2 + $0x1b8] sm:$0xff]
        %v377 = vld [vmem:[%s2 + $0x1c0] sm:$0xff]
        %v378 = vld [vmem:[%s2 + $0x1c8] sm:$0xff]
        %v379 = vld [vmem:[%s2 + $0x1d0] sm:$0xff]
        %v380 = vld [vmem:[%s2 + $0x1d8] sm:$0xff]
        %v381 = vld [vmem:[%s2 + $0x1e0] sm:$0xff]
        %v382 = vld [vmem:[%s2 + $0x1e8] sm:$0xff]
        %v383 = vld [vmem:[%s2 + $0x1f0] sm:$0xff]
        %v384 = vld [vmem:[%s2 + $0x1f8] sm:$0xff]
        %v385 = vld [vmem:[%s2 + $0x200] sm:$0xff]
        %v386 = vld [vmem:[%s2 + $0x208] sm:$0xff]
        %v387 = vld [vmem:[%s2 + $0x210] sm:$0xff]
        %v388 = vld [vmem:[%s2 + $0x218] sm:$0xff]
        %v389 = vld [vmem:[%s2 + $0x220] sm:$0xff]
        %v390 = vld [vmem:[%s2 + $0x228] sm:$0xff]
        %v391 = vld [vmem:[%s2 + $0x230] sm:$0xff]
        %v392 = vld [vmem:[%s2 + $0x238] sm:$0xff]
        %v393 = vld [vmem:[%s2 + $0x240] sm:$0xff]
        %v394 = vld [vmem:[%s2 + $0x248] sm:$0xff]
        %v395 = vld [vmem:[%s2 + $0x250] sm:$0xff]
        %v396 = vld [vmem:[%s2 + $0x258] sm:$0xff]
        %v397 = vld [vmem:[%s2 + $0x260] sm:$0x77]
        %v494 = vunpack.c.l.b16 %v225
        %v495 = vunpack.c.h.b16 %v225
        %v496 = vunpack.c.l.b16 %v226
        %v497 = vunpack.c.h.b16 %v226
        %v498 = vunpack.c.l.b16 %v227
        %v499 = vunpack.c.l.b16 %v228
        %v500 = vunpack.c.h.b16 %v228
        %v501 = vunpack.c.l.b16 %v229
        %v502 = vunpack.c.h.b16 %v229
        %v503 = vunpack.c.l.b16 %v230
        %v504 = vunpack.c.l.b16 %v231
        %v505 = vunpack.c.h.b16 %v231
        %v506 = vunpack.c.l.b16 %v232
        %v507 = vunpack.c.h.b16 %v232
        %v508 = vunpack.c.l.b16 %v233
        %v509 = vunpack.c.l.b16 %v234
        %v510 = vunpack.c.h.b16 %v234
        %v511 = vunpack.c.l.b16 %v235
        %v512 = vunpack.c.h.b16 %v235
        %v513 = vunpack.c.l.b16 %v236
        %v514 = vunpack.c.l.b16 %v237
        %v515 = vunpack.c.h.b16 %v237
        %v516 = vunpack.c.l.b16 %v238
        %v517 = vunpack.c.h.b16 %v238
        %v518 = vunpack.c.l.b16 %v239
        %v519 = vunpack.c.l.b16 %v240
        %v520 = vunpack.c.h.b16 %v240
        %v521 = vunpack.c.l.b16 %v241
        %v522 = vunpack.c.h.b16 %v241
        %v523 = vunpack.c.l.b16 %v242
        %v524 = vunpack.c.l.b16 %v243
        %v525 = vunpack.c.h.b16 %v243
        %v526 = vunpack.c.l.b16 %v244
        %v527 = vunpack.c.h.b16 %v244
        %v528 = vunpack.c.l.b16 %v245
        %v529 = vunpack.c.l.b16 %v246
        %v530 = vunpack.c.h.b16 %v246
        %v531 = vunpack.c.l.b16 %v247
        %v532 = vunpack.c.h.b16 %v247
        %v533 = vunpack.c.l.b16 %v248
        %v534 = vunpack.c.l.b16 %v249
        %v535 = vunpack.c.h.b16 %v249
        %v536 = vunpack.c.l.b16 %v250
        %v537 = vunpack.c.h.b16 %v250
        %v538 = vunpack.c.l.b16 %v251
        %v539 = vunpack.c.l.b16 %v252
        %v540 = vunpack.c.h.b16 %v252
        %v541 = vunpack.c.l.b16 %v253
        %v542 = vunpack.c.h.b16 %v253
        %v543 = vunpack.c.l.b16 %v254
        %v544 = vunpack.c.l.b16 %v255
        %v545 = vunpack.c.h.b16 %v255
        %v546 = vunpack.c.l.b16 %v256
        %v547 = vunpack.c.h.b16 %v256
        %v548 = vunpack.c.l.b16 %v257
        %v549 = vunpack.c.l.b16 %v258
        %v550 = vunpack.c.h.b16 %v258
        %v551 = vunpack.c.l.b16 %v259
        %v552 = vunpack.c.h.b16 %v259
        %v553 = vunpack.c.l.b16 %v260
        %v554 = vunpack.c.l.b16 %v261
        %v555 = vunpack.c.h.b16 %v261
        %v556 = vunpack.c.l.b16 %v262
        %v557 = vunpack.c.h.b16 %v262
        %v558 = vunpack.c.l.b16 %v263
        %v559 = vunpack.c.l.b16 %v264
        %v560 = vunpack.c.h.b16 %v264
        %v561 = vunpack.c.l.b16 %v265
        %v562 = vunpack.c.h.b16 %v265
        %v563 = vunpack.c.l.b16 %v266
        %v564 = vunpack.c.l.b16 %v267
        %v565 = vunpack.c.h.b16 %v267
        %v566 = vunpack.c.l.b16 %v268
        %v567 = vunpack.c.h.b16 %v268
        %v568 = vunpack.c.l.b16 %v269
        %v569 = vunpack.c.l.b16 %v270
        %v570 = vunpack.c.h.b16 %v270
        %v571 = vunpack.c.l.b16 %v271
        %v572 = vunpack.c.h.b16 %v271
        %v573 = vunpack.c.l.b16 %v272
        %v574 = vunpack.c.l.b16 %v273
        %v575 = vunpack.c.h.b16 %v273
        %v576 = vunpack.c.l.b16 %v274
        %v577 = vunpack.c.h.b16 %v274
        %v578 = vunpack.c.l.b16 %v275
        %v579 = vunpack.c.l.b16 %v276
        %v580 = vunpack.c.h.b16 %v276
        %v581 = vunpack.c.l.b16 %v277
        %v582 = vunpack.c.h.b16 %v277
        %v583 = vunpack.c.l.b16 %v278
        %v584 = vunpack.c.l.b16 %v279
        %v585 = vunpack.c.h.b16 %v279
        %v586 = vunpack.c.l.b16 %v280
        %v587 = vunpack.c.h.b16 %v280
        %v588 = vunpack.c.l.b16 %v281
        %v589 = vunpack.c.l.b16 %v282
        %v590 = vunpack.c.h.b16 %v282
        %v591 = vunpack.c.l.b16 %v283
        %v592 = vunpack.c.h.b16 %v283
        %v593 = vunpack.c.l.b16 %v284
        %v594 = vunpack.c.l.b16 %v285
        %v595 = vunpack.c.h.b16 %v285
        %v596 = vunpack.c.l.b16 %v286
        %v597 = vunpack.c.h.b16 %v286
        %v598 = vunpack.c.l.b16 %v287
        %v599 = vunpack.c.l.b16 %v288
        %v600 = vunpack.c.h.b16 %v288
        %v601 = vunpack.c.l.b16 %v289
        %v602 = vunpack.c.h.b16 %v289
        %v603 = vunpack.c.l.b16 %v290
        %v604 = vunpack.c.l.b16 %v291
        %v605 = vunpack.c.h.b16 %v291
        %v606 = vunpack.c.l.b16 %v292
        %v607 = vunpack.c.h.b16 %v292
        %v608 = vunpack.c.l.b16 %v293
        %v609 = vunpack.c.l.b16 %v294
        %v610 = vunpack.c.h.b16 %v294
        %v611 = vunpack.c.l.b16 %v295
        %v612 = vunpack.c.h.b16 %v295
        %v613 = vunpack.c.l.b16 %v296
        %v614 = vunpack.c.l.b16 %v297
        %v615 = vunpack.c.h.b16 %v297
        %v616 = vunpack.c.l.b16 %v298
        %v617 = vunpack.c.h.b16 %v298
        %v618 = vunpack.c.l.b16 %v299
        %v619 = vunpack.c.l.b16 %v300
        %v620 = vunpack.c.h.b16 %v300
        %v621 = vunpack.c.l.b16 %v301
        %v622 = vunpack.c.h.b16 %v301
        %v623 = vunpack.c.l.b16 %v302
        %v624 = vunpack.c.l.b16 %v303
        %v625 = vunpack.c.h.b16 %v303
        %v626 = vunpack.c.l.b16 %v304
        %v627 = vunpack.c.h.b16 %v304
        %v628 = vunpack.c.l.b16 %v305
        %v629 = vunpack.c.l.b16 %v306
        %v630 = vunpack.c.h.b16 %v306
        %v631 = vunpack.c.l.b16 %v307
        %v632 = vunpack.c.h.b16 %v307
        %v633 = vunpack.c.l.b16 %v308
        %v634 = vunpack.c.l.b16 %v309
        %v635 = vunpack.c.h.b16 %v309
        %v636 = vunpack.c.l.b16 %v310
        %v637 = vunpack.c.h.b16 %v310
        %v638 = vunpack.c.l.b16 %v311
        %v639 = vunpack.c.l.b16 %v312
        %v640 = vunpack.c.h.b16 %v312
        %v641 = vunpack.c.l.b16 %v313
        %v642 = vunpack.c.h.b16 %v313
        %v643 = vunpack.c.l.b16 %v314
        %v644 = vunpack.c.l.b16 %v315
        %v645 = vunpack.c.h.b16 %v315
        %v646 = vunpack.c.l.b16 %v316
        %v647 = vunpack.c.h.b16 %v316
        %v648 = vunpack.c.l.b16 %v317
        %v649 = vunpack.c.l.b16 %v318
        %v650 = vunpack.c.h.b16 %v318
        %v651 = vunpack.c.l.b16 %v319
        %v652 = vunpack.c.h.b16 %v319
        %v653 = vunpack.c.l.b16 %v320
        %v654 = vpack.c.b16 %v499, %v494
        %v655 = vpack.c.b16 %v500, %v495
        %v656 = vpack.c.b16 %v501, %v496
        %v657 = vpack.c.b16 %v502, %v497
        %v658 = vpack.c.b16 %v503, %v498
        %v659 = vpack.c.b16 %v509, %v504
        %v660 = vpack.c.b16 %v510, %v505
        %v661 = vpack.c.b16 %v511, %v506
        %v662 = vpack.c.b16 %v512, %v507
        %v663 = vpack.c.b16 %v513, %v508
        %v664 = vpack.c.b16 %v519, %v514
        %v665 = vpack.c.b16 %v520, %v515
        %v666 = vpack.c.b16 %v521, %v516
        %v667 = vpack.c.b16 %v522, %v517
        %v668 = vpack.c.b16 %v523, %v518
        %v669 = vpack.c.b16 %v529, %v524
        %v670 = vpack.c.b16 %v530, %v525
        %v671 = vpack.c.b16 %v531, %v526
        %v672 = vpack.c.b16 %v532, %v527
        %v673 = vpack.c.b16 %v533, %v528
        %v674 = vpack.c.b16 %v539, %v534
        %v675 = vpack.c.b16 %v540, %v535
        %v676 = vpack.c.b16 %v541, %v536
        %v677 = vpack.c.b16 %v542, %v537
        %v678 = vpack.c.b16 %v543, %v538
        %v679 = vpack.c.b16 %v549, %v544
        %v680 = vpack.c.b16 %v550, %v545
        %v681 = vpack.c.b16 %v551, %v546
        %v682 = vpack.c.b16 %v552, %v547
        %v683 = vpack.c.b16 %v553, %v548
        %v684 = vpack.c.b16 %v559, %v554
        %v685 = vpack.c.b16 %v560, %v555
        %v686 = vpack.c.b16 %v561, %v556
        %v687 = vpack.c.b16 %v562, %v557
        %v688 = vpack.c.b16 %v563, %v558
        %v689 = vpack.c.b16 %v569, %v564
        %v690 = vpack.c.b16 %v570, %v565
        %v691 = vpack.c.b16 %v571, %v566
        %v692 = vpack.c.b16 %v572, %v567
        %v693 = vpack.c.b16 %v573, %v568
        %v694 = vpack.c.b16 %v579, %v574
        %v695 = vpack.c.b16 %v580, %v575
        %v696 = vpack.c.b16 %v581, %v576
        %v697 = vpack.c.b16 %v582, %v577
        %v698 = vpack.c.b16 %v583, %v578
        %v699 = vpack.c.b16 %v589, %v584
        %v700 = vpack.c.b16 %v590, %v585
        %v701 = vpack.c.b16 %v591, %v586
        %v702 = vpack.c.b16 %v592, %v587
        %v703 = vpack.c.b16 %v593, %v588
        %v704 = vpack.c.b16 %v599, %v594
        %v705 = vpack.c.b16 %v600, %v595
        %v706 = vpack.c.b16 %v601, %v596
        %v707 = vpack.c.b16 %v602, %v597
        %v708 = vpack.c.b16 %v603, %v598
        %v709 = vpack.c.b16 %v609, %v604
        %v710 = vpack.c.b16 %v610, %v605
        %v711 = vpack.c.b16 %v611, %v606
        %v712 = vpack.c.b16 %v612, %v607
        %v713 = vpack.c.b16 %v613, %v608
        %v714 = vpack.c.b16 %v619, %v614
        %v715 = vpack.c.b16 %v620, %v615
        %v716 = vpack.c.b16 %v621, %v616
        %v717 = vpack.c.b16 %v622, %v617
        %v718 = vpack.c.b16 %v623, %v618
        %v719 = vpack.c.b16 %v629, %v624
        %v720 = vpack.c.b16 %v630, %v625
        %v721 = vpack.c.b16 %v631, %v626
        %v722 = vpack.c.b16 %v632, %v627
        %v723 = vpack.c.b16 %v633, %v628
        %v724 = vpack.c.b16 %v639, %v634
        %v725 = vpack.c.b16 %v640, %v635
        %v726 = vpack.c.b16 %v641, %v636
        %v727 = vpack.c.b16 %v642, %v637
        %v728 = vpack.c.b16 %v643, %v638
        %v729 = vpack.c.b16 %v649, %v644
        %v730 = vpack.c.b16 %v650, %v645
        %v731 = vpack.c.b16 %v651, %v646
        %v732 = vpack.c.b16 %v652, %v647
        %v733 = vpack.c.b16 %v653, %v648
        %v875 = vunpack.c.l.b16 %v321
        %v876 = vunpack.c.h.b16 %v321
        %v877 = vunpack.c.l.b16 %v322
        %v878 = vunpack.c.h.b16 %v322
        %v879 = vunpack.c.l.b16 %v323
        %v880 = vunpack.c.h.b16 %v323
        %v881 = vunpack.c.l.b16 %v324
        %v882 = vunpack.c.h.b16 %v324
        %v883 = vunpack.c.l.b16 %v325
        %v884 = vunpack.c.h.b16 %v325
        %v885 = vunpack.c.l.b16 %v326
        %v886 = vunpack.c.h.b16 %v326
        %v887 = vunpack.c.l.b16 %v327
        %v888 = vunpack.c.h.b16 %v327
        %v889 = vunpack.c.l.b16 %v328
        %v890 = vunpack.c.h.b16 %v328
        %v891 = vunpack.c.l.b16 %v329
        %v892 = vunpack.c.h.b16 %v329
        %v893 = vunpack.c.l.b16 %v330
        %v894 = vunpack.c.h.b16 %v330
        %v895 = vunpack.c.l.b16 %v331
        %v896 = vunpack.c.h.b16 %v331
        %v897 = vunpack.c.l.b16 %v332
        %v898 = vunpack.c.h.b16 %v332
        %v899 = vunpack.c.l.b16 %v333
        %v900 = vunpack.c.h.b16 %v333
        %v901 = vunpack.c.l.b16 %v334
        %v902 = vunpack.c.h.b16 %v334
        %v903 = vunpack.c.l.b16 %v335
        %v904 = vunpack.c.h.b16 %v335
        %v905 = vunpack.c.l.b16 %v336
        %v906 = vunpack.c.h.b16 %v336
        %v907 = vunpack.c.l.b16 %v337
        %v908 = vunpack.c.h.b16 %v337
        %v909 = vunpack.c.l.b16 %v338
        %v910 = vunpack.c.h.b16 %v338
        %v911 = vunpack.c.l.b16 %v339
        %v912 = vunpack.c.h.b16 %v339
        %v913 = vunpack.c.l.b16 %v340
        %v914 = vunpack.c.h.b16 %v340
        %v915 = vunpack.c.l.b16 %v341
        %v916 = vunpack.c.h.b16 %v341
        %v917 = vunpack.c.l.b16 %v342
        %v918 = vunpack.c.h.b16 %v342
        %v919 = vunpack.c.l.b16 %v343
        %v920 = vunpack.c.h.b16 %v343
        %v921 = vunpack.c.l.b16 %v344
        %v922 = vunpack.c.h.b16 %v344
        %v923 = vunpack.c.l.b16 %v345
        %v924 = vunpack.c.h.b16 %v345
        %v925 = vunpack.c.l.b16 %v346
        %v926 = vunpack.c.h.b16 %v346
        %v927 = vunpack.c.l.b16 %v347
        %v928 = vunpack.c.h.b16 %v347
        %v929 = vunpack.c.l.b16 %v348
        %v930 = vunpack.c.h.b16 %v348
        %v931 = vunpack.c.l.b16 %v349
        %v932 = vunpack.c.h.b16 %v349
        %v933 = vunpack.c.l.b16 %v350
        %v934 = vunpack.c.h.b16 %v350
        %v935 = vunpack.c.l.b16 %v351
        %v936 = vunpack.c.h.b16 %v351
        %v937 = vunpack.c.l.b16 %v352
        %v938 = vunpack.c.h.b16 %v352
        %v939 = vunpack.c.l.b16 %v353
        %v940 = vunpack.c.h.b16 %v353
        %v941 = vunpack.c.l.b16 %v354
        %v942 = vunpack.c.h.b16 %v354
        %v943 = vunpack.c.l.b16 %v355
        %v944 = vunpack.c.h.b16 %v355
        %v945 = vunpack.c.l.b16 %v356
        %v946 = vunpack.c.h.b16 %v356
        %v947 = vunpack.c.l.b16 %v357
        %v948 = vunpack.c.h.b16 %v357
        %v949 = vunpack.c.l.b16 %v358
        %v950 = vunpack.c.h.b16 %v358
        %v951 = vunpack.c.l.b16 %v359
        %v952 = vunpack.c.h.b16 %v359
        %v953 = vunpack.c.l.b16 %v360
        %v954 = vunpack.c.h.b16 %v360
        %v955 = vunpack.c.l.b16 %v361
        %v956 = vunpack.c.h.b16 %v361
        %v957 = vunpack.c.l.b16 %v362
        %v958 = vunpack.c.h.b16 %v362
        %v959 = vunpack.c.l.b16 %v363
        %v960 = vunpack.c.h.b16 %v363
        %v961 = vunpack.c.l.b16 %v364
        %v962 = vunpack.c.h.b16 %v364
        %v963 = vunpack.c.l.b16 %v365
        %v964 = vunpack.c.h.b16 %v365
        %v965 = vunpack.c.l.b16 %v366
        %v966 = vunpack.c.h.b16 %v366
        %v967 = vunpack.c.l.b16 %v367
        %v968 = vunpack.c.h.b16 %v367
        %v969 = vunpack.c.l.b16 %v368
        %v970 = vunpack.c.h.b16 %v368
        %v971 = vunpack.c.l.b16 %v369
        %v972 = vunpack.c.h.b16 %v369
        %v973 = vunpack.c.l.b16 %v370
        %v974 = vunpack.c.h.b16 %v370
        %v975 = vunpack.c.l.b16 %v371
        %v976 = vunpack.c.h.b16 %v371
        %v977 = vunpack.c.l.b16 %v372
        %v978 = vunpack.c.h.b16 %v372
        %v979 = vunpack.c.l.b16 %v373
        %v980 = vunpack.c.h.b16 %v373
        %v981 = vunpack.c.l.b16 %v374
        %v982 = vunpack.c.h.b16 %v374
        %v983 = vunpack.c.l.b16 %v375
        %v984 = vunpack.c.h.b16 %v375
        %v985 = vunpack.c.l.b16 %v376
        %v986 = vunpack.c.h.b16 %v376
        %v987 = vunpack.c.l.b16 %v377
        %v988 = vunpack.c.h.b16 %v377
        %v989 = vunpack.c.l.b16 %v378
        %v990 = vunpack.c.h.b16 %v378
        %v991 = vunpack.c.l.b16 %v379
        %v992 = vunpack.c.h.b16 %v379
        %v993 = vunpack.c.l.b16 %v380
        %v994 = vunpack.c.h.b16 %v380
        %v995 = vunpack.c.l.b16 %v381
        %v996 = vunpack.c.h.b16 %v381
        %v997 = vunpack.c.l.b16 %v382
        %v998 = vunpack.c.h.b16 %v382
        %v999 = vunpack.c.l.b16 %v383
        %v1000 = vunpack.c.h.b16 %v383
        %v1001 = vunpack.c.l.b16 %v384
        %v1002 = vunpack.c.h.b16 %v384
        %v1003 = vunpack.c.l.b16 %v385
        %v1004 = vunpack.c.h.b16 %v385
        %v1005 = vunpack.c.l.b16 %v386
        %v1006 = vunpack.c.h.b16 %v386
        %v1007 = vunpack.c.l.b16 %v387
        %v1008 = vunpack.c.h.b16 %v387
        %v1009 = vunpack.c.l.b16 %v388
        %v1010 = vunpack.c.h.b16 %v388
        %v1011 = vunpack.c.l.b16 %v389
        %v1012 = vunpack.c.h.b16 %v389
        %v1013 = vunpack.c.l.b16 %v390
        %v1014 = vunpack.c.h.b16 %v390
        %v1015 = vunpack.c.l.b16 %v391
        %v1016 = vunpack.c.h.b16 %v391
        %v1017 = vunpack.c.l.b16 %v392
        %v1018 = vunpack.c.h.b16 %v392
        %v1019 = vunpack.c.l.b16 %v393
        %v1020 = vunpack.c.h.b16 %v393
        %v1021 = vunpack.c.l.b16 %v394
        %v1022 = vunpack.c.h.b16 %v394
        %v1023 = vunpack.c.l.b16 %v395
        %v1024 = vunpack.c.h.b16 %v395
        %v1025 = vunpack.c.l.b16 %v396
        %v1026 = vunpack.c.h.b16 %v396
        %v1027 = vunpack.c.l.b16 %v397
        %v1028 = vunpack.c.h.b16 %v397
        %v1029 = vpack.c.b16 %v877, %v875
        %v1030 = vpack.c.b16 %v878, %v876
        %v1031 = vpack.c.b16 %v881, %v879
        %v1032 = vpack.c.b16 %v882, %v880
        %v1033 = vpack.c.b16 %v885, %v883
        %v1034 = vpack.c.b16 %v886, %v884
        %v1035 = vpack.c.b16 %v889, %v887
        %v1036 = vpack.c.b16 %v890, %v888
        %v1037 = vpack.c.b16 %v893, %v891
        %v1038 = vpack.c.b16 %v894, %v892
        %v1039 = vpack.c.b16 %v897, %v895
        %v1040 = vpack.c.b16 %v898, %v896
        %v1041 = vpack.c.b16 %v901, %v899
        %v1042 = vpack.c.b16 %v902, %v900
        %v1043 = vpack.c.b16 %v905, %v903
        %v1044 = vpack.c.b16 %v906, %v904
        %v1045 = vpack.c.b16 %v909, %v907
        %v1046 = vpack.c.b16 %v910, %v908
        %v1047 = vpack.c.b16 %v913, %v911
        %v1048 = vpack.c.b16 %v914, %v912
        %v1049 = vpack.c.b16 %v917, %v915
        %v1050 = vpack.c.b16 %v918, %v916
        %v1051 = vpack.c.b16 %v921, %v919
        %v1052 = vpack.c.b16 %v922, %v920
        %v1053 = vpack.c.b16 %v925, %v923
        %v1054 = vpack.c.b16 %v926, %v924
        %v1055 = vpack.c.b16 %v929, %v927
        %v1056 = vpack.c.b16 %v930, %v928
        %v1057 = vpack.c.b16 %v933, %v931
        %v1058 = vpack.c.b16 %v934, %v932
        %v1059 = vpack.c.b16 %v937, %v935
        %v1060 = vpack.c.b16 %v938, %v936
        %v1061 = vpack.c.b16 %v941, %v939
        %v1062 = vpack.c.b16 %v942, %v940
        %v1063 = vpack.c.b16 %v945, %v943
        %v1064 = vpack.c.b16 %v946, %v944
        %v1065 = vpack.c.b16 %v949, %v947
        %v1066 = vpack.c.b16 %v950, %v948
        %v1067 = vpack.c.b16 %v953, %v951
        %v1068 = vpack.c.b16 %v954, %v952
        %v1069 = vpack.c.b16 %v957, %v955
        %v1070 = vpack.c.b16 %v958, %v956
        %v1071 = vpack.c.b16 %v961, %v959
        %v1072 = vpack.c.b16 %v962, %v960
        %v1073 = vpack.c.b16 %v965, %v963
        %v1074 = vpack.c.b16 %v966, %v964
        %v1075 = vpack.c.b16 %v969, %v967
        %v1076 = vpack.c.b16 %v970, %v968
        %v1077 = vpack.c.b16 %v973, %v971
        %v1078 = vpack.c.b16 %v974, %v972
        %v1079 = vpack.c.b16 %v977, %v975
        %v1080 = vpack.c.b16 %v978, %v976
        %v1081 = vpack.c.b16 %v981, %v979
        %v1082 = vpack.c.b16 %v982, %v980
        %v1083 = vpack.c.b16 %v985, %v983
        %v1084 = vpack.c.b16 %v986, %v984
        %v1085 = vpack.c.b16 %v989, %v987
        %v1086 = vpack.c.b16 %v990, %v988
        %v1087 = vpack.c.b16 %v993, %v991
        %v1088 = vpack.c.b16 %v994, %v992
        %v1089 = vpack.c.b16 %v997, %v995
        %v1090 = vpack.c.b16 %v998, %v996
        %v1091 = vpack.c.b16 %v1001, %v999
        %v1092 = vpack.c.b16 %v1002, %v1000
        %v1093 = vpack.c.b16 %v1005, %v1003
        %v1094 = vpack.c.b16 %v1006, %v1004
        %v1095 = vpack.c.b16 %v1009, %v1007
        %v1096 = vpack.c.b16 %v1010, %v1008
        %v1097 = vpack.c.b16 %v1013, %v1011
        %v1098 = vpack.c.b16 %v1014, %v1012
        %v1099 = vpack.c.b16 %v1017, %v1015
        %v1100 = vpack.c.b16 %v1018, %v1016
        %v1101 = vpack.c.b16 %v1021, %v1019
        %v1102 = vpack.c.b16 %v1022, %v1020
        %v1103 = vpack.c.b16 %v1025, %v1023
        %v1104 = vpack.c.b16 %v1026, %v1024
        %v1105 = vpack.c.b16 %v1027, %v1027
        %v1106 = vpack.c.b16 %v1028, %v1028
        %vm1183 = vcmask 826368
        %v1185 = vsel %vm1183, %v658, 0
        %v1188 = vsel %vm1183, %v663, 0
        %v1191 = vsel %vm1183, %v668, 0
        %v1194 = vsel %vm1183, %v673, 0
        %v1197 = vsel %vm1183, %v678, 0
        %v1200 = vsel %vm1183, %v683, 0
        %v1203 = vsel %vm1183, %v688, 0
        %v1206 = vsel %vm1183, %v693, 0
        %v1209 = vsel %vm1183, %v698, 0
        %v1212 = vsel %vm1183, %v703, 0
        %v1215 = vsel %vm1183, %v708, 0
        %v1218 = vsel %vm1183, %v713, 0
        %v1221 = vsel %vm1183, %v718, 0
        %v1224 = vsel %vm1183, %v723, 0
        %v1227 = vsel %vm1183, %v728, 0
        %v1230 = vsel %vm1183, %v733, 0
        %vm1232 = vcmask 1041408
        %vm1233 = vcmask 1042432
        %v1234 = vsel %vm1232, 4294967295, 65535
        %v1235 = vsel %vm1233, %v1234, 0
        %v1237 = vand.u32 %v1105, %v1235
        %v1240 = vand.u32 %v1106, %v1235
        %1242 = vmatpush.bf16.msra.mxu0 %v1043
        %1243 = vmatpush.bf16.msra.mxu0 %v1041
        %1244 = vmatpush.bf16.msra.mxu0 %v1039
        %1245 = vmatpush.bf16.msra.mxu0 %v1037
        %1246 = vmatpush.bf16.msra.mxu0 %v1035
        %1247 = vmatpush.bf16.msra.mxu0 %v1033
        %1248 = vmatpush.bf16.msra.mxu0 %v1031
        %1249 = vmatpush.bf16.msra.mxu0 %v1029
        %1250 = vmatmul.bf16.gmra.mxu0 %v654
        %v1251 = vpop.f32.mrf.mxu0
        %v1252 = vadd.f32 0.0, %v1251
        %v1253 = vpop.f32.mrf.mxu0
        %v1254 = vadd.f32 0.0, %v1253
        %1255 = vmatmul.bf16.gmra.mxu0 %v659
        %v1256 = vpop.f32.mrf.mxu0
        %v1257 = vadd.f32 0.0, %v1256
        %v1258 = vpop.f32.mrf.mxu0
        %v1259 = vadd.f32 0.0, %v1258
        %1260 = vmatmul.bf16.gmra.mxu0 %v664
        %v1261 = vpop.f32.mrf.mxu0
        %v1262 = vadd.f32 0.0, %v1261
        %v1263 = vpop.f32.mrf.mxu0
        %v1264 = vadd.f32 0.0, %v1263
        %1265 = vmatmul.bf16.gmra.mxu0 %v669
        %v1266 = vpop.f32.mrf.mxu0
        %v1267 = vadd.f32 0.0, %v1266
        %v1268 = vpop.f32.mrf.mxu0
        %v1269 = vadd.f32 0.0, %v1268
        %1270 = vmatmul.bf16.gmra.mxu0 %v674
        %v1271 = vpop.f32.mrf.mxu0
        %v1272 = vadd.f32 0.0, %v1271
        %v1273 = vpop.f32.mrf.mxu0
        %v1274 = vadd.f32 0.0, %v1273
        %1275 = vmatmul.bf16.gmra.mxu0 %v679
        %v1276 = vpop.f32.mrf.mxu0
        %v1277 = vadd.f32 0.0, %v1276
        %v1278 = vpop.f32.mrf.mxu0
        %v1279 = vadd.f32 0.0, %v1278
        %1280 = vmatmul.bf16.gmra.mxu0 %v684
        %v1281 = vpop.f32.mrf.mxu0
        %v1282 = vadd.f32 0.0, %v1281
        %v1283 = vpop.f32.mrf.mxu0
        %v1284 = vadd.f32 0.0, %v1283
        %1285 = vmatmul.bf16.gmra.mxu0 %v689
        %v1286 = vpop.f32.mrf.mxu0
        %v1287 = vadd.f32 0.0, %v1286
        %v1288 = vpop.f32.mrf.mxu0
        %v1289 = vadd.f32 0.0, %v1288
        %1290 = vmatmul.bf16.gmra.mxu0 %v694
        %v1291 = vpop.f32.mrf.mxu0
        %v1292 = vadd.f32 0.0, %v1291
        %v1293 = vpop.f32.mrf.mxu0
        %v1294 = vadd.f32 0.0, %v1293
        %1295 = vmatmul.bf16.gmra.mxu0 %v699
        %v1296 = vpop.f32.mrf.mxu0
        %v1297 = vadd.f32 0.0, %v1296
        %v1298 = vpop.f32.mrf.mxu0
        %v1299 = vadd.f32 0.0, %v1298
        %1300 = vmatmul.bf16.gmra.mxu0 %v704
        %v1301 = vpop.f32.mrf.mxu0
        %v1302 = vadd.f32 0.0, %v1301
        %v1303 = vpop.f32.mrf.mxu0
        %v1304 = vadd.f32 0.0, %v1303
        %1305 = vmatmul.bf16.gmra.mxu0 %v709
        %v1306 = vpop.f32.mrf.mxu0
        %v1307 = vadd.f32 0.0, %v1306
        %v1308 = vpop.f32.mrf.mxu0
        %v1309 = vadd.f32 0.0, %v1308
        %1310 = vmatmul.bf16.gmra.mxu0 %v714
        %v1311 = vpop.f32.mrf.mxu0
        %v1312 = vadd.f32 0.0, %v1311
        %v1313 = vpop.f32.mrf.mxu0
        %v1314 = vadd.f32 0.0, %v1313
        %1315 = vmatmul.bf16.gmra.mxu0 %v719
        %v1316 = vpop.f32.mrf.mxu0
        %v1317 = vadd.f32 0.0, %v1316
        %v1318 = vpop.f32.mrf.mxu0
        %v1319 = vadd.f32 0.0, %v1318
        %1320 = vmatmul.bf16.gmra.mxu0 %v724
        %v1321 = vpop.f32.mrf.mxu0
        %v1322 = vadd.f32 0.0, %v1321
        %v1323 = vpop.f32.mrf.mxu0
        %v1324 = vadd.f32 0.0, %v1323
        %1325 = vmatmul.bf16.gmra.mxu0 %v729
        %v1326 = vpop.f32.mrf.mxu0
        %v1327 = vadd.f32 0.0, %v1326
        %v1328 = vpop.f32.mrf.mxu0
        %v1329 = vadd.f32 0.0, %v1328
        %1330 = vdwg.mxu0
        %1331 = vmatpush.bf16.msra.mxu0 %v1059
        %1332 = vmatpush.bf16.msra.mxu0 %v1057
        %1333 = vmatpush.bf16.msra.mxu0 %v1055
        %1334 = vmatpush.bf16.msra.mxu0 %v1053
        %1335 = vmatpush.bf16.msra.mxu0 %v1051
        %1336 = vmatpush.bf16.msra.mxu0 %v1049
        %1337 = vmatpush.bf16.msra.mxu0 %v1047
        %1338 = vmatpush.bf16.msra.mxu0 %v1045
        %1339 = vmatmul.bf16.gmra.mxu0 %v655
        %v1340 = vpop.f32.mrf.mxu0
        %v1341 = vadd.f32 %v1252, %v1340
        %v1342 = vpop.f32.mrf.mxu0
        %v1343 = vadd.f32 %v1254, %v1342
        %1344 = vmatmul.bf16.gmra.mxu0 %v660
        %v1345 = vpop.f32.mrf.mxu0
        %v1346 = vadd.f32 %v1257, %v1345
        %v1347 = vpop.f32.mrf.mxu0
        %v1348 = vadd.f32 %v1259, %v1347
        %1349 = vmatmul.bf16.gmra.mxu0 %v665
        %v1350 = vpop.f32.mrf.mxu0
        %v1351 = vadd.f32 %v1262, %v1350
        %v1352 = vpop.f32.mrf.mxu0
        %v1353 = vadd.f32 %v1264, %v1352
        %1354 = vmatmul.bf16.gmra.mxu0 %v670
        %v1355 = vpop.f32.mrf.mxu0
        %v1356 = vadd.f32 %v1267, %v1355
        %v1357 = vpop.f32.mrf.mxu0
        %v1358 = vadd.f32 %v1269, %v1357
        %1359 = vmatmul.bf16.gmra.mxu0 %v675
        %v1360 = vpop.f32.mrf.mxu0
        %v1361 = vadd.f32 %v1272, %v1360
        %v1362 = vpop.f32.mrf.mxu0
        %v1363 = vadd.f32 %v1274, %v1362
        %1364 = vmatmul.bf16.gmra.mxu0 %v680
        %v1365 = vpop.f32.mrf.mxu0
        %v1366 = vadd.f32 %v1277, %v1365
        %v1367 = vpop.f32.mrf.mxu0
        %v1368 = vadd.f32 %v1279, %v1367
        %1369 = vmatmul.bf16.gmra.mxu0 %v685
        %v1370 = vpop.f32.mrf.mxu0
        %v1371 = vadd.f32 %v1282, %v1370
        %v1372 = vpop.f32.mrf.mxu0
        %v1373 = vadd.f32 %v1284, %v1372
        %1374 = vmatmul.bf16.gmra.mxu0 %v690
        %v1375 = vpop.f32.mrf.mxu0
        %v1376 = vadd.f32 %v1287, %v1375
        %v1377 = vpop.f32.mrf.mxu0
        %v1378 = vadd.f32 %v1289, %v1377
        %1379 = vmatmul.bf16.gmra.mxu0 %v695
        %v1380 = vpop.f32.mrf.mxu0
        %v1381 = vadd.f32 %v1292, %v1380
        %v1382 = vpop.f32.mrf.mxu0
        %v1383 = vadd.f32 %v1294, %v1382
        %1384 = vmatmul.bf16.gmra.mxu0 %v700
        %v1385 = vpop.f32.mrf.mxu0
        %v1386 = vadd.f32 %v1297, %v1385
        %v1387 = vpop.f32.mrf.mxu0
        %v1388 = vadd.f32 %v1299, %v1387
        %1389 = vmatmul.bf16.gmra.mxu0 %v705
        %v1390 = vpop.f32.mrf.mxu0
        %v1391 = vadd.f32 %v1302, %v1390
        %v1392 = vpop.f32.mrf.mxu0
        %v1393 = vadd.f32 %v1304, %v1392
        %1394 = vmatmul.bf16.gmra.mxu0 %v710
        %v1395 = vpop.f32.mrf.mxu0
        %v1396 = vadd.f32 %v1307, %v1395
        %v1397 = vpop.f32.mrf.mxu0
        %v1398 = vadd.f32 %v1309, %v1397
        %1399 = vmatmul.bf16.gmra.mxu0 %v715
        %v1400 = vpop.f32.mrf.mxu0
        %v1401 = vadd.f32 %v1312, %v1400
        %v1402 = vpop.f32.mrf.mxu0
        %v1403 = vadd.f32 %v1314, %v1402
        %1404 = vmatmul.bf16.gmra.mxu0 %v720
        %v1405 = vpop.f32.mrf.mxu0
        %v1406 = vadd.f32 %v1317, %v1405
        %v1407 = vpop.f32.mrf.mxu0
        %v1408 = vadd.f32 %v1319, %v1407
        %1409 = vmatmul.bf16.gmra.mxu0 %v725
        %v1410 = vpop.f32.mrf.mxu0
        %v1411 = vadd.f32 %v1322, %v1410
        %v1412 = vpop.f32.mrf.mxu0
        %v1413 = vadd.f32 %v1324, %v1412
        %1414 = vmatmul.bf16.gmra.mxu0 %v730
        %v1415 = vpop.f32.mrf.mxu0
        %v1416 = vadd.f32 %v1327, %v1415
        %v1417 = vpop.f32.mrf.mxu0
        %v1418 = vadd.f32 %v1329, %v1417
        %1419 = vdwg.mxu0
        %1420 = vmatpush.bf16.msra.mxu0 %v1075
        %1421 = vmatpush.bf16.msra.mxu0 %v1073
        %1422 = vmatpush.bf16.msra.mxu0 %v1071
        %1423 = vmatpush.bf16.msra.mxu0 %v1069
        %1424 = vmatpush.bf16.msra.mxu0 %v1067
        %1425 = vmatpush.bf16.msra.mxu0 %v1065
        %1426 = vmatpush.bf16.msra.mxu0 %v1063
        %1427 = vmatpush.bf16.msra.mxu0 %v1061
        %1428 = vmatmul.bf16.gmra.mxu0 %v656
        %v1429 = vpop.f32.mrf.mxu0
        %v1430 = vadd.f32 %v1341, %v1429
        %v1431 = vpop.f32.mrf.mxu0
        %v1432 = vadd.f32 %v1343, %v1431
        %1433 = vmatmul.bf16.gmra.mxu0 %v661
        %v1434 = vpop.f32.mrf.mxu0
        %v1435 = vadd.f32 %v1346, %v1434
        %v1436 = vpop.f32.mrf.mxu0
        %v1437 = vadd.f32 %v1348, %v1436
        %1438 = vmatmul.bf16.gmra.mxu0 %v666
        %v1439 = vpop.f32.mrf.mxu0
        %v1440 = vadd.f32 %v1351, %v1439
        %v1441 = vpop.f32.mrf.mxu0
        %v1442 = vadd.f32 %v1353, %v1441
        %1443 = vmatmul.bf16.gmra.mxu0 %v671
        %v1444 = vpop.f32.mrf.mxu0
        %v1445 = vadd.f32 %v1356, %v1444
        %v1446 = vpop.f32.mrf.mxu0
        %v1447 = vadd.f32 %v1358, %v1446
        %1448 = vmatmul.bf16.gmra.mxu0 %v676
        %v1449 = vpop.f32.mrf.mxu0
        %v1450 = vadd.f32 %v1361, %v1449
        %v1451 = vpop.f32.mrf.mxu0
        %v1452 = vadd.f32 %v1363, %v1451
        %1453 = vmatmul.bf16.gmra.mxu0 %v681
        %v1454 = vpop.f32.mrf.mxu0
        %v1455 = vadd.f32 %v1366, %v1454
        %v1456 = vpop.f32.mrf.mxu0
        %v1457 = vadd.f32 %v1368, %v1456
        %1458 = vmatmul.bf16.gmra.mxu0 %v686
        %v1459 = vpop.f32.mrf.mxu0
        %v1460 = vadd.f32 %v1371, %v1459
        %v1461 = vpop.f32.mrf.mxu0
        %v1462 = vadd.f32 %v1373, %v1461
        %1463 = vmatmul.bf16.gmra.mxu0 %v691
        %v1464 = vpop.f32.mrf.mxu0
        %v1465 = vadd.f32 %v1376, %v1464
        %v1466 = vpop.f32.mrf.mxu0
        %v1467 = vadd.f32 %v1378, %v1466
        %1468 = vmatmul.bf16.gmra.mxu0 %v696
        %v1469 = vpop.f32.mrf.mxu0
        %v1470 = vadd.f32 %v1381, %v1469
        %v1471 = vpop.f32.mrf.mxu0
        %v1472 = vadd.f32 %v1383, %v1471
        %1473 = vmatmul.bf16.gmra.mxu0 %v701
        %v1474 = vpop.f32.mrf.mxu0
        %v1475 = vadd.f32 %v1386, %v1474
        %v1476 = vpop.f32.mrf.mxu0
        %v1477 = vadd.f32 %v1388, %v1476
        %1478 = vmatmul.bf16.gmra.mxu0 %v706
        %v1479 = vpop.f32.mrf.mxu0
        %v1480 = vadd.f32 %v1391, %v1479
        %v1481 = vpop.f32.mrf.mxu0
        %v1482 = vadd.f32 %v1393, %v1481
        %1483 = vmatmul.bf16.gmra.mxu0 %v711
        %v1484 = vpop.f32.mrf.mxu0
        %v1485 = vadd.f32 %v1396, %v1484
        %v1486 = vpop.f32.mrf.mxu0
        %v1487 = vadd.f32 %v1398, %v1486
        %1488 = vmatmul.bf16.gmra.mxu0 %v716
        %v1489 = vpop.f32.mrf.mxu0
        %v1490 = vadd.f32 %v1401, %v1489
        %v1491 = vpop.f32.mrf.mxu0
        %v1492 = vadd.f32 %v1403, %v1491
        %1493 = vmatmul.bf16.gmra.mxu0 %v721
        %v1494 = vpop.f32.mrf.mxu0
        %v1495 = vadd.f32 %v1406, %v1494
        %v1496 = vpop.f32.mrf.mxu0
        %v1497 = vadd.f32 %v1408, %v1496
        %1498 = vmatmul.bf16.gmra.mxu0 %v726
        %v1499 = vpop.f32.mrf.mxu0
        %v1500 = vadd.f32 %v1411, %v1499
        %v1501 = vpop.f32.mrf.mxu0
        %v1502 = vadd.f32 %v1413, %v1501
        %1503 = vmatmul.bf16.gmra.mxu0 %v731
        %v1504 = vpop.f32.mrf.mxu0
        %v1505 = vadd.f32 %v1416, %v1504
        %v1506 = vpop.f32.mrf.mxu0
        %v1507 = vadd.f32 %v1418, %v1506
        %1508 = vdwg.mxu0
        %1509 = vmatpush.bf16.msra.mxu0 %v1091
        %1510 = vmatpush.bf16.msra.mxu0 %v1089
        %1511 = vmatpush.bf16.msra.mxu0 %v1087
        %1512 = vmatpush.bf16.msra.mxu0 %v1085
        %1513 = vmatpush.bf16.msra.mxu0 %v1083
        %1514 = vmatpush.bf16.msra.mxu0 %v1081
        %1515 = vmatpush.bf16.msra.mxu0 %v1079
        %1516 = vmatpush.bf16.msra.mxu0 %v1077
        %1517 = vmatmul.bf16.gmra.mxu0 %v657
        %v1518 = vpop.f32.mrf.mxu0
        %v1519 = vadd.f32 %v1430, %v1518
        %v1520 = vpop.f32.mrf.mxu0
        %v1521 = vadd.f32 %v1432, %v1520
        %1522 = vmatmul.bf16.gmra.mxu0 %v662
        %v1523 = vpop.f32.mrf.mxu0
        %v1524 = vadd.f32 %v1435, %v1523
        %v1525 = vpop.f32.mrf.mxu0
        %v1526 = vadd.f32 %v1437, %v1525
        %1527 = vmatmul.bf16.gmra.mxu0 %v667
        %v1528 = vpop.f32.mrf.mxu0
        %v1529 = vadd.f32 %v1440, %v1528
        %v1530 = vpop.f32.mrf.mxu0
        %v1531 = vadd.f32 %v1442, %v1530
        %1532 = vmatmul.bf16.gmra.mxu0 %v672
        %v1533 = vpop.f32.mrf.mxu0
        %v1534 = vadd.f32 %v1445, %v1533
        %v1535 = vpop.f32.mrf.mxu0
        %v1536 = vadd.f32 %v1447, %v1535
        %1537 = vmatmul.bf16.gmra.mxu0 %v677
        %v1538 = vpop.f32.mrf.mxu0
        %v1539 = vadd.f32 %v1450, %v1538
        %v1540 = vpop.f32.mrf.mxu0
        %v1541 = vadd.f32 %v1452, %v1540
        %1542 = vmatmul.bf16.gmra.mxu0 %v682
        %v1543 = vpop.f32.mrf.mxu0
        %v1544 = vadd.f32 %v1455, %v1543
        %v1545 = vpop.f32.mrf.mxu0
        %v1546 = vadd.f32 %v1457, %v1545
        %1547 = vmatmul.bf16.gmra.mxu0 %v687
        %v1548 = vpop.f32.mrf.mxu0
        %v1549 = vadd.f32 %v1460, %v1548
        %v1550 = vpop.f32.mrf.mxu0
        %v1551 = vadd.f32 %v1462, %v1550
        %1552 = vmatmul.bf16.gmra.mxu0 %v692
        %v1553 = vpop.f32.mrf.mxu0
        %v1554 = vadd.f32 %v1465, %v1553
        %v1555 = vpop.f32.mrf.mxu0
        %v1556 = vadd.f32 %v1467, %v1555
        %1557 = vmatmul.bf16.gmra.mxu0 %v697
        %v1558 = vpop.f32.mrf.mxu0
        %v1559 = vadd.f32 %v1470, %v1558
        %v1560 = vpop.f32.mrf.mxu0
        %v1561 = vadd.f32 %v1472, %v1560
        %1562 = vmatmul.bf16.gmra.mxu0 %v702
        %v1563 = vpop.f32.mrf.mxu0
        %v1564 = vadd.f32 %v1475, %v1563
        %v1565 = vpop.f32.mrf.mxu0
        %v1566 = vadd.f32 %v1477, %v1565
        %1567 = vmatmul.bf16.gmra.mxu0 %v707
        %v1568 = vpop.f32.mrf.mxu0
        %v1569 = vadd.f32 %v1480, %v1568
        %v1570 = vpop.f32.mrf.mxu0
        %v1571 = vadd.f32 %v1482, %v1570
        %1572 = vmatmul.bf16.gmra.mxu0 %v712
        %v1573 = vpop.f32.mrf.mxu0
        %v1574 = vadd.f32 %v1485, %v1573
        %v1575 = vpop.f32.mrf.mxu0
        %v1576 = vadd.f32 %v1487, %v1575
        %1577 = vmatmul.bf16.gmra.mxu0 %v717
        %v1578 = vpop.f32.mrf.mxu0
        %v1579 = vadd.f32 %v1490, %v1578
        %v1580 = vpop.f32.mrf.mxu0
        %v1581 = vadd.f32 %v1492, %v1580
        %1582 = vmatmul.bf16.gmra.mxu0 %v722
        %v1583 = vpop.f32.mrf.mxu0
        %v1584 = vadd.f32 %v1495, %v1583
        %v1585 = vpop.f32.mrf.mxu0
        %v1586 = vadd.f32 %v1497, %v1585
        %1587 = vmatmul.bf16.gmra.mxu0 %v727
        %v1588 = vpop.f32.mrf.mxu0
        %v1589 = vadd.f32 %v1500, %v1588
        %v1590 = vpop.f32.mrf.mxu0
        %v1591 = vadd.f32 %v1502, %v1590
        %1592 = vmatmul.bf16.gmra.mxu0 %v732
        %v1593 = vpop.f32.mrf.mxu0
        %v1594 = vadd.f32 %v1505, %v1593
        %v1595 = vpop.f32.mrf.mxu0
        %v1596 = vadd.f32 %v1507, %v1595
        %1597 = vdwg.mxu0
        %1598 = vmatpush.bf16.msra.mxu0 0
        %1599 = vmatpush.bf16.msra.mxu0 %v1237
        %1600 = vmatpush.bf16.msra.mxu0 %v1103
        %1601 = vmatpush.bf16.msra.mxu0 %v1101
        %1602 = vmatpush.bf16.msra.mxu0 %v1099
        %1603 = vmatpush.bf16.msra.mxu0 %v1097
        %1604 = vmatpush.bf16.msra.mxu0 %v1095
        %1605 = vmatpush.bf16.msra.mxu0 %v1093
        %1606 = vmatmul.bf16.gmra.mxu0 %v1185
        %v1607 = vpop.f32.mrf.mxu0
        %v1608 = vadd.f32 %v1519, %v1607
        %v1609 = vpop.f32.mrf.mxu0
        %v1610 = vadd.f32 %v1521, %v1609
        %1611 = vmatmul.bf16.gmra.mxu0 %v1188
        %v1612 = vpop.f32.mrf.mxu0
        %v1613 = vadd.f32 %v1524, %v1612
        %v1614 = vpop.f32.mrf.mxu0
        %v1615 = vadd.f32 %v1526, %v1614
        %1616 = vmatmul.bf16.gmra.mxu0 %v1191
        %v1617 = vpop.f32.mrf.mxu0
        %v1618 = vadd.f32 %v1529, %v1617
        %v1619 = vpop.f32.mrf.mxu0
        %v1620 = vadd.f32 %v1531, %v1619
        %1621 = vmatmul.bf16.gmra.mxu0 %v1194
        %v1622 = vpop.f32.mrf.mxu0
        %v1623 = vadd.f32 %v1534, %v1622
        %v1624 = vpop.f32.mrf.mxu0
        %v1625 = vadd.f32 %v1536, %v1624
        %1626 = vmatmul.bf16.gmra.mxu0 %v1197
        %v1627 = vpop.f32.mrf.mxu0
        %v1628 = vadd.f32 %v1539, %v1627
        %v1629 = vpop.f32.mrf.mxu0
        %v1630 = vadd.f32 %v1541, %v1629
        %1631 = vmatmul.bf16.gmra.mxu0 %v1200
        %v1632 = vpop.f32.mrf.mxu0
        %v1633 = vadd.f32 %v1544, %v1632
        %v1634 = vpop.f32.mrf.mxu0
        %v1635 = vadd.f32 %v1546, %v1634
        %1636 = vmatmul.bf16.gmra.mxu0 %v1203
        %v1637 = vpop.f32.mrf.mxu0
        %v1638 = vadd.f32 %v1549, %v1637
        %v1639 = vpop.f32.mrf.mxu0
        %v1640 = vadd.f32 %v1551, %v1639
        %1641 = vmatmul.bf16.gmra.mxu0 %v1206
        %v1642 = vpop.f32.mrf.mxu0
        %v1643 = vadd.f32 %v1554, %v1642
        %v1644 = vpop.f32.mrf.mxu0
        %v1645 = vadd.f32 %v1556, %v1644
        %1646 = vmatmul.bf16.gmra.mxu0 %v1209
        %v1647 = vpop.f32.mrf.mxu0
        %v1648 = vadd.f32 %v1559, %v1647
        %v1649 = vpop.f32.mrf.mxu0
        %v1650 = vadd.f32 %v1561, %v1649
        %1651 = vmatmul.bf16.gmra.mxu0 %v1212
        %v1652 = vpop.f32.mrf.mxu0
        %v1653 = vadd.f32 %v1564, %v1652
        %v1654 = vpop.f32.mrf.mxu0
        %v1655 = vadd.f32 %v1566, %v1654
        %1656 = vmatmul.bf16.gmra.mxu0 %v1215
        %v1657 = vpop.f32.mrf.mxu0
        %v1658 = vadd.f32 %v1569, %v1657
        %v1659 = vpop.f32.mrf.mxu0
        %v1660 = vadd.f32 %v1571, %v1659
        %1661 = vmatmul.bf16.gmra.mxu0 %v1218
        %v1662 = vpop.f32.mrf.mxu0
        %v1663 = vadd.f32 %v1574, %v1662
        %v1664 = vpop.f32.mrf.mxu0
        %v1665 = vadd.f32 %v1576, %v1664
        %1666 = vmatmul.bf16.gmra.mxu0 %v1221
        %v1667 = vpop.f32.mrf.mxu0
        %v1668 = vadd.f32 %v1579, %v1667
        %v1669 = vpop.f32.mrf.mxu0
        %v1670 = vadd.f32 %v1581, %v1669
        %1671 = vmatmul.bf16.gmra.mxu0 %v1224
        %v1672 = vpop.f32.mrf.mxu0
        %v1673 = vadd.f32 %v1584, %v1672
        %v1674 = vpop.f32.mrf.mxu0
        %v1675 = vadd.f32 %v1586, %v1674
        %1676 = vmatmul.bf16.gmra.mxu0 %v1227
        %v1677 = vpop.f32.mrf.mxu0
        %v1678 = vadd.f32 %v1589, %v1677
        %v1679 = vpop.f32.mrf.mxu0
        %v1680 = vadd.f32 %v1591, %v1679
        %1681 = vmatmul.bf16.gmra.mxu0 %v1230
        %v1682 = vpop.f32.mrf.mxu0
        %v1683 = vadd.f32 %v1594, %v1682
        %v1684 = vpop.f32.mrf.mxu0
        %v1685 = vadd.f32 %v1596, %v1684
        %1686 = vdwg.mxu0
        %1687 = vmatpush.bf16.msra.mxu0 %v1044
        %1688 = vmatpush.bf16.msra.mxu0 %v1042
        %1689 = vmatpush.bf16.msra.mxu0 %v1040
        %1690 = vmatpush.bf16.msra.mxu0 %v1038
        %1691 = vmatpush.bf16.msra.mxu0 %v1036
        %1692 = vmatpush.bf16.msra.mxu0 %v1034
        %1693 = vmatpush.bf16.msra.mxu0 %v1032
        %1694 = vmatpush.bf16.msra.mxu0 %v1030
        %1695 = vmatmul.bf16.gmra.mxu0 %v654
        %v1696 = vpop.f32.mrf.mxu0
        %v1697 = vadd.f32 0.0, %v1696
        %v1698 = vpop.f32.mrf.mxu0
        %v1699 = vadd.f32 0.0, %v1698
        %1700 = vmatmul.bf16.gmra.mxu0 %v659
        %v1701 = vpop.f32.mrf.mxu0
        %v1702 = vadd.f32 0.0, %v1701
        %v1703 = vpop.f32.mrf.mxu0
        %v1704 = vadd.f32 0.0, %v1703
        %1705 = vmatmul.bf16.gmra.mxu0 %v664
        %v1706 = vpop.f32.mrf.mxu0
        %v1707 = vadd.f32 0.0, %v1706
        %v1708 = vpop.f32.mrf.mxu0
        %v1709 = vadd.f32 0.0, %v1708
        %1710 = vmatmul.bf16.gmra.mxu0 %v669
        %v1711 = vpop.f32.mrf.mxu0
        %v1712 = vadd.f32 0.0, %v1711
        %v1713 = vpop.f32.mrf.mxu0
        %v1714 = vadd.f32 0.0, %v1713
        %1715 = vmatmul.bf16.gmra.mxu0 %v674
        %v1716 = vpop.f32.mrf.mxu0
        %v1717 = vadd.f32 0.0, %v1716
        %v1718 = vpop.f32.mrf.mxu0
        %v1719 = vadd.f32 0.0, %v1718
        %1720 = vmatmul.bf16.gmra.mxu0 %v679
        %v1721 = vpop.f32.mrf.mxu0
        %v1722 = vadd.f32 0.0, %v1721
        %v1723 = vpop.f32.mrf.mxu0
        %v1724 = vadd.f32 0.0, %v1723
        %1725 = vmatmul.bf16.gmra.mxu0 %v684
        %v1726 = vpop.f32.mrf.mxu0
        %v1727 = vadd.f32 0.0, %v1726
        %v1728 = vpop.f32.mrf.mxu0
        %v1729 = vadd.f32 0.0, %v1728
        %1730 = vmatmul.bf16.gmra.mxu0 %v689
        %v1731 = vpop.f32.mrf.mxu0
        %v1732 = vadd.f32 0.0, %v1731
        %v1733 = vpop.f32.mrf.mxu0
        %v1734 = vadd.f32 0.0, %v1733
        %1735 = vmatmul.bf16.gmra.mxu0 %v694
        %v1736 = vpop.f32.mrf.mxu0
        %v1737 = vadd.f32 0.0, %v1736
        %v1738 = vpop.f32.mrf.mxu0
        %v1739 = vadd.f32 0.0, %v1738
        %1740 = vmatmul.bf16.gmra.mxu0 %v699
        %v1741 = vpop.f32.mrf.mxu0
        %v1742 = vadd.f32 0.0, %v1741
        %v1743 = vpop.f32.mrf.mxu0
        %v1744 = vadd.f32 0.0, %v1743
        %1745 = vmatmul.bf16.gmra.mxu0 %v704
        %v1746 = vpop.f32.mrf.mxu0
        %v1747 = vadd.f32 0.0, %v1746
        %v1748 = vpop.f32.mrf.mxu0
        %v1749 = vadd.f32 0.0, %v1748
        %1750 = vmatmul.bf16.gmra.mxu0 %v709
        %v1751 = vpop.f32.mrf.mxu0
        %v1752 = vadd.f32 0.0, %v1751
        %v1753 = vpop.f32.mrf.mxu0
        %v1754 = vadd.f32 0.0, %v1753
        %1755 = vmatmul.bf16.gmra.mxu0 %v714
        %v1756 = vpop.f32.mrf.mxu0
        %v1757 = vadd.f32 0.0, %v1756
        %v1758 = vpop.f32.mrf.mxu0
        %v1759 = vadd.f32 0.0, %v1758
        %1760 = vmatmul.bf16.gmra.mxu0 %v719
        %v1761 = vpop.f32.mrf.mxu0
        %v1762 = vadd.f32 0.0, %v1761
        %v1763 = vpop.f32.mrf.mxu0
        %v1764 = vadd.f32 0.0, %v1763
        %1765 = vmatmul.bf16.gmra.mxu0 %v724
        %v1766 = vpop.f32.mrf.mxu0
        %v1767 = vadd.f32 0.0, %v1766
        %v1768 = vpop.f32.mrf.mxu0
        %v1769 = vadd.f32 0.0, %v1768
        %1770 = vmatmul.bf16.gmra.mxu0 %v729
        %v1771 = vpop.f32.mrf.mxu0
        %v1772 = vadd.f32 0.0, %v1771
        %v1773 = vpop.f32.mrf.mxu0
        %v1774 = vadd.f32 0.0, %v1773
        %1775 = vdwg.mxu0
        %1776 = vmatpush.bf16.msra.mxu0 %v1060
        %1777 = vmatpush.bf16.msra.mxu0 %v1058
        %1778 = vmatpush.bf16.msra.mxu0 %v1056
        %1779 = vmatpush.bf16.msra.mxu0 %v1054
        %1780 = vmatpush.bf16.msra.mxu0 %v1052
        %1781 = vmatpush.bf16.msra.mxu0 %v1050
        %1782 = vmatpush.bf16.msra.mxu0 %v1048
        %1783 = vmatpush.bf16.msra.mxu0 %v1046
        %1784 = vmatmul.bf16.gmra.mxu0 %v655
        %v1785 = vpop.f32.mrf.mxu0
        %v1786 = vadd.f32 %v1697, %v1785
        %v1787 = vpop.f32.mrf.mxu0
        %v1788 = vadd.f32 %v1699, %v1787
        %1789 = vmatmul.bf16.gmra.mxu0 %v660
        %v1790 = vpop.f32.mrf.mxu0
        %v1791 = vadd.f32 %v1702, %v1790
        %v1792 = vpop.f32.mrf.mxu0
        %v1793 = vadd.f32 %v1704, %v1792
        %1794 = vmatmul.bf16.gmra.mxu0 %v665
        %v1795 = vpop.f32.mrf.mxu0
        %v1796 = vadd.f32 %v1707, %v1795
        %v1797 = vpop.f32.mrf.mxu0
        %v1798 = vadd.f32 %v1709, %v1797
        %1799 = vmatmul.bf16.gmra.mxu0 %v670
        %v1800 = vpop.f32.mrf.mxu0
        %v1801 = vadd.f32 %v1712, %v1800
        %v1802 = vpop.f32.mrf.mxu0
        %v1803 = vadd.f32 %v1714, %v1802
        %1804 = vmatmul.bf16.gmra.mxu0 %v675
        %v1805 = vpop.f32.mrf.mxu0
        %v1806 = vadd.f32 %v1717, %v1805
        %v1807 = vpop.f32.mrf.mxu0
        %v1808 = vadd.f32 %v1719, %v1807
        %1809 = vmatmul.bf16.gmra.mxu0 %v680
        %v1810 = vpop.f32.mrf.mxu0
        %v1811 = vadd.f32 %v1722, %v1810
        %v1812 = vpop.f32.mrf.mxu0
        %v1813 = vadd.f32 %v1724, %v1812
        %1814 = vmatmul.bf16.gmra.mxu0 %v685
        %v1815 = vpop.f32.mrf.mxu0
        %v1816 = vadd.f32 %v1727, %v1815
        %v1817 = vpop.f32.mrf.mxu0
        %v1818 = vadd.f32 %v1729, %v1817
        %1819 = vmatmul.bf16.gmra.mxu0 %v690
        %v1820 = vpop.f32.mrf.mxu0
        %v1821 = vadd.f32 %v1732, %v1820
        %v1822 = vpop.f32.mrf.mxu0
        %v1823 = vadd.f32 %v1734, %v1822
        %1824 = vmatmul.bf16.gmra.mxu0 %v695
        %v1825 = vpop.f32.mrf.mxu0
        %v1826 = vadd.f32 %v1737, %v1825
        %v1827 = vpop.f32.mrf.mxu0
        %v1828 = vadd.f32 %v1739, %v1827
        %1829 = vmatmul.bf16.gmra.mxu0 %v700
        %v1830 = vpop.f32.mrf.mxu0
        %v1831 = vadd.f32 %v1742, %v1830
        %v1832 = vpop.f32.mrf.mxu0
        %v1833 = vadd.f32 %v1744, %v1832
        %1834 = vmatmul.bf16.gmra.mxu0 %v705
        %v1835 = vpop.f32.mrf.mxu0
        %v1836 = vadd.f32 %v1747, %v1835
        %v1837 = vpop.f32.mrf.mxu0
        %v1838 = vadd.f32 %v1749, %v1837
        %1839 = vmatmul.bf16.gmra.mxu0 %v710
        %v1840 = vpop.f32.mrf.mxu0
        %v1841 = vadd.f32 %v1752, %v1840
        %v1842 = vpop.f32.mrf.mxu0
        %v1843 = vadd.f32 %v1754, %v1842
        %1844 = vmatmul.bf16.gmra.mxu0 %v715
        %v1845 = vpop.f32.mrf.mxu0
        %v1846 = vadd.f32 %v1757, %v1845
        %v1847 = vpop.f32.mrf.mxu0
        %v1848 = vadd.f32 %v1759, %v1847
        %1849 = vmatmul.bf16.gmra.mxu0 %v720
        %v1850 = vpop.f32.mrf.mxu0
        %v1851 = vadd.f32 %v1762, %v1850
        %v1852 = vpop.f32.mrf.mxu0
        %v1853 = vadd.f32 %v1764, %v1852
        %1854 = vmatmul.bf16.gmra.mxu0 %v725
        %v1855 = vpop.f32.mrf.mxu0
        %v1856 = vadd.f32 %v1767, %v1855
        %v1857 = vpop.f32.mrf.mxu0
        %v1858 = vadd.f32 %v1769, %v1857
        %1859 = vmatmul.bf16.gmra.mxu0 %v730
        %v1860 = vpop.f32.mrf.mxu0
        %v1861 = vadd.f32 %v1772, %v1860
        %v1862 = vpop.f32.mrf.mxu0
        %v1863 = vadd.f32 %v1774, %v1862
        %1864 = vdwg.mxu0
        %1865 = vmatpush.bf16.msra.mxu0 %v1076
        %1866 = vmatpush.bf16.msra.mxu0 %v1074
        %1867 = vmatpush.bf16.msra.mxu0 %v1072
        %1868 = vmatpush.bf16.msra.mxu0 %v1070
        %1869 = vmatpush.bf16.msra.mxu0 %v1068
        %1870 = vmatpush.bf16.msra.mxu0 %v1066
        %1871 = vmatpush.bf16.msra.mxu0 %v1064
        %1872 = vmatpush.bf16.msra.mxu0 %v1062
        %1873 = vmatmul.bf16.gmra.mxu0 %v656
        %v1874 = vpop.f32.mrf.mxu0
        %v1875 = vadd.f32 %v1786, %v1874
        %v1876 = vpop.f32.mrf.mxu0
        %v1877 = vadd.f32 %v1788, %v1876
        %1878 = vmatmul.bf16.gmra.mxu0 %v661
        %v1879 = vpop.f32.mrf.mxu0
        %v1880 = vadd.f32 %v1791, %v1879
        %v1881 = vpop.f32.mrf.mxu0
        %v1882 = vadd.f32 %v1793, %v1881
        %1883 = vmatmul.bf16.gmra.mxu0 %v666
        %v1884 = vpop.f32.mrf.mxu0
        %v1885 = vadd.f32 %v1796, %v1884
        %v1886 = vpop.f32.mrf.mxu0
        %v1887 = vadd.f32 %v1798, %v1886
        %1888 = vmatmul.bf16.gmra.mxu0 %v671
        %v1889 = vpop.f32.mrf.mxu0
        %v1890 = vadd.f32 %v1801, %v1889
        %v1891 = vpop.f32.mrf.mxu0
        %v1892 = vadd.f32 %v1803, %v1891
        %1893 = vmatmul.bf16.gmra.mxu0 %v676
        %v1894 = vpop.f32.mrf.mxu0
        %v1895 = vadd.f32 %v1806, %v1894
        %v1896 = vpop.f32.mrf.mxu0
        %v1897 = vadd.f32 %v1808, %v1896
        %1898 = vmatmul.bf16.gmra.mxu0 %v681
        %v1899 = vpop.f32.mrf.mxu0
        %v1900 = vadd.f32 %v1811, %v1899
        %v1901 = vpop.f32.mrf.mxu0
        %v1902 = vadd.f32 %v1813, %v1901
        %1903 = vmatmul.bf16.gmra.mxu0 %v686
        %v1904 = vpop.f32.mrf.mxu0
        %v1905 = vadd.f32 %v1816, %v1904
        %v1906 = vpop.f32.mrf.mxu0
        %v1907 = vadd.f32 %v1818, %v1906
        %1908 = vmatmul.bf16.gmra.mxu0 %v691
        %v1909 = vpop.f32.mrf.mxu0
        %v1910 = vadd.f32 %v1821, %v1909
        %v1911 = vpop.f32.mrf.mxu0
        %v1912 = vadd.f32 %v1823, %v1911
        %1913 = vmatmul.bf16.gmra.mxu0 %v696
        %v1914 = vpop.f32.mrf.mxu0
        %v1915 = vadd.f32 %v1826, %v1914
        %v1916 = vpop.f32.mrf.mxu0
        %v1917 = vadd.f32 %v1828, %v1916
        %1918 = vmatmul.bf16.gmra.mxu0 %v701
        %v1919 = vpop.f32.mrf.mxu0
        %v1920 = vadd.f32 %v1831, %v1919
        %v1921 = vpop.f32.mrf.mxu0
        %v1922 = vadd.f32 %v1833, %v1921
        %1923 = vmatmul.bf16.gmra.mxu0 %v706
        %v1924 = vpop.f32.mrf.mxu0
        %v1925 = vadd.f32 %v1836, %v1924
        %v1926 = vpop.f32.mrf.mxu0
        %v1927 = vadd.f32 %v1838, %v1926
        %1928 = vmatmul.bf16.gmra.mxu0 %v711
        %v1929 = vpop.f32.mrf.mxu0
        %v1930 = vadd.f32 %v1841, %v1929
        %v1931 = vpop.f32.mrf.mxu0
        %v1932 = vadd.f32 %v1843, %v1931
        %1933 = vmatmul.bf16.gmra.mxu0 %v716
        %v1934 = vpop.f32.mrf.mxu0
        %v1935 = vadd.f32 %v1846, %v1934
        %v1936 = vpop.f32.mrf.mxu0
        %v1937 = vadd.f32 %v1848, %v1936
        %1938 = vmatmul.bf16.gmra.mxu0 %v721
        %v1939 = vpop.f32.mrf.mxu0
        %v1940 = vadd.f32 %v1851, %v1939
        %v1941 = vpop.f32.mrf.mxu0
        %v1942 = vadd.f32 %v1853, %v1941
        %1943 = vmatmul.bf16.gmra.mxu0 %v726
        %v1944 = vpop.f32.mrf.mxu0
        %v1945 = vadd.f32 %v1856, %v1944
        %v1946 = vpop.f32.mrf.mxu0
        %v1947 = vadd.f32 %v1858, %v1946
        %1948 = vmatmul.bf16.gmra.mxu0 %v731
        %v1949 = vpop.f32.mrf.mxu0
        %v1950 = vadd.f32 %v1861, %v1949
        %v1951 = vpop.f32.mrf.mxu0
        %v1952 = vadd.f32 %v1863, %v1951
        %1953 = vdwg.mxu0
        %1954 = vmatpush.bf16.msra.mxu0 %v1092
        %1955 = vmatpush.bf16.msra.mxu0 %v1090
        %1956 = vmatpush.bf16.msra.mxu0 %v1088
        %1957 = vmatpush.bf16.msra.mxu0 %v1086
        %1958 = vmatpush.bf16.msra.mxu0 %v1084
        %1959 = vmatpush.bf16.msra.mxu0 %v1082
        %1960 = vmatpush.bf16.msra.mxu0 %v1080
        %1961 = vmatpush.bf16.msra.mxu0 %v1078
        %1962 = vmatmul.bf16.gmra.mxu0 %v657
        %v1963 = vpop.f32.mrf.mxu0
        %v1964 = vadd.f32 %v1875, %v1963
        %v1965 = vpop.f32.mrf.mxu0
        %v1966 = vadd.f32 %v1877, %v1965
        %1967 = vmatmul.bf16.gmra.mxu0 %v662
        %v1968 = vpop.f32.mrf.mxu0
        %v1969 = vadd.f32 %v1880, %v1968
        %v1970 = vpop.f32.mrf.mxu0
        %v1971 = vadd.f32 %v1882, %v1970
        %1972 = vmatmul.bf16.gmra.mxu0 %v667
        %v1973 = vpop.f32.mrf.mxu0
        %v1974 = vadd.f32 %v1885, %v1973
        %v1975 = vpop.f32.mrf.mxu0
        %v1976 = vadd.f32 %v1887, %v1975
        %1977 = vmatmul.bf16.gmra.mxu0 %v672
        %v1978 = vpop.f32.mrf.mxu0
        %v1979 = vadd.f32 %v1890, %v1978
        %v1980 = vpop.f32.mrf.mxu0
        %v1981 = vadd.f32 %v1892, %v1980
        %1982 = vmatmul.bf16.gmra.mxu0 %v677
        %v1983 = vpop.f32.mrf.mxu0
        %v1984 = vadd.f32 %v1895, %v1983
        %v1985 = vpop.f32.mrf.mxu0
        %v1986 = vadd.f32 %v1897, %v1985
        %1987 = vmatmul.bf16.gmra.mxu0 %v682
        %v1988 = vpop.f32.mrf.mxu0
        %v1989 = vadd.f32 %v1900, %v1988
        %v1990 = vpop.f32.mrf.mxu0
        %v1991 = vadd.f32 %v1902, %v1990
        %1992 = vmatmul.bf16.gmra.mxu0 %v687
        %v1993 = vpop.f32.mrf.mxu0
        %v1994 = vadd.f32 %v1905, %v1993
        %v1995 = vpop.f32.mrf.mxu0
        %v1996 = vadd.f32 %v1907, %v1995
        %1997 = vmatmul.bf16.gmra.mxu0 %v692
        %v1998 = vpop.f32.mrf.mxu0
        %v1999 = vadd.f32 %v1910, %v1998
        %v2000 = vpop.f32.mrf.mxu0
        %v2001 = vadd.f32 %v1912, %v2000
        %2002 = vmatmul.bf16.gmra.mxu0 %v697
        %v2003 = vpop.f32.mrf.mxu0
        %v2004 = vadd.f32 %v1915, %v2003
        %v2005 = vpop.f32.mrf.mxu0
        %v2006 = vadd.f32 %v1917, %v2005
        %2007 = vmatmul.bf16.gmra.mxu0 %v702
        %v2008 = vpop.f32.mrf.mxu0
        %v2009 = vadd.f32 %v1920, %v2008
        %v2010 = vpop.f32.mrf.mxu0
        %v2011 = vadd.f32 %v1922, %v2010
        %2012 = vmatmul.bf16.gmra.mxu0 %v707
        %v2013 = vpop.f32.mrf.mxu0
        %v2014 = vadd.f32 %v1925, %v2013
        %v2015 = vpop.f32.mrf.mxu0
        %v2016 = vadd.f32 %v1927, %v2015
        %2017 = vmatmul.bf16.gmra.mxu0 %v712
        %v2018 = vpop.f32.mrf.mxu0
        %v2019 = vadd.f32 %v1930, %v2018
        %v2020 = vpop.f32.mrf.mxu0
        %v2021 = vadd.f32 %v1932, %v2020
        %2022 = vmatmul.bf16.gmra.mxu0 %v717
        %v2023 = vpop.f32.mrf.mxu0
        %v2024 = vadd.f32 %v1935, %v2023
        %v2025 = vpop.f32.mrf.mxu0
        %v2026 = vadd.f32 %v1937, %v2025
        %2027 = vmatmul.bf16.gmra.mxu0 %v722
        %v2028 = vpop.f32.mrf.mxu0
        %v2029 = vadd.f32 %v1940, %v2028
        %v2030 = vpop.f32.mrf.mxu0
        %v2031 = vadd.f32 %v1942, %v2030
        %2032 = vmatmul.bf16.gmra.mxu0 %v727
        %v2033 = vpop.f32.mrf.mxu0
        %v2034 = vadd.f32 %v1945, %v2033
        %v2035 = vpop.f32.mrf.mxu0
        %v2036 = vadd.f32 %v1947, %v2035
        %2037 = vmatmul.bf16.gmra.mxu0 %v732
        %v2038 = vpop.f32.mrf.mxu0
        %v2039 = vadd.f32 %v1950, %v2038
        %v2040 = vpop.f32.mrf.mxu0
        %v2041 = vadd.f32 %v1952, %v2040
        %2042 = vdwg.mxu0
        %2043 = vmatpush.bf16.msra.mxu0 0
        %2044 = vmatpush.bf16.msra.mxu0 %v1240
        %2045 = vmatpush.bf16.msra.mxu0 %v1104
        %2046 = vmatpush.bf16.msra.mxu0 %v1102
        %2047 = vmatpush.bf16.msra.mxu0 %v1100
        %2048 = vmatpush.bf16.msra.mxu0 %v1098
        %2049 = vmatpush.bf16.msra.mxu0 %v1096
        %2050 = vmatpush.bf16.msra.mxu0 %v1094
        %2051 = vmatmul.bf16.gmra.mxu0 %v1185
        %v2052 = vpop.f32.mrf.mxu0
        %v2053 = vadd.f32 %v1964, %v2052
        %v2054 = vpop.f32.mrf.mxu0
        %v2055 = vadd.f32 %v1966, %v2054
        %2056 = vmatmul.bf16.gmra.mxu0 %v1188
        %v2057 = vpop.f32.mrf.mxu0
        %v2058 = vadd.f32 %v1969, %v2057
        %v2059 = vpop.f32.mrf.mxu0
        %v2060 = vadd.f32 %v1971, %v2059
        %2061 = vmatmul.bf16.gmra.mxu0 %v1191
        %v2062 = vpop.f32.mrf.mxu0
        %v2063 = vadd.f32 %v1974, %v2062
        %v2064 = vpop.f32.mrf.mxu0
        %v2065 = vadd.f32 %v1976, %v2064
        %2066 = vmatmul.bf16.gmra.mxu0 %v1194
        %v2067 = vpop.f32.mrf.mxu0
        %v2068 = vadd.f32 %v1979, %v2067
        %v2069 = vpop.f32.mrf.mxu0
        %v2070 = vadd.f32 %v1981, %v2069
        %2071 = vmatmul.bf16.gmra.mxu0 %v1197
        %v2072 = vpop.f32.mrf.mxu0
        %v2073 = vadd.f32 %v1984, %v2072
        %v2074 = vpop.f32.mrf.mxu0
        %v2075 = vadd.f32 %v1986, %v2074
        %2076 = vmatmul.bf16.gmra.mxu0 %v1200
        %v2077 = vpop.f32.mrf.mxu0
        %v2078 = vadd.f32 %v1989, %v2077
        %v2079 = vpop.f32.mrf.mxu0
        %v2080 = vadd.f32 %v1991, %v2079
        %2081 = vmatmul.bf16.gmra.mxu0 %v1203
        %v2082 = vpop.f32.mrf.mxu0
        %v2083 = vadd.f32 %v1994, %v2082
        %v2084 = vpop.f32.mrf.mxu0
        %v2085 = vadd.f32 %v1996, %v2084
        %2086 = vmatmul.bf16.gmra.mxu0 %v1206
        %v2087 = vpop.f32.mrf.mxu0
        %v2088 = vadd.f32 %v1999, %v2087
        %v2089 = vpop.f32.mrf.mxu0
        %v2090 = vadd.f32 %v2001, %v2089
        %2091 = vmatmul.bf16.gmra.mxu0 %v1209
        %v2092 = vpop.f32.mrf.mxu0
        %v2093 = vadd.f32 %v2004, %v2092
        %v2094 = vpop.f32.mrf.mxu0
        %v2095 = vadd.f32 %v2006, %v2094
        %2096 = vmatmul.bf16.gmra.mxu0 %v1212
        %v2097 = vpop.f32.mrf.mxu0
        %v2098 = vadd.f32 %v2009, %v2097
        %v2099 = vpop.f32.mrf.mxu0
        %v2100 = vadd.f32 %v2011, %v2099
        %2101 = vmatmul.bf16.gmra.mxu0 %v1215
        %v2102 = vpop.f32.mrf.mxu0
        %v2103 = vadd.f32 %v2014, %v2102
        %v2104 = vpop.f32.mrf.mxu0
        %v2105 = vadd.f32 %v2016, %v2104
        %2106 = vmatmul.bf16.gmra.mxu0 %v1218
        %v2107 = vpop.f32.mrf.mxu0
        %v2108 = vadd.f32 %v2019, %v2107
        %v2109 = vpop.f32.mrf.mxu0
        %v2110 = vadd.f32 %v2021, %v2109
        %2111 = vmatmul.bf16.gmra.mxu0 %v1221
        %v2112 = vpop.f32.mrf.mxu0
        %v2113 = vadd.f32 %v2024, %v2112
        %v2114 = vpop.f32.mrf.mxu0
        %v2115 = vadd.f32 %v2026, %v2114
        %2116 = vmatmul.bf16.gmra.mxu0 %v1224
        %v2117 = vpop.f32.mrf.mxu0
        %v2118 = vadd.f32 %v2029, %v2117
        %v2119 = vpop.f32.mrf.mxu0
        %v2120 = vadd.f32 %v2031, %v2119
        %2121 = vmatmul.bf16.gmra.mxu0 %v1227
        %v2122 = vpop.f32.mrf.mxu0
        %v2123 = vadd.f32 %v2034, %v2122
        %v2124 = vpop.f32.mrf.mxu0
        %v2125 = vadd.f32 %v2036, %v2124
        %2126 = vmatmul.bf16.gmra.mxu0 %v1230
        %v2127 = vpop.f32.mrf.mxu0
        %v2128 = vadd.f32 %v2039, %v2127
        %v2129 = vpop.f32.mrf.mxu0
        %v2130 = vadd.f32 %v2041, %v2129
        %2131 = vdwg.mxu0
        %v2132 = vxor.u32 %v1608, 2147483648
        %v2133 = vxor.u32 %v1610, 2147483648
        %v2134 = vxor.u32 %v1613, 2147483648
        %v2135 = vxor.u32 %v1615, 2147483648
        %v2136 = vxor.u32 %v1618, 2147483648
        %v2137 = vxor.u32 %v1620, 2147483648
        %v2138 = vxor.u32 %v1623, 2147483648
        %v2139 = vxor.u32 %v1625, 2147483648
        %v2140 = vxor.u32 %v1628, 2147483648
        %v2141 = vxor.u32 %v1630, 2147483648
        %v2142 = vxor.u32 %v1633, 2147483648
        %v2143 = vxor.u32 %v1635, 2147483648
        %v2144 = vxor.u32 %v1638, 2147483648
        %v2145 = vxor.u32 %v1640, 2147483648
        %v2146 = vxor.u32 %v1643, 2147483648
        %v2147 = vxor.u32 %v1645, 2147483648
        %v2148 = vxor.u32 %v1648, 2147483648
        %v2149 = vxor.u32 %v1650, 2147483648
        %v2150 = vxor.u32 %v1653, 2147483648
        %v2151 = vxor.u32 %v1655, 2147483648
        %v2152 = vxor.u32 %v1658, 2147483648
        %v2153 = vxor.u32 %v1660, 2147483648
        %v2154 = vxor.u32 %v1663, 2147483648
        %v2155 = vxor.u32 %v1665, 2147483648
        %v2156 = vxor.u32 %v1668, 2147483648
        %v2157 = vxor.u32 %v1670, 2147483648
        %v2158 = vxor.u32 %v1673, 2147483648
        %v2159 = vxor.u32 %v1675, 2147483648
        %v2160 = vxor.u32 %v1678, 2147483648
        %v2161 = vxor.u32 %v1680, 2147483648
        %v2162 = vxor.u32 %v1683, 2147483648
        %v2163 = vxor.u32 %v1685, 2147483648
        %v2164 = vmul.f32 %v2132, 1.442695
        %v2165 = vpow.pop %v2164
        %v2166 = vmul.f32 %v2133, 1.442695
        %v2167 = vpow.pop %v2166
        %v2168 = vmul.f32 %v2134, 1.442695
        %v2169 = vpow.pop %v2168
        %v2170 = vmul.f32 %v2135, 1.442695
        %v2171 = vpow.pop %v2170
        %v2172 = vmul.f32 %v2136, 1.442695
        %v2173 = vpow.pop %v2172
        %v2174 = vmul.f32 %v2137, 1.442695
        %v2175 = vpow.pop %v2174
        %v2176 = vmul.f32 %v2138, 1.442695
        %v2177 = vpow.pop %v2176
        %v2178 = vmul.f32 %v2139, 1.442695
        %v2179 = vpow.pop %v2178
        %v2180 = vmul.f32 %v2140, 1.442695
        %v2181 = vpow.pop %v2180
        %v2182 = vmul.f32 %v2141, 1.442695
        %v2183 = vpow.pop %v2182
        %v2184 = vmul.f32 %v2142, 1.442695
        %v2185 = vpow.pop %v2184
        %v2186 = vmul.f32 %v2143, 1.442695
        %v2187 = vpow.pop %v2186
        %v2188 = vmul.f32 %v2144, 1.442695
        %v2189 = vpow.pop %v2188
        %v2190 = vmul.f32 %v2145, 1.442695
        %v2191 = vpow.pop %v2190
        %v2192 = vmul.f32 %v2146, 1.442695
        %v2193 = vpow.pop %v2192
        %v2194 = vmul.f32 %v2147, 1.442695
        %v2195 = vpow.pop %v2194
        %v2196 = vmul.f32 %v2148, 1.442695
        %v2197 = vpow.pop %v2196
        %v2198 = vmul.f32 %v2149, 1.442695
        %v2199 = vpow.pop %v2198
        %v2200 = vmul.f32 %v2150, 1.442695
        %v2201 = vpow.pop %v2200
        %v2202 = vmul.f32 %v2151, 1.442695
        %v2203 = vpow.pop %v2202
        %v2204 = vmul.f32 %v2152, 1.442695
        %v2205 = vpow.pop %v2204
        %v2206 = vmul.f32 %v2153, 1.442695
        %v2207 = vpow.pop %v2206
        %v2208 = vmul.f32 %v2154, 1.442695
        %v2209 = vpow.pop %v2208
        %v2210 = vmul.f32 %v2155, 1.442695
        %v2211 = vpow.pop %v2210
        %v2212 = vmul.f32 %v2156, 1.442695
        %v2213 = vpow.pop %v2212
        %v2214 = vmul.f32 %v2157, 1.442695
        %v2215 = vpow.pop %v2214
        %v2216 = vmul.f32 %v2158, 1.442695
        %v2217 = vpow.pop %v2216
        %v2218 = vmul.f32 %v2159, 1.442695
        %v2219 = vpow.pop %v2218
        %v2220 = vmul.f32 %v2160, 1.442695
        %v2221 = vpow.pop %v2220
        %v2222 = vmul.f32 %v2161, 1.442695
        %v2223 = vpow.pop %v2222
        %v2224 = vmul.f32 %v2162, 1.442695
        %v2225 = vpow.pop %v2224
        %v2226 = vmul.f32 %v2163, 1.442695
        %v2227 = vpow.pop %v2226
        %v2228 = vadd.f32 %v2165, 1.0
        %v2229 = vadd.f32 %v2167, 1.0
        %v2230 = vadd.f32 %v2169, 1.0
        %v2231 = vadd.f32 %v2171, 1.0
        %v2232 = vadd.f32 %v2173, 1.0
        %v2233 = vadd.f32 %v2175, 1.0
        %v2234 = vadd.f32 %v2177, 1.0
        %v2235 = vadd.f32 %v2179, 1.0
        %v2236 = vadd.f32 %v2181, 1.0
        %v2237 = vadd.f32 %v2183, 1.0
        %v2238 = vadd.f32 %v2185, 1.0
        %v2239 = vadd.f32 %v2187, 1.0
        %v2240 = vadd.f32 %v2189, 1.0
        %v2241 = vadd.f32 %v2191, 1.0
        %v2242 = vadd.f32 %v2193, 1.0
        %v2243 = vadd.f32 %v2195, 1.0
        %v2244 = vadd.f32 %v2197, 1.0
        %v2245 = vadd.f32 %v2199, 1.0
        %v2246 = vadd.f32 %v2201, 1.0
        %v2247 = vadd.f32 %v2203, 1.0
        %v2248 = vadd.f32 %v2205, 1.0
        %v2249 = vadd.f32 %v2207, 1.0
        %v2250 = vadd.f32 %v2209, 1.0
        %v2251 = vadd.f32 %v2211, 1.0
        %v2252 = vadd.f32 %v2213, 1.0
        %v2253 = vadd.f32 %v2215, 1.0
        %v2254 = vadd.f32 %v2217, 1.0
        %v2255 = vadd.f32 %v2219, 1.0
        %v2256 = vadd.f32 %v2221, 1.0
        %v2257 = vadd.f32 %v2223, 1.0
        %v2258 = vadd.f32 %v2225, 1.0
        %v2259 = vadd.f32 %v2227, 1.0
        %v2260 = vrcp.pop %v2228
        %v2261 = vmul.f32 %v2228, %v2260
        %v2262 = vsub.f32 1.0, %v2261
        %v2263 = vmul.f32 %v2260, %v2262
        %v2264 = vadd.f32 %v2260, %v2263
        %vm2265 = vweird.f32 %v2228
        %vm2266 = vweird.f32 %v2260
        %vm2267 = vmor %vm2265, %vm2266
        %v2268 = vsel %vm2267, %v2260, %v2264
        %v2269 = vand.u32 2147483647, %v2228
        %vm2270 = vcmp.eq.f32.partialorder %v2269, 8.507059e+37
        %v2271 = vand.u32 %v2228, 2147483648
        %v2272 = vor.u32 1.1754944e-38, %v2271
        %v2273 = vsel %vm2270, %v2272, %v2268
        %v2274 = vmul.f32 1.0, %v2273
        %v2275 = vrcp.pop %v2229
        %v2276 = vmul.f32 %v2229, %v2275
        %v2277 = vsub.f32 1.0, %v2276
        %v2278 = vmul.f32 %v2275, %v2277
        %v2279 = vadd.f32 %v2275, %v2278
        %vm2280 = vweird.f32 %v2229
        %vm2281 = vweird.f32 %v2275
        %vm2282 = vmor %vm2280, %vm2281
        %v2283 = vsel %vm2282, %v2275, %v2279
        %v2284 = vand.u32 2147483647, %v2229
        %vm2285 = vcmp.eq.f32.partialorder %v2284, 8.507059e+37
        %v2286 = vand.u32 %v2229, 2147483648
        %v2287 = vor.u32 1.1754944e-38, %v2286
        %v2288 = vsel %vm2285, %v2287, %v2283
        %v2289 = vmul.f32 1.0, %v2288
        %v2290 = vrcp.pop %v2230
        %v2291 = vmul.f32 %v2230, %v2290
        %v2292 = vsub.f32 1.0, %v2291
        %v2293 = vmul.f32 %v2290, %v2292
        %v2294 = vadd.f32 %v2290, %v2293
        %vm2295 = vweird.f32 %v2230
        %vm2296 = vweird.f32 %v2290
        %vm2297 = vmor %vm2295, %vm2296
        %v2298 = vsel %vm2297, %v2290, %v2294
        %v2299 = vand.u32 2147483647, %v2230
        %vm2300 = vcmp.eq.f32.partialorder %v2299, 8.507059e+37
        %v2301 = vand.u32 %v2230, 2147483648
        %v2302 = vor.u32 1.1754944e-38, %v2301
        %v2303 = vsel %vm2300, %v2302, %v2298
        %v2304 = vmul.f32 1.0, %v2303
        %v2305 = vrcp.pop %v2231
        %v2306 = vmul.f32 %v2231, %v2305
        %v2307 = vsub.f32 1.0, %v2306
        %v2308 = vmul.f32 %v2305, %v2307
        %v2309 = vadd.f32 %v2305, %v2308
        %vm2310 = vweird.f32 %v2231
        %vm2311 = vweird.f32 %v2305
        %vm2312 = vmor %vm2310, %vm2311
        %v2313 = vsel %vm2312, %v2305, %v2309
        %v2314 = vand.u32 2147483647, %v2231
        %vm2315 = vcmp.eq.f32.partialorder %v2314, 8.507059e+37
        %v2316 = vand.u32 %v2231, 2147483648
        %v2317 = vor.u32 1.1754944e-38, %v2316
        %v2318 = vsel %vm2315, %v2317, %v2313
        %v2319 = vmul.f32 1.0, %v2318
        %v2320 = vrcp.pop %v2232
        %v2321 = vmul.f32 %v2232, %v2320
        %v2322 = vsub.f32 1.0, %v2321
        %v2323 = vmul.f32 %v2320, %v2322
        %v2324 = vadd.f32 %v2320, %v2323
        %vm2325 = vweird.f32 %v2232
        %vm2326 = vweird.f32 %v2320
        %vm2327 = vmor %vm2325, %vm2326
        %v2328 = vsel %vm2327, %v2320, %v2324
        %v2329 = vand.u32 2147483647, %v2232
        %vm2330 = vcmp.eq.f32.partialorder %v2329, 8.507059e+37
        %v2331 = vand.u32 %v2232, 2147483648
        %v2332 = vor.u32 1.1754944e-38, %v2331
        %v2333 = vsel %vm2330, %v2332, %v2328
        %v2334 = vmul.f32 1.0, %v2333
        %v2335 = vrcp.pop %v2233
        %v2336 = vmul.f32 %v2233, %v2335
        %v2337 = vsub.f32 1.0, %v2336
        %v2338 = vmul.f32 %v2335, %v2337
        %v2339 = vadd.f32 %v2335, %v2338
        %vm2340 = vweird.f32 %v2233
        %vm2341 = vweird.f32 %v2335
        %vm2342 = vmor %vm2340, %vm2341
        %v2343 = vsel %vm2342, %v2335, %v2339
        %v2344 = vand.u32 2147483647, %v2233
        %vm2345 = vcmp.eq.f32.partialorder %v2344, 8.507059e+37
        %v2346 = vand.u32 %v2233, 2147483648
        %v2347 = vor.u32 1.1754944e-38, %v2346
        %v2348 = vsel %vm2345, %v2347, %v2343
        %v2349 = vmul.f32 1.0, %v2348
        %v2350 = vrcp.pop %v2234
        %v2351 = vmul.f32 %v2234, %v2350
        %v2352 = vsub.f32 1.0, %v2351
        %v2353 = vmul.f32 %v2350, %v2352
        %v2354 = vadd.f32 %v2350, %v2353
        %vm2355 = vweird.f32 %v2234
        %vm2356 = vweird.f32 %v2350
        %vm2357 = vmor %vm2355, %vm2356
        %v2358 = vsel %vm2357, %v2350, %v2354
        %v2359 = vand.u32 2147483647, %v2234
        %vm2360 = vcmp.eq.f32.partialorder %v2359, 8.507059e+37
        %v2361 = vand.u32 %v2234, 2147483648
        %v2362 = vor.u32 1.1754944e-38, %v2361
        %v2363 = vsel %vm2360, %v2362, %v2358
        %v2364 = vmul.f32 1.0, %v2363
        %v2365 = vrcp.pop %v2235
        %v2366 = vmul.f32 %v2235, %v2365
        %v2367 = vsub.f32 1.0, %v2366
        %v2368 = vmul.f32 %v2365, %v2367
        %v2369 = vadd.f32 %v2365, %v2368
        %vm2370 = vweird.f32 %v2235
        %vm2371 = vweird.f32 %v2365
        %vm2372 = vmor %vm2370, %vm2371
        %v2373 = vsel %vm2372, %v2365, %v2369
        %v2374 = vand.u32 2147483647, %v2235
        %vm2375 = vcmp.eq.f32.partialorder %v2374, 8.507059e+37
        %v2376 = vand.u32 %v2235, 2147483648
        %v2377 = vor.u32 1.1754944e-38, %v2376
        %v2378 = vsel %vm2375, %v2377, %v2373
        %v2379 = vmul.f32 1.0, %v2378
        %v2380 = vrcp.pop %v2236
        %v2381 = vmul.f32 %v2236, %v2380
        %v2382 = vsub.f32 1.0, %v2381
        %v2383 = vmul.f32 %v2380, %v2382
        %v2384 = vadd.f32 %v2380, %v2383
        %vm2385 = vweird.f32 %v2236
        %vm2386 = vweird.f32 %v2380
        %vm2387 = vmor %vm2385, %vm2386
        %v2388 = vsel %vm2387, %v2380, %v2384
        %v2389 = vand.u32 2147483647, %v2236
        %vm2390 = vcmp.eq.f32.partialorder %v2389, 8.507059e+37
        %v2391 = vand.u32 %v2236, 2147483648
        %v2392 = vor.u32 1.1754944e-38, %v2391
        %v2393 = vsel %vm2390, %v2392, %v2388
        %v2394 = vmul.f32 1.0, %v2393
        %v2395 = vrcp.pop %v2237
        %v2396 = vmul.f32 %v2237, %v2395
        %v2397 = vsub.f32 1.0, %v2396
        %v2398 = vmul.f32 %v2395, %v2397
        %v2399 = vadd.f32 %v2395, %v2398
        %vm2400 = vweird.f32 %v2237
        %vm2401 = vweird.f32 %v2395
        %vm2402 = vmor %vm2400, %vm2401
        %v2403 = vsel %vm2402, %v2395, %v2399
        %v2404 = vand.u32 2147483647, %v2237
        %vm2405 = vcmp.eq.f32.partialorder %v2404, 8.507059e+37
        %v2406 = vand.u32 %v2237, 2147483648
        %v2407 = vor.u32 1.1754944e-38, %v2406
        %v2408 = vsel %vm2405, %v2407, %v2403
        %v2409 = vmul.f32 1.0, %v2408
        %v2410 = vrcp.pop %v2238
        %v2411 = vmul.f32 %v2238, %v2410
        %v2412 = vsub.f32 1.0, %v2411
        %v2413 = vmul.f32 %v2410, %v2412
        %v2414 = vadd.f32 %v2410, %v2413
        %vm2415 = vweird.f32 %v2238
        %vm2416 = vweird.f32 %v2410
        %vm2417 = vmor %vm2415, %vm2416
        %v2418 = vsel %vm2417, %v2410, %v2414
        %v2419 = vand.u32 2147483647, %v2238
        %vm2420 = vcmp.eq.f32.partialorder %v2419, 8.507059e+37
        %v2421 = vand.u32 %v2238, 2147483648
        %v2422 = vor.u32 1.1754944e-38, %v2421
        %v2423 = vsel %vm2420, %v2422, %v2418
        %v2424 = vmul.f32 1.0, %v2423
        %v2425 = vrcp.pop %v2239
        %v2426 = vmul.f32 %v2239, %v2425
        %v2427 = vsub.f32 1.0, %v2426
        %v2428 = vmul.f32 %v2425, %v2427
        %v2429 = vadd.f32 %v2425, %v2428
        %vm2430 = vweird.f32 %v2239
        %vm2431 = vweird.f32 %v2425
        %vm2432 = vmor %vm2430, %vm2431
        %v2433 = vsel %vm2432, %v2425, %v2429
        %v2434 = vand.u32 2147483647, %v2239
        %vm2435 = vcmp.eq.f32.partialorder %v2434, 8.507059e+37
        %v2436 = vand.u32 %v2239, 2147483648
        %v2437 = vor.u32 1.1754944e-38, %v2436
        %v2438 = vsel %vm2435, %v2437, %v2433
        %v2439 = vmul.f32 1.0, %v2438
        %v2440 = vrcp.pop %v2240
        %v2441 = vmul.f32 %v2240, %v2440
        %v2442 = vsub.f32 1.0, %v2441
        %v2443 = vmul.f32 %v2440, %v2442
        %v2444 = vadd.f32 %v2440, %v2443
        %vm2445 = vweird.f32 %v2240
        %vm2446 = vweird.f32 %v2440
        %vm2447 = vmor %vm2445, %vm2446
        %v2448 = vsel %vm2447, %v2440, %v2444
        %v2449 = vand.u32 2147483647, %v2240
        %vm2450 = vcmp.eq.f32.partialorder %v2449, 8.507059e+37
        %v2451 = vand.u32 %v2240, 2147483648
        %v2452 = vor.u32 1.1754944e-38, %v2451
        %v2453 = vsel %vm2450, %v2452, %v2448
        %v2454 = vmul.f32 1.0, %v2453
        %v2455 = vrcp.pop %v2241
        %v2456 = vmul.f32 %v2241, %v2455
        %v2457 = vsub.f32 1.0, %v2456
        %v2458 = vmul.f32 %v2455, %v2457
        %v2459 = vadd.f32 %v2455, %v2458
        %vm2460 = vweird.f32 %v2241
        %vm2461 = vweird.f32 %v2455
        %vm2462 = vmor %vm2460, %vm2461
        %v2463 = vsel %vm2462, %v2455, %v2459
        %v2464 = vand.u32 2147483647, %v2241
        %vm2465 = vcmp.eq.f32.partialorder %v2464, 8.507059e+37
        %v2466 = vand.u32 %v2241, 2147483648
        %v2467 = vor.u32 1.1754944e-38, %v2466
        %v2468 = vsel %vm2465, %v2467, %v2463
        %v2469 = vmul.f32 1.0, %v2468
        %v2470 = vrcp.pop %v2242
        %v2471 = vmul.f32 %v2242, %v2470
        %v2472 = vsub.f32 1.0, %v2471
        %v2473 = vmul.f32 %v2470, %v2472
        %v2474 = vadd.f32 %v2470, %v2473
        %vm2475 = vweird.f32 %v2242
        %vm2476 = vweird.f32 %v2470
        %vm2477 = vmor %vm2475, %vm2476
        %v2478 = vsel %vm2477, %v2470, %v2474
        %v2479 = vand.u32 2147483647, %v2242
        %vm2480 = vcmp.eq.f32.partialorder %v2479, 8.507059e+37
        %v2481 = vand.u32 %v2242, 2147483648
        %v2482 = vor.u32 1.1754944e-38, %v2481
        %v2483 = vsel %vm2480, %v2482, %v2478
        %v2484 = vmul.f32 1.0, %v2483
        %v2485 = vrcp.pop %v2243
        %v2486 = vmul.f32 %v2243, %v2485
        %v2487 = vsub.f32 1.0, %v2486
        %v2488 = vmul.f32 %v2485, %v2487
        %v2489 = vadd.f32 %v2485, %v2488
        %vm2490 = vweird.f32 %v2243
        %vm2491 = vweird.f32 %v2485
        %vm2492 = vmor %vm2490, %vm2491
        %v2493 = vsel %vm2492, %v2485, %v2489
        %v2494 = vand.u32 2147483647, %v2243
        %vm2495 = vcmp.eq.f32.partialorder %v2494, 8.507059e+37
        %v2496 = vand.u32 %v2243, 2147483648
        %v2497 = vor.u32 1.1754944e-38, %v2496
        %v2498 = vsel %vm2495, %v2497, %v2493
        %v2499 = vmul.f32 1.0, %v2498
        %v2500 = vrcp.pop %v2244
        %v2501 = vmul.f32 %v2244, %v2500
        %v2502 = vsub.f32 1.0, %v2501
        %v2503 = vmul.f32 %v2500, %v2502
        %v2504 = vadd.f32 %v2500, %v2503
        %vm2505 = vweird.f32 %v2244
        %vm2506 = vweird.f32 %v2500
        %vm2507 = vmor %vm2505, %vm2506
        %v2508 = vsel %vm2507, %v2500, %v2504
        %v2509 = vand.u32 2147483647, %v2244
        %vm2510 = vcmp.eq.f32.partialorder %v2509, 8.507059e+37
        %v2511 = vand.u32 %v2244, 2147483648
        %v2512 = vor.u32 1.1754944e-38, %v2511
        %v2513 = vsel %vm2510, %v2512, %v2508
        %v2514 = vmul.f32 1.0, %v2513
        %v2515 = vrcp.pop %v2245
        %v2516 = vmul.f32 %v2245, %v2515
        %v2517 = vsub.f32 1.0, %v2516
        %v2518 = vmul.f32 %v2515, %v2517
        %v2519 = vadd.f32 %v2515, %v2518
        %vm2520 = vweird.f32 %v2245
        %vm2521 = vweird.f32 %v2515
        %vm2522 = vmor %vm2520, %vm2521
        %v2523 = vsel %vm2522, %v2515, %v2519
        %v2524 = vand.u32 2147483647, %v2245
        %vm2525 = vcmp.eq.f32.partialorder %v2524, 8.507059e+37
        %v2526 = vand.u32 %v2245, 2147483648
        %v2527 = vor.u32 1.1754944e-38, %v2526
        %v2528 = vsel %vm2525, %v2527, %v2523
        %v2529 = vmul.f32 1.0, %v2528
        %v2530 = vrcp.pop %v2246
        %v2531 = vmul.f32 %v2246, %v2530
        %v2532 = vsub.f32 1.0, %v2531
        %v2533 = vmul.f32 %v2530, %v2532
        %v2534 = vadd.f32 %v2530, %v2533
        %vm2535 = vweird.f32 %v2246
        %vm2536 = vweird.f32 %v2530
        %vm2537 = vmor %vm2535, %vm2536
        %v2538 = vsel %vm2537, %v2530, %v2534
        %v2539 = vand.u32 2147483647, %v2246
        %vm2540 = vcmp.eq.f32.partialorder %v2539, 8.507059e+37
        %v2541 = vand.u32 %v2246, 2147483648
        %v2542 = vor.u32 1.1754944e-38, %v2541
        %v2543 = vsel %vm2540, %v2542, %v2538
        %v2544 = vmul.f32 1.0, %v2543
        %v2545 = vrcp.pop %v2247
        %v2546 = vmul.f32 %v2247, %v2545
        %v2547 = vsub.f32 1.0, %v2546
        %v2548 = vmul.f32 %v2545, %v2547
        %v2549 = vadd.f32 %v2545, %v2548
        %vm2550 = vweird.f32 %v2247
        %vm2551 = vweird.f32 %v2545
        %vm2552 = vmor %vm2550, %vm2551
        %v2553 = vsel %vm2552, %v2545, %v2549
        %v2554 = vand.u32 2147483647, %v2247
        %vm2555 = vcmp.eq.f32.partialorder %v2554, 8.507059e+37
        %v2556 = vand.u32 %v2247, 2147483648
        %v2557 = vor.u32 1.1754944e-38, %v2556
        %v2558 = vsel %vm2555, %v2557, %v2553
        %v2559 = vmul.f32 1.0, %v2558
        %v2560 = vrcp.pop %v2248
        %v2561 = vmul.f32 %v2248, %v2560
        %v2562 = vsub.f32 1.0, %v2561
        %v2563 = vmul.f32 %v2560, %v2562
        %v2564 = vadd.f32 %v2560, %v2563
        %vm2565 = vweird.f32 %v2248
        %vm2566 = vweird.f32 %v2560
        %vm2567 = vmor %vm2565, %vm2566
        %v2568 = vsel %vm2567, %v2560, %v2564
        %v2569 = vand.u32 2147483647, %v2248
        %vm2570 = vcmp.eq.f32.partialorder %v2569, 8.507059e+37
        %v2571 = vand.u32 %v2248, 2147483648
        %v2572 = vor.u32 1.1754944e-38, %v2571
        %v2573 = vsel %vm2570, %v2572, %v2568
        %v2574 = vmul.f32 1.0, %v2573
        %v2575 = vrcp.pop %v2249
        %v2576 = vmul.f32 %v2249, %v2575
        %v2577 = vsub.f32 1.0, %v2576
        %v2578 = vmul.f32 %v2575, %v2577
        %v2579 = vadd.f32 %v2575, %v2578
        %vm2580 = vweird.f32 %v2249
        %vm2581 = vweird.f32 %v2575
        %vm2582 = vmor %vm2580, %vm2581
        %v2583 = vsel %vm2582, %v2575, %v2579
        %v2584 = vand.u32 2147483647, %v2249
        %vm2585 = vcmp.eq.f32.partialorder %v2584, 8.507059e+37
        %v2586 = vand.u32 %v2249, 2147483648
        %v2587 = vor.u32 1.1754944e-38, %v2586
        %v2588 = vsel %vm2585, %v2587, %v2583
        %v2589 = vmul.f32 1.0, %v2588
        %v2590 = vrcp.pop %v2250
        %v2591 = vmul.f32 %v2250, %v2590
        %v2592 = vsub.f32 1.0, %v2591
        %v2593 = vmul.f32 %v2590, %v2592
        %v2594 = vadd.f32 %v2590, %v2593
        %vm2595 = vweird.f32 %v2250
        %vm2596 = vweird.f32 %v2590
        %vm2597 = vmor %vm2595, %vm2596
        %v2598 = vsel %vm2597, %v2590, %v2594
        %v2599 = vand.u32 2147483647, %v2250
        %vm2600 = vcmp.eq.f32.partialorder %v2599, 8.507059e+37
        %v2601 = vand.u32 %v2250, 2147483648
        %v2602 = vor.u32 1.1754944e-38, %v2601
        %v2603 = vsel %vm2600, %v2602, %v2598
        %v2604 = vmul.f32 1.0, %v2603
        %v2605 = vrcp.pop %v2251
        %v2606 = vmul.f32 %v2251, %v2605
        %v2607 = vsub.f32 1.0, %v2606
        %v2608 = vmul.f32 %v2605, %v2607
        %v2609 = vadd.f32 %v2605, %v2608
        %vm2610 = vweird.f32 %v2251
        %vm2611 = vweird.f32 %v2605
        %vm2612 = vmor %vm2610, %vm2611
        %v2613 = vsel %vm2612, %v2605, %v2609
        %v2614 = vand.u32 2147483647, %v2251
        %vm2615 = vcmp.eq.f32.partialorder %v2614, 8.507059e+37
        %v2616 = vand.u32 %v2251, 2147483648
        %v2617 = vor.u32 1.1754944e-38, %v2616
        %v2618 = vsel %vm2615, %v2617, %v2613
        %v2619 = vmul.f32 1.0, %v2618
        %v2620 = vrcp.pop %v2252
        %v2621 = vmul.f32 %v2252, %v2620
        %v2622 = vsub.f32 1.0, %v2621
        %v2623 = vmul.f32 %v2620, %v2622
        %v2624 = vadd.f32 %v2620, %v2623
        %vm2625 = vweird.f32 %v2252
        %vm2626 = vweird.f32 %v2620
        %vm2627 = vmor %vm2625, %vm2626
        %v2628 = vsel %vm2627, %v2620, %v2624
        %v2629 = vand.u32 2147483647, %v2252
        %vm2630 = vcmp.eq.f32.partialorder %v2629, 8.507059e+37
        %v2631 = vand.u32 %v2252, 2147483648
        %v2632 = vor.u32 1.1754944e-38, %v2631
        %v2633 = vsel %vm2630, %v2632, %v2628
        %v2634 = vmul.f32 1.0, %v2633
        %v2635 = vrcp.pop %v2253
        %v2636 = vmul.f32 %v2253, %v2635
        %v2637 = vsub.f32 1.0, %v2636
        %v2638 = vmul.f32 %v2635, %v2637
        %v2639 = vadd.f32 %v2635, %v2638
        %vm2640 = vweird.f32 %v2253
        %vm2641 = vweird.f32 %v2635
        %vm2642 = vmor %vm2640, %vm2641
        %v2643 = vsel %vm2642, %v2635, %v2639
        %v2644 = vand.u32 2147483647, %v2253
        %vm2645 = vcmp.eq.f32.partialorder %v2644, 8.507059e+37
        %v2646 = vand.u32 %v2253, 2147483648
        %v2647 = vor.u32 1.1754944e-38, %v2646
        %v2648 = vsel %vm2645, %v2647, %v2643
        %v2649 = vmul.f32 1.0, %v2648
        %v2650 = vrcp.pop %v2254
        %v2651 = vmul.f32 %v2254, %v2650
        %v2652 = vsub.f32 1.0, %v2651
        %v2653 = vmul.f32 %v2650, %v2652
        %v2654 = vadd.f32 %v2650, %v2653
        %vm2655 = vweird.f32 %v2254
        %vm2656 = vweird.f32 %v2650
        %vm2657 = vmor %vm2655, %vm2656
        %v2658 = vsel %vm2657, %v2650, %v2654
        %v2659 = vand.u32 2147483647, %v2254
        %vm2660 = vcmp.eq.f32.partialorder %v2659, 8.507059e+37
        %v2661 = vand.u32 %v2254, 2147483648
        %v2662 = vor.u32 1.1754944e-38, %v2661
        %v2663 = vsel %vm2660, %v2662, %v2658
        %v2664 = vmul.f32 1.0, %v2663
        %v2665 = vrcp.pop %v2255
        %v2666 = vmul.f32 %v2255, %v2665
        %v2667 = vsub.f32 1.0, %v2666
        %v2668 = vmul.f32 %v2665, %v2667
        %v2669 = vadd.f32 %v2665, %v2668
        %vm2670 = vweird.f32 %v2255
        %vm2671 = vweird.f32 %v2665
        %vm2672 = vmor %vm2670, %vm2671
        %v2673 = vsel %vm2672, %v2665, %v2669
        %v2674 = vand.u32 2147483647, %v2255
        %vm2675 = vcmp.eq.f32.partialorder %v2674, 8.507059e+37
        %v2676 = vand.u32 %v2255, 2147483648
        %v2677 = vor.u32 1.1754944e-38, %v2676
        %v2678 = vsel %vm2675, %v2677, %v2673
        %v2679 = vmul.f32 1.0, %v2678
        %v2680 = vrcp.pop %v2256
        %v2681 = vmul.f32 %v2256, %v2680
        %v2682 = vsub.f32 1.0, %v2681
        %v2683 = vmul.f32 %v2680, %v2682
        %v2684 = vadd.f32 %v2680, %v2683
        %vm2685 = vweird.f32 %v2256
        %vm2686 = vweird.f32 %v2680
        %vm2687 = vmor %vm2685, %vm2686
        %v2688 = vsel %vm2687, %v2680, %v2684
        %v2689 = vand.u32 2147483647, %v2256
        %vm2690 = vcmp.eq.f32.partialorder %v2689, 8.507059e+37
        %v2691 = vand.u32 %v2256, 2147483648
        %v2692 = vor.u32 1.1754944e-38, %v2691
        %v2693 = vsel %vm2690, %v2692, %v2688
        %v2694 = vmul.f32 1.0, %v2693
        %v2695 = vrcp.pop %v2257
        %v2696 = vmul.f32 %v2257, %v2695
        %v2697 = vsub.f32 1.0, %v2696
        %v2698 = vmul.f32 %v2695, %v2697
        %v2699 = vadd.f32 %v2695, %v2698
        %vm2700 = vweird.f32 %v2257
        %vm2701 = vweird.f32 %v2695
        %vm2702 = vmor %vm2700, %vm2701
        %v2703 = vsel %vm2702, %v2695, %v2699
        %v2704 = vand.u32 2147483647, %v2257
        %vm2705 = vcmp.eq.f32.partialorder %v2704, 8.507059e+37
        %v2706 = vand.u32 %v2257, 2147483648
        %v2707 = vor.u32 1.1754944e-38, %v2706
        %v2708 = vsel %vm2705, %v2707, %v2703
        %v2709 = vmul.f32 1.0, %v2708
        %v2710 = vrcp.pop %v2258
        %v2711 = vmul.f32 %v2258, %v2710
        %v2712 = vsub.f32 1.0, %v2711
        %v2713 = vmul.f32 %v2710, %v2712
        %v2714 = vadd.f32 %v2710, %v2713
        %vm2715 = vweird.f32 %v2258
        %vm2716 = vweird.f32 %v2710
        %vm2717 = vmor %vm2715, %vm2716
        %v2718 = vsel %vm2717, %v2710, %v2714
        %v2719 = vand.u32 2147483647, %v2258
        %vm2720 = vcmp.eq.f32.partialorder %v2719, 8.507059e+37
        %v2721 = vand.u32 %v2258, 2147483648
        %v2722 = vor.u32 1.1754944e-38, %v2721
        %v2723 = vsel %vm2720, %v2722, %v2718
        %v2724 = vmul.f32 1.0, %v2723
        %v2725 = vrcp.pop %v2259
        %v2726 = vmul.f32 %v2259, %v2725
        %v2727 = vsub.f32 1.0, %v2726
        %v2728 = vmul.f32 %v2725, %v2727
        %v2729 = vadd.f32 %v2725, %v2728
        %vm2730 = vweird.f32 %v2259
        %vm2731 = vweird.f32 %v2725
        %vm2732 = vmor %vm2730, %vm2731
        %v2733 = vsel %vm2732, %v2725, %v2729
        %v2734 = vand.u32 2147483647, %v2259
        %vm2735 = vcmp.eq.f32.partialorder %v2734, 8.507059e+37
        %v2736 = vand.u32 %v2259, 2147483648
        %v2737 = vor.u32 1.1754944e-38, %v2736
        %v2738 = vsel %vm2735, %v2737, %v2733
        %v2739 = vmul.f32 1.0, %v2738
        %v2740 = vtanh.pop %v2053
        %v2741 = vtanh.pop %v2055
        %v2742 = vtanh.pop %v2058
        %v2743 = vtanh.pop %v2060
        %v2744 = vtanh.pop %v2063
        %v2745 = vtanh.pop %v2065
        %v2746 = vtanh.pop %v2068
        %v2747 = vtanh.pop %v2070
        %v2748 = vtanh.pop %v2073
        %v2749 = vtanh.pop %v2075
        %v2750 = vtanh.pop %v2078
        %v2751 = vtanh.pop %v2080
        %v2752 = vtanh.pop %v2083
        %v2753 = vtanh.pop %v2085
        %v2754 = vtanh.pop %v2088
        %v2755 = vtanh.pop %v2090
        %v2756 = vtanh.pop %v2093
        %v2757 = vtanh.pop %v2095
        %v2758 = vtanh.pop %v2098
        %v2759 = vtanh.pop %v2100
        %v2760 = vtanh.pop %v2103
        %v2761 = vtanh.pop %v2105
        %v2762 = vtanh.pop %v2108
        %v2763 = vtanh.pop %v2110
        %v2764 = vtanh.pop %v2113
        %v2765 = vtanh.pop %v2115
        %v2766 = vtanh.pop %v2118
        %v2767 = vtanh.pop %v2120
        %v2768 = vtanh.pop %v2123
        %v2769 = vtanh.pop %v2125
        %v2770 = vtanh.pop %v2128
        %v2771 = vtanh.pop %v2130
        %v2772 = vld [vmem:[%s221] sm:$0xff]
        %v2773 = vld [vmem:[%s221 + $0x8] sm:$0xff]
        %v2774 = vld [vmem:[%s221 + $0x10] sm:$0xff]
        %v2775 = vld [vmem:[%s221 + $0x18] sm:$0xff]
        %v2776 = vld [vmem:[%s221 + $0x20] sm:$0xff]
        %v2777 = vld [vmem:[%s221 + $0x28] sm:$0xff]
        %v2778 = vld [vmem:[%s221 + $0x30] sm:$0xff]
        %v2779 = vld [vmem:[%s221 + $0x38] sm:$0xff]
        %v2780 = vld [vmem:[%s221 + $0x40] sm:$0xff]
        %v2781 = vld [vmem:[%s221 + $0x48] sm:$0xff]
        %v2782 = vld [vmem:[%s221 + $0x50] sm:$0xff]
        %v2783 = vld [vmem:[%s221 + $0x58] sm:$0xff]
        %v2784 = vld [vmem:[%s221 + $0x60] sm:$0xff]
        %v2785 = vld [vmem:[%s221 + $0x68] sm:$0xff]
        %v2786 = vld [vmem:[%s221 + $0x70] sm:$0xff]
        %v2787 = vld [vmem:[%s221 + $0x78] sm:$0xff]
        %v2788 = vld [vmem:[%s221 + $0x80] sm:$0xff]
        %v2789 = vld [vmem:[%s221 + $0x88] sm:$0xff]
        %v2790 = vld [vmem:[%s221 + $0x90] sm:$0xff]
        %v2791 = vld [vmem:[%s221 + $0x98] sm:$0xff]
        %v2792 = vld [vmem:[%s221 + $0xa0] sm:$0xff]
        %v2793 = vld [vmem:[%s221 + $0xa8] sm:$0xff]
        %v2794 = vld [vmem:[%s221 + $0xb0] sm:$0xff]
        %v2795 = vld [vmem:[%s221 + $0xb8] sm:$0xff]
        %v2796 = vld [vmem:[%s221 + $0xc0] sm:$0xff]
        %v2797 = vld [vmem:[%s221 + $0xc8] sm:$0xff]
        %v2798 = vld [vmem:[%s221 + $0xd0] sm:$0xff]
        %v2799 = vld [vmem:[%s221 + $0xd8] sm:$0xff]
        %v2800 = vld [vmem:[%s221 + $0xe0] sm:$0xff]
        %v2801 = vld [vmem:[%s221 + $0xe8] sm:$0xff]
        %v2802 = vld [vmem:[%s221 + $0xf0] sm:$0xff]
        %v2803 = vld [vmem:[%s221 + $0xf8] sm:$0xff]
        %2836 = vrot.lane.b32.xlu0 %v2772, 64
        %v2837 = vpop.permute.xlu0 %2836
        %2838 = vrot.lane.b32.xlu0 %v2773, 64
        %v2839 = vpop.permute.xlu0 %2838
        %2840 = vrot.lane.b32.xlu0 %v2774, 64
        %v2841 = vpop.permute.xlu0 %2840
        %2842 = vrot.lane.b32.xlu0 %v2775, 64
        %v2843 = vpop.permute.xlu0 %2842
        %2844 = vrot.lane.b32.xlu0 %v2776, 64
        %v2845 = vpop.permute.xlu0 %2844
        %2846 = vrot.lane.b32.xlu0 %v2777, 64
        %v2847 = vpop.permute.xlu0 %2846
        %2848 = vrot.lane.b32.xlu0 %v2778, 64
        %v2849 = vpop.permute.xlu0 %2848
        %2850 = vrot.lane.b32.xlu0 %v2779, 64
        %v2851 = vpop.permute.xlu0 %2850
        %2852 = vrot.lane.b32.xlu0 %v2780, 64
        %v2853 = vpop.permute.xlu0 %2852
        %2854 = vrot.lane.b32.xlu0 %v2781, 64
        %v2855 = vpop.permute.xlu0 %2854
        %2856 = vrot.lane.b32.xlu0 %v2782, 64
        %v2857 = vpop.permute.xlu0 %2856
        %2858 = vrot.lane.b32.xlu0 %v2783, 64
        %v2859 = vpop.permute.xlu0 %2858
        %2860 = vrot.lane.b32.xlu0 %v2784, 64
        %v2861 = vpop.permute.xlu0 %2860
        %2862 = vrot.lane.b32.xlu0 %v2785, 64
        %v2863 = vpop.permute.xlu0 %2862
        %2864 = vrot.lane.b32.xlu0 %v2786, 64
        %v2865 = vpop.permute.xlu0 %2864
        %2866 = vrot.lane.b32.xlu0 %v2787, 64
        %v2867 = vpop.permute.xlu0 %2866
        %2868 = vrot.lane.b32.xlu0 %v2788, 64
        %v2869 = vpop.permute.xlu0 %2868
        %2870 = vrot.lane.b32.xlu0 %v2789, 64
        %v2871 = vpop.permute.xlu0 %2870
        %2872 = vrot.lane.b32.xlu0 %v2790, 64
        %v2873 = vpop.permute.xlu0 %2872
        %2874 = vrot.lane.b32.xlu0 %v2791, 64
        %v2875 = vpop.permute.xlu0 %2874
        %2876 = vrot.lane.b32.xlu0 %v2792, 64
        %v2877 = vpop.permute.xlu0 %2876
        %2878 = vrot.lane.b32.xlu0 %v2793, 64
        %v2879 = vpop.permute.xlu0 %2878
        %2880 = vrot.lane.b32.xlu0 %v2794, 64
        %v2881 = vpop.permute.xlu0 %2880
        %2882 = vrot.lane.b32.xlu0 %v2795, 64
        %v2883 = vpop.permute.xlu0 %2882
        %2884 = vrot.lane.b32.xlu0 %v2796, 64
        %v2885 = vpop.permute.xlu0 %2884
        %2886 = vrot.lane.b32.xlu0 %v2797, 64
        %v2887 = vpop.permute.xlu0 %2886
        %2888 = vrot.lane.b32.xlu0 %v2798, 64
        %v2889 = vpop.permute.xlu0 %2888
        %2890 = vrot.lane.b32.xlu0 %v2799, 64
        %v2891 = vpop.permute.xlu0 %2890
        %2892 = vrot.lane.b32.xlu0 %v2800, 64
        %v2893 = vpop.permute.xlu0 %2892
        %2894 = vrot.lane.b32.xlu0 %v2801, 64
        %v2895 = vpop.permute.xlu0 %2894
        %2896 = vrot.lane.b32.xlu0 %v2802, 64
        %v2897 = vpop.permute.xlu0 %2896
        %2898 = vrot.lane.b32.xlu0 %v2803, 64
        %v2899 = vpop.permute.xlu0 %2898
        %v2932 = vmul.f32 %v2274, %v2837
        %v2933 = vmul.f32 %v2289, %v2839
        %v2934 = vmul.f32 %v2304, %v2841
        %v2935 = vmul.f32 %v2319, %v2843
        %v2936 = vmul.f32 %v2334, %v2845
        %v2937 = vmul.f32 %v2349, %v2847
        %v2938 = vmul.f32 %v2364, %v2849
        %v2939 = vmul.f32 %v2379, %v2851
        %v2940 = vmul.f32 %v2394, %v2853
        %v2941 = vmul.f32 %v2409, %v2855
        %v2942 = vmul.f32 %v2424, %v2857
        %v2943 = vmul.f32 %v2439, %v2859
        %v2944 = vmul.f32 %v2454, %v2861
        %v2945 = vmul.f32 %v2469, %v2863
        %v2946 = vmul.f32 %v2484, %v2865
        %v2947 = vmul.f32 %v2499, %v2867
        %v2948 = vmul.f32 %v2514, %v2869
        %v2949 = vmul.f32 %v2529, %v2871
        %v2950 = vmul.f32 %v2544, %v2873
        %v2951 = vmul.f32 %v2559, %v2875
        %v2952 = vmul.f32 %v2574, %v2877
        %v2953 = vmul.f32 %v2589, %v2879
        %v2954 = vmul.f32 %v2604, %v2881
        %v2955 = vmul.f32 %v2619, %v2883
        %v2956 = vmul.f32 %v2634, %v2885
        %v2957 = vmul.f32 %v2649, %v2887
        %v2958 = vmul.f32 %v2664, %v2889
        %v2959 = vmul.f32 %v2679, %v2891
        %v2960 = vmul.f32 %v2694, %v2893
        %v2961 = vmul.f32 %v2709, %v2895
        %v2962 = vmul.f32 %v2724, %v2897
        %v2963 = vmul.f32 %v2739, %v2899
        %v2964 = vmul.f32 %v2274, %v2740
        %v2965 = vmul.f32 %v2289, %v2741
        %v2966 = vmul.f32 %v2304, %v2742
        %v2967 = vmul.f32 %v2319, %v2743
        %v2968 = vmul.f32 %v2334, %v2744
        %v2969 = vmul.f32 %v2349, %v2745
        %v2970 = vmul.f32 %v2364, %v2746
        %v2971 = vmul.f32 %v2379, %v2747
        %v2972 = vmul.f32 %v2394, %v2748
        %v2973 = vmul.f32 %v2409, %v2749
        %v2974 = vmul.f32 %v2424, %v2750
        %v2975 = vmul.f32 %v2439, %v2751
        %v2976 = vmul.f32 %v2454, %v2752
        %v2977 = vmul.f32 %v2469, %v2753
        %v2978 = vmul.f32 %v2484, %v2754
        %v2979 = vmul.f32 %v2499, %v2755
        %v2980 = vmul.f32 %v2514, %v2756
        %v2981 = vmul.f32 %v2529, %v2757
        %v2982 = vmul.f32 %v2544, %v2758
        %v2983 = vmul.f32 %v2559, %v2759
        %v2984 = vmul.f32 %v2574, %v2760
        %v2985 = vmul.f32 %v2589, %v2761
        %v2986 = vmul.f32 %v2604, %v2762
        %v2987 = vmul.f32 %v2619, %v2763
        %v2988 = vmul.f32 %v2634, %v2764
        %v2989 = vmul.f32 %v2649, %v2765
        %v2990 = vmul.f32 %v2664, %v2766
        %v2991 = vmul.f32 %v2679, %v2767
        %v2992 = vmul.f32 %v2694, %v2768
        %v2993 = vmul.f32 %v2709, %v2769
        %v2994 = vmul.f32 %v2724, %v2770
        %v2995 = vmul.f32 %v2739, %v2771
        %3028 = vrot.lane.b32.xlu0 %v2964, 64
        %v3029 = vpop.permute.xlu0 %3028
        %3030 = vrot.lane.b32.xlu0 %v2965, 64
        %v3031 = vpop.permute.xlu0 %3030
        %3032 = vrot.lane.b32.xlu0 %v2966, 64
        %v3033 = vpop.permute.xlu0 %3032
        %3034 = vrot.lane.b32.xlu0 %v2967, 64
        %v3035 = vpop.permute.xlu0 %3034
        %3036 = vrot.lane.b32.xlu0 %v2968, 64
        %v3037 = vpop.permute.xlu0 %3036
        %3038 = vrot.lane.b32.xlu0 %v2969, 64
        %v3039 = vpop.permute.xlu0 %3038
        %3040 = vrot.lane.b32.xlu0 %v2970, 64
        %v3041 = vpop.permute.xlu0 %3040
        %3042 = vrot.lane.b32.xlu0 %v2971, 64
        %v3043 = vpop.permute.xlu0 %3042
        %3044 = vrot.lane.b32.xlu0 %v2972, 64
        %v3045 = vpop.permute.xlu0 %3044
        %3046 = vrot.lane.b32.xlu0 %v2973, 64
        %v3047 = vpop.permute.xlu0 %3046
        %3048 = vrot.lane.b32.xlu0 %v2974, 64
        %v3049 = vpop.permute.xlu0 %3048
        %3050 = vrot.lane.b32.xlu0 %v2975, 64
        %v3051 = vpop.permute.xlu0 %3050
        %3052 = vrot.lane.b32.xlu0 %v2976, 64
        %v3053 = vpop.permute.xlu0 %3052
        %3054 = vrot.lane.b32.xlu0 %v2977, 64
        %v3055 = vpop.permute.xlu0 %3054
        %3056 = vrot.lane.b32.xlu0 %v2978, 64
        %v3057 = vpop.permute.xlu0 %3056
        %3058 = vrot.lane.b32.xlu0 %v2979, 64
        %v3059 = vpop.permute.xlu0 %3058
        %3060 = vrot.lane.b32.xlu0 %v2980, 64
        %v3061 = vpop.permute.xlu0 %3060
        %3062 = vrot.lane.b32.xlu0 %v2981, 64
        %v3063 = vpop.permute.xlu0 %3062
        %3064 = vrot.lane.b32.xlu0 %v2982, 64
        %v3065 = vpop.permute.xlu0 %3064
        %3066 = vrot.lane.b32.xlu0 %v2983, 64
        %v3067 = vpop.permute.xlu0 %3066
        %3068 = vrot.lane.b32.xlu0 %v2984, 64
        %v3069 = vpop.permute.xlu0 %3068
        %3070 = vrot.lane.b32.xlu0 %v2985, 64
        %v3071 = vpop.permute.xlu0 %3070
        %3072 = vrot.lane.b32.xlu0 %v2986, 64
        %v3073 = vpop.permute.xlu0 %3072
        %3074 = vrot.lane.b32.xlu0 %v2987, 64
        %v3075 = vpop.permute.xlu0 %3074
        %3076 = vrot.lane.b32.xlu0 %v2988, 64
        %v3077 = vpop.permute.xlu0 %3076
        %3078 = vrot.lane.b32.xlu0 %v2989, 64
        %v3079 = vpop.permute.xlu0 %3078
        %3080 = vrot.lane.b32.xlu0 %v2990, 64
        %v3081 = vpop.permute.xlu0 %3080
        %3082 = vrot.lane.b32.xlu0 %v2991, 64
        %v3083 = vpop.permute.xlu0 %3082
        %3084 = vrot.lane.b32.xlu0 %v2992, 64
        %v3085 = vpop.permute.xlu0 %3084
        %3086 = vrot.lane.b32.xlu0 %v2993, 64
        %v3087 = vpop.permute.xlu0 %3086
        %3088 = vrot.lane.b32.xlu0 %v2994, 64
        %v3089 = vpop.permute.xlu0 %3088
        %3090 = vrot.lane.b32.xlu0 %v2995, 64
        %v3091 = vpop.permute.xlu0 %3090
        %v3124 = vadd.f32 %v2932, %v3029
        %v3125 = vadd.f32 %v2933, %v3031
        %v3126 = vadd.f32 %v2934, %v3033
        %v3127 = vadd.f32 %v2935, %v3035
        %v3128 = vadd.f32 %v2936, %v3037
        %v3129 = vadd.f32 %v2937, %v3039
        %v3130 = vadd.f32 %v2938, %v3041
        %v3131 = vadd.f32 %v2939, %v3043
        %v3132 = vadd.f32 %v2940, %v3045
        %v3133 = vadd.f32 %v2941, %v3047
        %v3134 = vadd.f32 %v2942, %v3049
        %v3135 = vadd.f32 %v2943, %v3051
        %v3136 = vadd.f32 %v2944, %v3053
        %v3137 = vadd.f32 %v2945, %v3055
        %v3138 = vadd.f32 %v2946, %v3057
        %v3139 = vadd.f32 %v2947, %v3059
        %v3140 = vadd.f32 %v2948, %v3061
        %v3141 = vadd.f32 %v2949, %v3063
        %v3142 = vadd.f32 %v2950, %v3065
        %v3143 = vadd.f32 %v2951, %v3067
        %v3144 = vadd.f32 %v2952, %v3069
        %v3145 = vadd.f32 %v2953, %v3071
        %v3146 = vadd.f32 %v2954, %v3073
        %v3147 = vadd.f32 %v2955, %v3075
        %v3148 = vadd.f32 %v2956, %v3077
        %v3149 = vadd.f32 %v2957, %v3079
        %v3150 = vadd.f32 %v2958, %v3081
        %v3151 = vadd.f32 %v2959, %v3083
        %v3152 = vadd.f32 %v2960, %v3085
        %v3153 = vadd.f32 %v2961, %v3087
        %v3154 = vadd.f32 %v2962, %v3089
        %v3155 = vadd.f32 %v2963, %v3091
        %vm3156 = vcmask 523264
        %3157 = vst.msk [vmem:[#allocation2] sm:$0xff] %vm3156, 0.0
        %3158 = vst.msk [vmem:[#allocation2 + $0x8] sm:$0xff] %vm3156, 0.0
        %vm3159 = vcmask 517120
        %3160 = vst.msk [vmem:[#allocation2 + $0x10] sm:$0x3] %vm3159, 0.0
        %s3161 = scalar_lea.vmem [#allocation2], 408
        %3162 = vst.msk [vmem:[%s3161] sm:$0xff] %vm3156, 0.0
        %3163 = vst.msk [vmem:[%s3161 + $0x8] sm:$0xff] %vm3156, 0.0
        %3164 = vst.msk [vmem:[%s3161 + $0x10] sm:$0x3] %vm3159, 0.0
        %vm3165 = vcmask 516096
        %3166 = vst.msk [vmem:[#allocation2] sm:$0x1] %vm3165, 0.0
        %3167 = vst.msk [vmem:[#allocation2 + $0x18] sm:$0x1] %vm3165, 0.0
        %3168 = vst.msk [vmem:[#allocation2 + $0x30] sm:$0x1] %vm3165, 0.0
        %3169 = vst.msk [vmem:[#allocation2 + $0x48] sm:$0x1] %vm3165, 0.0
        %3170 = vst.msk [vmem:[#allocation2 + $0x60] sm:$0x1] %vm3165, 0.0
        %3171 = vst.msk [vmem:[#allocation2 + $0x78] sm:$0x1] %vm3165, 0.0
        %3172 = vst.msk [vmem:[#allocation2 + $0x90] sm:$0x1] %vm3165, 0.0
        %3173 = vst.msk [vmem:[#allocation2 + $0xa8] sm:$0x1] %vm3165, 0.0
        %3174 = vst.msk [vmem:[#allocation2 + $0xc0] sm:$0x1] %vm3165, 0.0
        %3175 = vst.msk [vmem:[#allocation2 + $0xd8] sm:$0x1] %vm3165, 0.0
        %3176 = vst.msk [vmem:[#allocation2 + $0xf0] sm:$0x1] %vm3165, 0.0
        %3177 = vst.msk [vmem:[#allocation2 + $0x108] sm:$0x1] %vm3165, 0.0
        %3178 = vst.msk [vmem:[#allocation2 + $0x120] sm:$0x1] %vm3165, 0.0
        %3179 = vst.msk [vmem:[#allocation2 + $0x138] sm:$0x1] %vm3165, 0.0
        %3180 = vst.msk [vmem:[#allocation2 + $0x150] sm:$0x1] %vm3165, 0.0
        %3181 = vst.msk [vmem:[#allocation2 + $0x168] sm:$0x1] %vm3165, 0.0
        %3182 = vst.msk [vmem:[#allocation2 + $0x180] sm:$0x1] %vm3165, 0.0
        %3183 = vst.msk [vmem:[#allocation2 + $0x198] sm:$0x1] %vm3165, 0.0
        %3184 = vst.msk [vmem:[#allocation2 + $0x11] sm:$0x1] %vm3165, 0.0
        %3185 = vst.msk [vmem:[#allocation2 + $0x29] sm:$0x1] %vm3165, 0.0
        %3186 = vst.msk [vmem:[#allocation2 + $0x41] sm:$0x1] %vm3165, 0.0
        %3187 = vst.msk [vmem:[#allocation2 + $0x59] sm:$0x1] %vm3165, 0.0
        %3188 = vst.msk [vmem:[#allocation2 + $0x71] sm:$0x1] %vm3165, 0.0
        %3189 = vst.msk [vmem:[#allocation2 + $0x89] sm:$0x1] %vm3165, 0.0
        %3190 = vst.msk [vmem:[#allocation2 + $0xa1] sm:$0x1] %vm3165, 0.0
        %3191 = vst.msk [vmem:[#allocation2 + $0xb9] sm:$0x1] %vm3165, 0.0
        %3192 = vst.msk [vmem:[#allocation2 + $0xd1] sm:$0x1] %vm3165, 0.0
        %3193 = vst.msk [vmem:[#allocation2 + $0xe9] sm:$0x1] %vm3165, 0.0
        %3194 = vst.msk [vmem:[#allocation2 + $0x101] sm:$0x1] %vm3165, 0.0
        %3195 = vst.msk [vmem:[#allocation2 + $0x119] sm:$0x1] %vm3165, 0.0
        %3196 = vst.msk [vmem:[#allocation2 + $0x131] sm:$0x1] %vm3165, 0.0
        %3197 = vst.msk [vmem:[#allocation2 + $0x149] sm:$0x1] %vm3165, 0.0
        %3198 = vst.msk [vmem:[#allocation2 + $0x161] sm:$0x1] %vm3165, 0.0
        %3199 = vst.msk [vmem:[#allocation2 + $0x179] sm:$0x1] %vm3165, 0.0
        %3200 = vst.msk [vmem:[#allocation2 + $0x191] sm:$0x1] %vm3165, 0.0
        %3201 = vst.msk [vmem:[#allocation2 + $0x1a9] sm:$0x1] %vm3165, 0.0
        %3234 = vrot.lane.b32.xlu0 %v3124, 64
        %v3235 = vpop.permute.xlu0 %3234
        %3236 = vrot.lane.b32.xlu0 %v3125, 64
        %v3237 = vpop.permute.xlu0 %3236
        %3238 = vrot.lane.b32.xlu0 %v3126, 64
        %v3239 = vpop.permute.xlu0 %3238
        %3240 = vrot.lane.b32.xlu0 %v3127, 64
        %v3241 = vpop.permute.xlu0 %3240
        %3242 = vrot.lane.b32.xlu0 %v3128, 64
        %v3243 = vpop.permute.xlu0 %3242
        %3244 = vrot.lane.b32.xlu0 %v3129, 64
        %v3245 = vpop.permute.xlu0 %3244
        %3246 = vrot.lane.b32.xlu0 %v3130, 64
        %v3247 = vpop.permute.xlu0 %3246
        %3248 = vrot.lane.b32.xlu0 %v3131, 64
        %v3249 = vpop.permute.xlu0 %3248
        %3250 = vrot.lane.b32.xlu0 %v3132, 64
        %v3251 = vpop.permute.xlu0 %3250
        %3252 = vrot.lane.b32.xlu0 %v3133, 64
        %v3253 = vpop.permute.xlu0 %3252
        %3254 = vrot.lane.b32.xlu0 %v3134, 64
        %v3255 = vpop.permute.xlu0 %3254
        %3256 = vrot.lane.b32.xlu0 %v3135, 64
        %v3257 = vpop.permute.xlu0 %3256
        %3258 = vrot.lane.b32.xlu0 %v3136, 64
        %v3259 = vpop.permute.xlu0 %3258
        %3260 = vrot.lane.b32.xlu0 %v3137, 64
        %v3261 = vpop.permute.xlu0 %3260
        %3262 = vrot.lane.b32.xlu0 %v3138, 64
        %v3263 = vpop.permute.xlu0 %3262
        %3264 = vrot.lane.b32.xlu0 %v3139, 64
        %v3265 = vpop.permute.xlu0 %3264
        %3266 = vrot.lane.b32.xlu0 %v3140, 64
        %v3267 = vpop.permute.xlu0 %3266
        %3268 = vrot.lane.b32.xlu0 %v3141, 64
        %v3269 = vpop.permute.xlu0 %3268
        %3270 = vrot.lane.b32.xlu0 %v3142, 64
        %v3271 = vpop.permute.xlu0 %3270
        %3272 = vrot.lane.b32.xlu0 %v3143, 64
        %v3273 = vpop.permute.xlu0 %3272
        %3274 = vrot.lane.b32.xlu0 %v3144, 64
        %v3275 = vpop.permute.xlu0 %3274
        %3276 = vrot.lane.b32.xlu0 %v3145, 64
        %v3277 = vpop.permute.xlu0 %3276
        %3278 = vrot.lane.b32.xlu0 %v3146, 64
        %v3279 = vpop.permute.xlu0 %3278
        %3280 = vrot.lane.b32.xlu0 %v3147, 64
        %v3281 = vpop.permute.xlu0 %3280
        %3282 = vrot.lane.b32.xlu0 %v3148, 64
        %v3283 = vpop.permute.xlu0 %3282
        %3284 = vrot.lane.b32.xlu0 %v3149, 64
        %v3285 = vpop.permute.xlu0 %3284
        %3286 = vrot.lane.b32.xlu0 %v3150, 64
        %v3287 = vpop.permute.xlu0 %3286
        %3288 = vrot.lane.b32.xlu0 %v3151, 64
        %v3289 = vpop.permute.xlu0 %3288
        %3290 = vrot.lane.b32.xlu0 %v3152, 64
        %v3291 = vpop.permute.xlu0 %3290
        %3292 = vrot.lane.b32.xlu0 %v3153, 64
        %v3293 = vpop.permute.xlu0 %3292
        %3294 = vrot.lane.b32.xlu0 %v3154, 64
        %v3295 = vpop.permute.xlu0 %3294
        %3296 = vrot.lane.b32.xlu0 %v3155, 64
        %v3297 = vpop.permute.xlu0 %3296
        %s3330 = scalar_lea.vmem [#allocation2], 24
        %3331 = vst.msk [vmem:[%s3330 + $0x1] sm:$0xff] %vm3156, %v3235
        %3332 = vst.msk [vmem:[%s3330 + $0x9] sm:$0xff] %vm3156, %v3237
        %3333 = vst.msk [vmem:[%s3330 + $0x19] sm:$0xff] %vm3156, %v3239
        %3334 = vst.msk [vmem:[%s3330 + $0x21] sm:$0xff] %vm3156, %v3241
        %3335 = vst.msk [vmem:[%s3330 + $0x31] sm:$0xff] %vm3156, %v3243
        %3336 = vst.msk [vmem:[%s3330 + $0x39] sm:$0xff] %vm3156, %v3245
        %3337 = vst.msk [vmem:[%s3330 + $0x49] sm:$0xff] %vm3156, %v3247
        %3338 = vst.msk [vmem:[%s3330 + $0x51] sm:$0xff] %vm3156, %v3249
        %3339 = vst.msk [vmem:[%s3330 + $0x61] sm:$0xff] %vm3156, %v3251
        %3340 = vst.msk [vmem:[%s3330 + $0x69] sm:$0xff] %vm3156, %v3253
        %3341 = vst.msk [vmem:[%s3330 + $0x79] sm:$0xff] %vm3156, %v3255
        %3342 = vst.msk [vmem:[%s3330 + $0x81] sm:$0xff] %vm3156, %v3257
        %3343 = vst.msk [vmem:[%s3330 + $0x91] sm:$0xff] %vm3156, %v3259
        %3344 = vst.msk [vmem:[%s3330 + $0x99] sm:$0xff] %vm3156, %v3261
        %3345 = vst.msk [vmem:[%s3330 + $0xa9] sm:$0xff] %vm3156, %v3263
        %3346 = vst.msk [vmem:[%s3330 + $0xb1] sm:$0xff] %vm3156, %v3265
        %3347 = vst.msk [vmem:[%s3330 + $0xc1] sm:$0xff] %vm3156, %v3267
        %3348 = vst.msk [vmem:[%s3330 + $0xc9] sm:$0xff] %vm3156, %v3269
        %3349 = vst.msk [vmem:[%s3330 + $0xd9] sm:$0xff] %vm3156, %v3271
        %3350 = vst.msk [vmem:[%s3330 + $0xe1] sm:$0xff] %vm3156, %v3273
        %3351 = vst.msk [vmem:[%s3330 + $0xf1] sm:$0xff] %vm3156, %v3275
        %3352 = vst.msk [vmem:[%s3330 + $0xf9] sm:$0xff] %vm3156, %v3277
        %3353 = vst.msk [vmem:[%s3330 + $0x109] sm:$0xff] %vm3156, %v3279
        %3354 = vst.msk [vmem:[%s3330 + $0x111] sm:$0xff] %vm3156, %v3281
        %3355 = vst.msk [vmem:[%s3330 + $0x121] sm:$0xff] %vm3156, %v3283
        %3356 = vst.msk [vmem:[%s3330 + $0x129] sm:$0xff] %vm3156, %v3285
        %3357 = vst.msk [vmem:[%s3330 + $0x139] sm:$0xff] %vm3156, %v3287
        %3358 = vst.msk [vmem:[%s3330 + $0x141] sm:$0xff] %vm3156, %v3289
        %3359 = vst.msk [vmem:[%s3330 + $0x151] sm:$0xff] %vm3156, %v3291
        %3360 = vst.msk [vmem:[%s3330 + $0x159] sm:$0xff] %vm3156, %v3293
        %3361 = vst.msk [vmem:[%s3330 + $0x169] sm:$0xff] %vm3156, %v3295
        %3362 = vst.msk [vmem:[%s3330 + $0x171] sm:$0xff] %vm3156, %v3297
        %v3363 = vld [vmem:[#allocation2] sm:$0xff]
        %v3364 = vld [vmem:[#allocation2 + $0x8] sm:$0xff]
        %v3365 = vld [vmem:[#allocation2 + $0x18] sm:$0xff]
        %v3366 = vld [vmem:[#allocation2 + $0x20] sm:$0xff]
        %v3367 = vld [vmem:[#allocation2 + $0x30] sm:$0xff]
        %v3368 = vld [vmem:[#allocation2 + $0x38] sm:$0xff]
        %v3369 = vld [vmem:[#allocation2 + $0x48] sm:$0xff]
        %v3370 = vld [vmem:[#allocation2 + $0x50] sm:$0xff]
        %v3371 = vld [vmem:[#allocation2 + $0x60] sm:$0xff]
        %v3372 = vld [vmem:[#allocation2 + $0x68] sm:$0xff]
        %v3373 = vld [vmem:[#allocation2 + $0x78] sm:$0xff]
        %v3374 = vld [vmem:[#allocation2 + $0x80] sm:$0xff]
        %v3375 = vld [vmem:[#allocation2 + $0x90] sm:$0xff]
        %v3376 = vld [vmem:[#allocation2 + $0x98] sm:$0xff]
        %v3377 = vld [vmem:[#allocation2 + $0xa8] sm:$0xff]
        %v3378 = vld [vmem:[#allocation2 + $0xb0] sm:$0xff]
        %v3379 = vld [vmem:[#allocation2 + $0xc0] sm:$0xff]
        %v3380 = vld [vmem:[#allocation2 + $0xc8] sm:$0xff]
        %v3381 = vld [vmem:[#allocation2 + $0xd8] sm:$0xff]
        %v3382 = vld [vmem:[#allocation2 + $0xe0] sm:$0xff]
        %v3383 = vld [vmem:[#allocation2 + $0xf0] sm:$0xff]
        %v3384 = vld [vmem:[#allocation2 + $0xf8] sm:$0xff]
        %v3385 = vld [vmem:[#allocation2 + $0x108] sm:$0xff]
        %v3386 = vld [vmem:[#allocation2 + $0x110] sm:$0xff]
        %v3387 = vld [vmem:[#allocation2 + $0x120] sm:$0xff]
        %v3388 = vld [vmem:[#allocation2 + $0x128] sm:$0xff]
        %v3389 = vld [vmem:[#allocation2 + $0x138] sm:$0xff]
        %v3390 = vld [vmem:[#allocation2 + $0x140] sm:$0xff]
        %v3391 = vld [vmem:[#allocation2 + $0x150] sm:$0xff]
        %v3392 = vld [vmem:[#allocation2 + $0x158] sm:$0xff]
        %v3393 = vld [vmem:[#allocation2 + $0x168] sm:$0xff]
        %v3394 = vld [vmem:[#allocation2 + $0x170] sm:$0xff]
        %v3395 = vld [vmem:[#allocation2 + $0x1] sm:$0xff]
        %v3396 = vld [vmem:[#allocation2 + $0x9] sm:$0xff]
        %v3397 = vld [vmem:[#allocation2 + $0x19] sm:$0xff]
        %v3398 = vld [vmem:[#allocation2 + $0x21] sm:$0xff]
        %v3399 = vld [vmem:[#allocation2 + $0x31] sm:$0xff]
        %v3400 = vld [vmem:[#allocation2 + $0x39] sm:$0xff]
        %v3401 = vld [vmem:[#allocation2 + $0x49] sm:$0xff]
        %v3402 = vld [vmem:[#allocation2 + $0x51] sm:$0xff]
        %v3403 = vld [vmem:[#allocation2 + $0x61] sm:$0xff]
        %v3404 = vld [vmem:[#allocation2 + $0x69] sm:$0xff]
        %v3405 = vld [vmem:[#allocation2 + $0x79] sm:$0xff]
        %v3406 = vld [vmem:[#allocation2 + $0x81] sm:$0xff]
        %v3407 = vld [vmem:[#allocation2 + $0x91] sm:$0xff]
        %v3408 = vld [vmem:[#allocation2 + $0x99] sm:$0xff]
        %v3409 = vld [vmem:[#allocation2 + $0xa9] sm:$0xff]
        %v3410 = vld [vmem:[#allocation2 + $0xb1] sm:$0xff]
        %v3411 = vld [vmem:[#allocation2 + $0xc1] sm:$0xff]
        %v3412 = vld [vmem:[#allocation2 + $0xc9] sm:$0xff]
        %v3413 = vld [vmem:[#allocation2 + $0xd9] sm:$0xff]
        %v3414 = vld [vmem:[#allocation2 + $0xe1] sm:$0xff]
        %v3415 = vld [vmem:[#allocation2 + $0xf1] sm:$0xff]
        %v3416 = vld [vmem:[#allocation2 + $0xf9] sm:$0xff]
        %v3417 = vld [vmem:[#allocation2 + $0x109] sm:$0xff]
        %v3418 = vld [vmem:[#allocation2 + $0x111] sm:$0xff]
        %v3419 = vld [vmem:[#allocation2 + $0x121] sm:$0xff]
        %v3420 = vld [vmem:[#allocation2 + $0x129] sm:$0xff]
        %v3421 = vld [vmem:[#allocation2 + $0x139] sm:$0xff]
        %v3422 = vld [vmem:[#allocation2 + $0x141] sm:$0xff]
        %v3423 = vld [vmem:[#allocation2 + $0x151] sm:$0xff]
        %v3424 = vld [vmem:[#allocation2 + $0x159] sm:$0xff]
        %v3425 = vld [vmem:[#allocation2 + $0x169] sm:$0xff]
        %v3426 = vld [vmem:[#allocation2 + $0x171] sm:$0xff]
        %v3427 = vld [vmem:[#allocation2 + $0x2] sm:$0xff]
        %v3428 = vld [vmem:[#allocation2 + $0xa] sm:$0xff]
        %v3429 = vld [vmem:[#allocation2 + $0x1a] sm:$0xff]
        %v3430 = vld [vmem:[#allocation2 + $0x22] sm:$0xff]
        %v3431 = vld [vmem:[#allocation2 + $0x32] sm:$0xff]
        %v3432 = vld [vmem:[#allocation2 + $0x3a] sm:$0xff]
        %v3433 = vld [vmem:[#allocation2 + $0x4a] sm:$0xff]
        %v3434 = vld [vmem:[#allocation2 + $0x52] sm:$0xff]
        %v3435 = vld [vmem:[#allocation2 + $0x62] sm:$0xff]
        %v3436 = vld [vmem:[#allocation2 + $0x6a] sm:$0xff]
        %v3437 = vld [vmem:[#allocation2 + $0x7a] sm:$0xff]
        %v3438 = vld [vmem:[#allocation2 + $0x82] sm:$0xff]
        %v3439 = vld [vmem:[#allocation2 + $0x92] sm:$0xff]
        %v3440 = vld [vmem:[#allocation2 + $0x9a] sm:$0xff]
        %v3441 = vld [vmem:[#allocation2 + $0xaa] sm:$0xff]
        %v3442 = vld [vmem:[#allocation2 + $0xb2] sm:$0xff]
        %v3443 = vld [vmem:[#allocation2 + $0xc2] sm:$0xff]
        %v3444 = vld [vmem:[#allocation2 + $0xca] sm:$0xff]
        %v3445 = vld [vmem:[#allocation2 + $0xda] sm:$0xff]
        %v3446 = vld [vmem:[#allocation2 + $0xe2] sm:$0xff]
        %v3447 = vld [vmem:[#allocation2 + $0xf2] sm:$0xff]
        %v3448 = vld [vmem:[#allocation2 + $0xfa] sm:$0xff]
        %v3449 = vld [vmem:[#allocation2 + $0x10a] sm:$0xff]
        %v3450 = vld [vmem:[#allocation2 + $0x112] sm:$0xff]
        %v3451 = vld [vmem:[#allocation2 + $0x122] sm:$0xff]
        %v3452 = vld [vmem:[#allocation2 + $0x12a] sm:$0xff]
        %v3453 = vld [vmem:[#allocation2 + $0x13a] sm:$0xff]
        %v3454 = vld [vmem:[#allocation2 + $0x142] sm:$0xff]
        %v3455 = vld [vmem:[#allocation2 + $0x152] sm:$0xff]
        %v3456 = vld [vmem:[#allocation2 + $0x15a] sm:$0xff]
        %v3457 = vld [vmem:[#allocation2 + $0x16a] sm:$0xff]
        %v3458 = vld [vmem:[#allocation2 + $0x172] sm:$0xff]
        %v3459 = vld [vmem:[%s3330] sm:$0xff]
        %v3460 = vld [vmem:[%s3330 + $0x8] sm:$0xff]
        %v3461 = vld [vmem:[%s3330 + $0x18] sm:$0xff]
        %v3462 = vld [vmem:[%s3330 + $0x20] sm:$0xff]
        %v3463 = vld [vmem:[%s3330 + $0x30] sm:$0xff]
        %v3464 = vld [vmem:[%s3330 + $0x38] sm:$0xff]
        %v3465 = vld [vmem:[%s3330 + $0x48] sm:$0xff]
        %v3466 = vld [vmem:[%s3330 + $0x50] sm:$0xff]
        %v3467 = vld [vmem:[%s3330 + $0x60] sm:$0xff]
        %v3468 = vld [vmem:[%s3330 + $0x68] sm:$0xff]
        %v3469 = vld [vmem:[%s3330 + $0x78] sm:$0xff]
        %v3470 = vld [vmem:[%s3330 + $0x80] sm:$0xff]
        %v3471 = vld [vmem:[%s3330 + $0x90] sm:$0xff]
        %v3472 = vld [vmem:[%s3330 + $0x98] sm:$0xff]
        %v3473 = vld [vmem:[%s3330 + $0xa8] sm:$0xff]
        %v3474 = vld [vmem:[%s3330 + $0xb0] sm:$0xff]
        %v3475 = vld [vmem:[%s3330 + $0xc0] sm:$0xff]
        %v3476 = vld [vmem:[%s3330 + $0xc8] sm:$0xff]
        %v3477 = vld [vmem:[%s3330 + $0xd8] sm:$0xff]
        %v3478 = vld [vmem:[%s3330 + $0xe0] sm:$0xff]
        %v3479 = vld [vmem:[%s3330 + $0xf0] sm:$0xff]
        %v3480 = vld [vmem:[%s3330 + $0xf8] sm:$0xff]
        %v3481 = vld [vmem:[%s3330 + $0x108] sm:$0xff]
        %v3482 = vld [vmem:[%s3330 + $0x110] sm:$0xff]
        %v3483 = vld [vmem:[%s3330 + $0x120] sm:$0xff]
        %v3484 = vld [vmem:[%s3330 + $0x128] sm:$0xff]
        %v3485 = vld [vmem:[%s3330 + $0x138] sm:$0xff]
        %v3486 = vld [vmem:[%s3330 + $0x140] sm:$0xff]
        %v3487 = vld [vmem:[%s3330 + $0x150] sm:$0xff]
        %v3488 = vld [vmem:[%s3330 + $0x158] sm:$0xff]
        %v3489 = vld [vmem:[%s3330 + $0x168] sm:$0xff]
        %v3490 = vld [vmem:[%s3330 + $0x170] sm:$0xff]
        %v3491 = vld [vmem:[%s3330 + $0x1] sm:$0xff]
        %v3492 = vld [vmem:[%s3330 + $0x9] sm:$0xff]
        %v3493 = vld [vmem:[%s3330 + $0x19] sm:$0xff]
        %v3494 = vld [vmem:[%s3330 + $0x21] sm:$0xff]
        %v3495 = vld [vmem:[%s3330 + $0x31] sm:$0xff]
        %v3496 = vld [vmem:[%s3330 + $0x39] sm:$0xff]
        %v3497 = vld [vmem:[%s3330 + $0x49] sm:$0xff]
        %v3498 = vld [vmem:[%s3330 + $0x51] sm:$0xff]
        %v3499 = vld [vmem:[%s3330 + $0x61] sm:$0xff]
        %v3500 = vld [vmem:[%s3330 + $0x69] sm:$0xff]
        %v3501 = vld [vmem:[%s3330 + $0x79] sm:$0xff]
        %v3502 = vld [vmem:[%s3330 + $0x81] sm:$0xff]
        %v3503 = vld [vmem:[%s3330 + $0x91] sm:$0xff]
        %v3504 = vld [vmem:[%s3330 + $0x99] sm:$0xff]
        %v3505 = vld [vmem:[%s3330 + $0xa9] sm:$0xff]
        %v3506 = vld [vmem:[%s3330 + $0xb1] sm:$0xff]
        %v3507 = vld [vmem:[%s3330 + $0xc1] sm:$0xff]
        %v3508 = vld [vmem:[%s3330 + $0xc9] sm:$0xff]
        %v3509 = vld [vmem:[%s3330 + $0xd9] sm:$0xff]
        %v3510 = vld [vmem:[%s3330 + $0xe1] sm:$0xff]
        %v3511 = vld [vmem:[%s3330 + $0xf1] sm:$0xff]
        %v3512 = vld [vmem:[%s3330 + $0xf9] sm:$0xff]
        %v3513 = vld [vmem:[%s3330 + $0x109] sm:$0xff]
        %v3514 = vld [vmem:[%s3330 + $0x111] sm:$0xff]
        %v3515 = vld [vmem:[%s3330 + $0x121] sm:$0xff]
        %v3516 = vld [vmem:[%s3330 + $0x129] sm:$0xff]
        %v3517 = vld [vmem:[%s3330 + $0x139] sm:$0xff]
        %v3518 = vld [vmem:[%s3330 + $0x141] sm:$0xff]
        %v3519 = vld [vmem:[%s3330 + $0x151] sm:$0xff]
        %v3520 = vld [vmem:[%s3330 + $0x159] sm:$0xff]
        %v3521 = vld [vmem:[%s3330 + $0x169] sm:$0xff]
        %v3522 = vld [vmem:[%s3330 + $0x171] sm:$0xff]
        %v3523 = vld [vmem:[%s3330 + $0x2] sm:$0xff]
        %v3524 = vld [vmem:[%s3330 + $0xa] sm:$0xff]
        %v3525 = vld [vmem:[%s3330 + $0x1a] sm:$0xff]
        %v3526 = vld [vmem:[%s3330 + $0x22] sm:$0xff]
        %v3527 = vld [vmem:[%s3330 + $0x32] sm:$0xff]
        %v3528 = vld [vmem:[%s3330 + $0x3a] sm:$0xff]
        %v3529 = vld [vmem:[%s3330 + $0x4a] sm:$0xff]
        %v3530 = vld [vmem:[%s3330 + $0x52] sm:$0xff]
        %v3531 = vld [vmem:[%s3330 + $0x62] sm:$0xff]
        %v3532 = vld [vmem:[%s3330 + $0x6a] sm:$0xff]
        %v3533 = vld [vmem:[%s3330 + $0x7a] sm:$0xff]
        %v3534 = vld [vmem:[%s3330 + $0x82] sm:$0xff]
        %v3535 = vld [vmem:[%s3330 + $0x92] sm:$0xff]
        %v3536 = vld [vmem:[%s3330 + $0x9a] sm:$0xff]
        %v3537 = vld [vmem:[%s3330 + $0xaa] sm:$0xff]
        %v3538 = vld [vmem:[%s3330 + $0xb2] sm:$0xff]
        %v3539 = vld [vmem:[%s3330 + $0xc2] sm:$0xff]
        %v3540 = vld [vmem:[%s3330 + $0xca] sm:$0xff]
        %v3541 = vld [vmem:[%s3330 + $0xda] sm:$0xff]
        %v3542 = vld [vmem:[%s3330 + $0xe2] sm:$0xff]
        %v3543 = vld [vmem:[%s3330 + $0xf2] sm:$0xff]
        %v3544 = vld [vmem:[%s3330 + $0xfa] sm:$0xff]
        %v3545 = vld [vmem:[%s3330 + $0x10a] sm:$0xff]
        %v3546 = vld [vmem:[%s3330 + $0x112] sm:$0xff]
        %v3547 = vld [vmem:[%s3330 + $0x122] sm:$0xff]
        %v3548 = vld [vmem:[%s3330 + $0x12a] sm:$0xff]
        %v3549 = vld [vmem:[%s3330 + $0x13a] sm:$0xff]
        %v3550 = vld [vmem:[%s3330 + $0x142] sm:$0xff]
        %v3551 = vld [vmem:[%s3330 + $0x152] sm:$0xff]
        %v3552 = vld [vmem:[%s3330 + $0x15a] sm:$0xff]
        %v3553 = vld [vmem:[%s3330 + $0x16a] sm:$0xff]
        %v3554 = vld [vmem:[%s3330 + $0x172] sm:$0xff]
        %s3555 = scalar_lea.vmem [#allocation2], 48
        %v3556 = vld [vmem:[%s3555] sm:$0xff]
        %v3557 = vld [vmem:[%s3555 + $0x8] sm:$0xff]
        %v3558 = vld [vmem:[%s3555 + $0x18] sm:$0xff]
        %v3559 = vld [vmem:[%s3555 + $0x20] sm:$0xff]
        %v3560 = vld [vmem:[%s3555 + $0x30] sm:$0xff]
        %v3561 = vld [vmem:[%s3555 + $0x38] sm:$0xff]
        %v3562 = vld [vmem:[%s3555 + $0x48] sm:$0xff]
        %v3563 = vld [vmem:[%s3555 + $0x50] sm:$0xff]
        %v3564 = vld [vmem:[%s3555 + $0x60] sm:$0xff]
        %v3565 = vld [vmem:[%s3555 + $0x68] sm:$0xff]
        %v3566 = vld [vmem:[%s3555 + $0x78] sm:$0xff]
        %v3567 = vld [vmem:[%s3555 + $0x80] sm:$0xff]
        %v3568 = vld [vmem:[%s3555 + $0x90] sm:$0xff]
        %v3569 = vld [vmem:[%s3555 + $0x98] sm:$0xff]
        %v3570 = vld [vmem:[%s3555 + $0xa8] sm:$0xff]
        %v3571 = vld [vmem:[%s3555 + $0xb0] sm:$0xff]
        %v3572 = vld [vmem:[%s3555 + $0xc0] sm:$0xff]
        %v3573 = vld [vmem:[%s3555 + $0xc8] sm:$0xff]
        %v3574 = vld [vmem:[%s3555 + $0xd8] sm:$0xff]
        %v3575 = vld [vmem:[%s3555 + $0xe0] sm:$0xff]
        %v3576 = vld [vmem:[%s3555 + $0xf0] sm:$0xff]
        %v3577 = vld [vmem:[%s3555 + $0xf8] sm:$0xff]
        %v3578 = vld [vmem:[%s3555 + $0x108] sm:$0xff]
        %v3579 = vld [vmem:[%s3555 + $0x110] sm:$0xff]
        %v3580 = vld [vmem:[%s3555 + $0x120] sm:$0xff]
        %v3581 = vld [vmem:[%s3555 + $0x128] sm:$0xff]
        %v3582 = vld [vmem:[%s3555 + $0x138] sm:$0xff]
        %v3583 = vld [vmem:[%s3555 + $0x140] sm:$0xff]
        %v3584 = vld [vmem:[%s3555 + $0x150] sm:$0xff]
        %v3585 = vld [vmem:[%s3555 + $0x158] sm:$0xff]
        %v3586 = vld [vmem:[%s3555 + $0x168] sm:$0xff]
        %v3587 = vld [vmem:[%s3555 + $0x170] sm:$0xff]
        %v3588 = vld [vmem:[%s3555 + $0x1] sm:$0xff]
        %v3589 = vld [vmem:[%s3555 + $0x9] sm:$0xff]
        %v3590 = vld [vmem:[%s3555 + $0x19] sm:$0xff]
        %v3591 = vld [vmem:[%s3555 + $0x21] sm:$0xff]
        %v3592 = vld [vmem:[%s3555 + $0x31] sm:$0xff]
        %v3593 = vld [vmem:[%s3555 + $0x39] sm:$0xff]
        %v3594 = vld [vmem:[%s3555 + $0x49] sm:$0xff]
        %v3595 = vld [vmem:[%s3555 + $0x51] sm:$0xff]
        %v3596 = vld [vmem:[%s3555 + $0x61] sm:$0xff]
        %v3597 = vld [vmem:[%s3555 + $0x69] sm:$0xff]
        %v3598 = vld [vmem:[%s3555 + $0x79] sm:$0xff]
        %v3599 = vld [vmem:[%s3555 + $0x81] sm:$0xff]
        %v3600 = vld [vmem:[%s3555 + $0x91] sm:$0xff]
        %v3601 = vld [vmem:[%s3555 + $0x99] sm:$0xff]
        %v3602 = vld [vmem:[%s3555 + $0xa9] sm:$0xff]
        %v3603 = vld [vmem:[%s3555 + $0xb1] sm:$0xff]
        %v3604 = vld [vmem:[%s3555 + $0xc1] sm:$0xff]
        %v3605 = vld [vmem:[%s3555 + $0xc9] sm:$0xff]
        %v3606 = vld [vmem:[%s3555 + $0xd9] sm:$0xff]
        %v3607 = vld [vmem:[%s3555 + $0xe1] sm:$0xff]
        %v3608 = vld [vmem:[%s3555 + $0xf1] sm:$0xff]
        %v3609 = vld [vmem:[%s3555 + $0xf9] sm:$0xff]
        %v3610 = vld [vmem:[%s3555 + $0x109] sm:$0xff]
        %v3611 = vld [vmem:[%s3555 + $0x111] sm:$0xff]
        %v3612 = vld [vmem:[%s3555 + $0x121] sm:$0xff]
        %v3613 = vld [vmem:[%s3555 + $0x129] sm:$0xff]
        %v3614 = vld [vmem:[%s3555 + $0x139] sm:$0xff]
        %v3615 = vld [vmem:[%s3555 + $0x141] sm:$0xff]
        %v3616 = vld [vmem:[%s3555 + $0x151] sm:$0xff]
        %v3617 = vld [vmem:[%s3555 + $0x159] sm:$0xff]
        %v3618 = vld [vmem:[%s3555 + $0x169] sm:$0xff]
        %v3619 = vld [vmem:[%s3555 + $0x171] sm:$0xff]
        %v3620 = vld [vmem:[%s3555 + $0x2] sm:$0xff]
        %v3621 = vld [vmem:[%s3555 + $0xa] sm:$0xff]
        %v3622 = vld [vmem:[%s3555 + $0x1a] sm:$0xff]
        %v3623 = vld [vmem:[%s3555 + $0x22] sm:$0xff]
        %v3624 = vld [vmem:[%s3555 + $0x32] sm:$0xff]
        %v3625 = vld [vmem:[%s3555 + $0x3a] sm:$0xff]
        %v3626 = vld [vmem:[%s3555 + $0x4a] sm:$0xff]
        %v3627 = vld [vmem:[%s3555 + $0x52] sm:$0xff]
        %v3628 = vld [vmem:[%s3555 + $0x62] sm:$0xff]
        %v3629 = vld [vmem:[%s3555 + $0x6a] sm:$0xff]
        %v3630 = vld [vmem:[%s3555 + $0x7a] sm:$0xff]
        %v3631 = vld [vmem:[%s3555 + $0x82] sm:$0xff]
        %v3632 = vld [vmem:[%s3555 + $0x92] sm:$0xff]
        %v3633 = vld [vmem:[%s3555 + $0x9a] sm:$0xff]
        %v3634 = vld [vmem:[%s3555 + $0xaa] sm:$0xff]
        %v3635 = vld [vmem:[%s3555 + $0xb2] sm:$0xff]
        %v3636 = vld [vmem:[%s3555 + $0xc2] sm:$0xff]
        %v3637 = vld [vmem:[%s3555 + $0xca] sm:$0xff]
        %v3638 = vld [vmem:[%s3555 + $0xda] sm:$0xff]
        %v3639 = vld [vmem:[%s3555 + $0xe2] sm:$0xff]
        %v3640 = vld [vmem:[%s3555 + $0xf2] sm:$0xff]
        %v3641 = vld [vmem:[%s3555 + $0xfa] sm:$0xff]
        %v3642 = vld [vmem:[%s3555 + $0x10a] sm:$0xff]
        %v3643 = vld [vmem:[%s3555 + $0x112] sm:$0xff]
        %v3644 = vld [vmem:[%s3555 + $0x122] sm:$0xff]
        %v3645 = vld [vmem:[%s3555 + $0x12a] sm:$0xff]
        %v3646 = vld [vmem:[%s3555 + $0x13a] sm:$0xff]
        %v3647 = vld [vmem:[%s3555 + $0x142] sm:$0xff]
        %v3648 = vld [vmem:[%s3555 + $0x152] sm:$0xff]
        %v3649 = vld [vmem:[%s3555 + $0x15a] sm:$0xff]
        %v3650 = vld [vmem:[%s3555 + $0x16a] sm:$0xff]
        %v3651 = vld [vmem:[%s3555 + $0x172] sm:$0xff]
        %3684 = vrot.lane.b32.xlu0 %v3395, 64
        %v3685 = vpop.permute.xlu0 %3684
        %3686 = vrot.lane.b32.xlu0 %v3396, 64
        %v3687 = vpop.permute.xlu0 %3686
        %3688 = vrot.lane.b32.xlu0 %v3397, 64
        %v3689 = vpop.permute.xlu0 %3688
        %3690 = vrot.lane.b32.xlu0 %v3398, 64
        %v3691 = vpop.permute.xlu0 %3690
        %3692 = vrot.lane.b32.xlu0 %v3399, 64
        %v3693 = vpop.permute.xlu0 %3692
        %3694 = vrot.lane.b32.xlu0 %v3400, 64
        %v3695 = vpop.permute.xlu0 %3694
        %3696 = vrot.lane.b32.xlu0 %v3401, 64
        %v3697 = vpop.permute.xlu0 %3696
        %3698 = vrot.lane.b32.xlu0 %v3402, 64
        %v3699 = vpop.permute.xlu0 %3698
        %3700 = vrot.lane.b32.xlu0 %v3403, 64
        %v3701 = vpop.permute.xlu0 %3700
        %3702 = vrot.lane.b32.xlu0 %v3404, 64
        %v3703 = vpop.permute.xlu0 %3702
        %3704 = vrot.lane.b32.xlu0 %v3405, 64
        %v3705 = vpop.permute.xlu0 %3704
        %3706 = vrot.lane.b32.xlu0 %v3406, 64
        %v3707 = vpop.permute.xlu0 %3706
        %3708 = vrot.lane.b32.xlu0 %v3407, 64
        %v3709 = vpop.permute.xlu0 %3708
        %3710 = vrot.lane.b32.xlu0 %v3408, 64
        %v3711 = vpop.permute.xlu0 %3710
        %3712 = vrot.lane.b32.xlu0 %v3409, 64
        %v3713 = vpop.permute.xlu0 %3712
        %3714 = vrot.lane.b32.xlu0 %v3410, 64
        %v3715 = vpop.permute.xlu0 %3714
        %3716 = vrot.lane.b32.xlu0 %v3411, 64
        %v3717 = vpop.permute.xlu0 %3716
        %3718 = vrot.lane.b32.xlu0 %v3412, 64
        %v3719 = vpop.permute.xlu0 %3718
        %3720 = vrot.lane.b32.xlu0 %v3413, 64
        %v3721 = vpop.permute.xlu0 %3720
        %3722 = vrot.lane.b32.xlu0 %v3414, 64
        %v3723 = vpop.permute.xlu0 %3722
        %3724 = vrot.lane.b32.xlu0 %v3415, 64
        %v3725 = vpop.permute.xlu0 %3724
        %3726 = vrot.lane.b32.xlu0 %v3416, 64
        %v3727 = vpop.permute.xlu0 %3726
        %3728 = vrot.lane.b32.xlu0 %v3417, 64
        %v3729 = vpop.permute.xlu0 %3728
        %3730 = vrot.lane.b32.xlu0 %v3418, 64
        %v3731 = vpop.permute.xlu0 %3730
        %3732 = vrot.lane.b32.xlu0 %v3419, 64
        %v3733 = vpop.permute.xlu0 %3732
        %3734 = vrot.lane.b32.xlu0 %v3420, 64
        %v3735 = vpop.permute.xlu0 %3734
        %3736 = vrot.lane.b32.xlu0 %v3421, 64
        %v3737 = vpop.permute.xlu0 %3736
        %3738 = vrot.lane.b32.xlu0 %v3422, 64
        %v3739 = vpop.permute.xlu0 %3738
        %3740 = vrot.lane.b32.xlu0 %v3423, 64
        %v3741 = vpop.permute.xlu0 %3740
        %3742 = vrot.lane.b32.xlu0 %v3424, 64
        %v3743 = vpop.permute.xlu0 %3742
        %3744 = vrot.lane.b32.xlu0 %v3425, 64
        %v3745 = vpop.permute.xlu0 %3744
        %3746 = vrot.lane.b32.xlu0 %v3426, 64
        %v3747 = vpop.permute.xlu0 %3746
        %3812 = vrot.lane.b32.xlu0 %v3459, 64
        %v3813 = vpop.permute.xlu0 %3812
        %3814 = vrot.lane.b32.xlu0 %v3460, 64
        %v3815 = vpop.permute.xlu0 %3814
        %3816 = vrot.lane.b32.xlu0 %v3461, 64
        %v3817 = vpop.permute.xlu0 %3816
        %3818 = vrot.lane.b32.xlu0 %v3462, 64
        %v3819 = vpop.permute.xlu0 %3818
        %3820 = vrot.lane.b32.xlu0 %v3463, 64
        %v3821 = vpop.permute.xlu0 %3820
        %3822 = vrot.lane.b32.xlu0 %v3464, 64
        %v3823 = vpop.permute.xlu0 %3822
        %3824 = vrot.lane.b32.xlu0 %v3465, 64
        %v3825 = vpop.permute.xlu0 %3824
        %3826 = vrot.lane.b32.xlu0 %v3466, 64
        %v3827 = vpop.permute.xlu0 %3826
        %3828 = vrot.lane.b32.xlu0 %v3467, 64
        %v3829 = vpop.permute.xlu0 %3828
        %3830 = vrot.lane.b32.xlu0 %v3468, 64
        %v3831 = vpop.permute.xlu0 %3830
        %3832 = vrot.lane.b32.xlu0 %v3469, 64
        %v3833 = vpop.permute.xlu0 %3832
        %3834 = vrot.lane.b32.xlu0 %v3470, 64
        %v3835 = vpop.permute.xlu0 %3834
        %3836 = vrot.lane.b32.xlu0 %v3471, 64
        %v3837 = vpop.permute.xlu0 %3836
        %3838 = vrot.lane.b32.xlu0 %v3472, 64
        %v3839 = vpop.permute.xlu0 %3838
        %3840 = vrot.lane.b32.xlu0 %v3473, 64
        %v3841 = vpop.permute.xlu0 %3840
        %3842 = vrot.lane.b32.xlu0 %v3474, 64
        %v3843 = vpop.permute.xlu0 %3842
        %3844 = vrot.lane.b32.xlu0 %v3475, 64
        %v3845 = vpop.permute.xlu0 %3844
        %3846 = vrot.lane.b32.xlu0 %v3476, 64
        %v3847 = vpop.permute.xlu0 %3846
        %3848 = vrot.lane.b32.xlu0 %v3477, 64
        %v3849 = vpop.permute.xlu0 %3848
        %3850 = vrot.lane.b32.xlu0 %v3478, 64
        %v3851 = vpop.permute.xlu0 %3850
        %3852 = vrot.lane.b32.xlu0 %v3479, 64
        %v3853 = vpop.permute.xlu0 %3852
        %3854 = vrot.lane.b32.xlu0 %v3480, 64
        %v3855 = vpop.permute.xlu0 %3854
        %3856 = vrot.lane.b32.xlu0 %v3481, 64
        %v3857 = vpop.permute.xlu0 %3856
        %3858 = vrot.lane.b32.xlu0 %v3482, 64
        %v3859 = vpop.permute.xlu0 %3858
        %3860 = vrot.lane.b32.xlu0 %v3483, 64
        %v3861 = vpop.permute.xlu0 %3860
        %3862 = vrot.lane.b32.xlu0 %v3484, 64
        %v3863 = vpop.permute.xlu0 %3862
        %3864 = vrot.lane.b32.xlu0 %v3485, 64
        %v3865 = vpop.permute.xlu0 %3864
        %3866 = vrot.lane.b32.xlu0 %v3486, 64
        %v3867 = vpop.permute.xlu0 %3866
        %3868 = vrot.lane.b32.xlu0 %v3487, 64
        %v3869 = vpop.permute.xlu0 %3868
        %3870 = vrot.lane.b32.xlu0 %v3488, 64
        %v3871 = vpop.permute.xlu0 %3870
        %3872 = vrot.lane.b32.xlu0 %v3489, 64
        %v3873 = vpop.permute.xlu0 %3872
        %3874 = vrot.lane.b32.xlu0 %v3490, 64
        %v3875 = vpop.permute.xlu0 %3874
        %3940 = vrot.lane.b32.xlu0 %v3523, 64
        %v3941 = vpop.permute.xlu0 %3940
        %3942 = vrot.lane.b32.xlu0 %v3524, 64
        %v3943 = vpop.permute.xlu0 %3942
        %3944 = vrot.lane.b32.xlu0 %v3525, 64
        %v3945 = vpop.permute.xlu0 %3944
        %3946 = vrot.lane.b32.xlu0 %v3526, 64
        %v3947 = vpop.permute.xlu0 %3946
        %3948 = vrot.lane.b32.xlu0 %v3527, 64
        %v3949 = vpop.permute.xlu0 %3948
        %3950 = vrot.lane.b32.xlu0 %v3528, 64
        %v3951 = vpop.permute.xlu0 %3950
        %3952 = vrot.lane.b32.xlu0 %v3529, 64
        %v3953 = vpop.permute.xlu0 %3952
        %3954 = vrot.lane.b32.xlu0 %v3530, 64
        %v3955 = vpop.permute.xlu0 %3954
        %3956 = vrot.lane.b32.xlu0 %v3531, 64
        %v3957 = vpop.permute.xlu0 %3956
        %3958 = vrot.lane.b32.xlu0 %v3532, 64
        %v3959 = vpop.permute.xlu0 %3958
        %3960 = vrot.lane.b32.xlu0 %v3533, 64
        %v3961 = vpop.permute.xlu0 %3960
        %3962 = vrot.lane.b32.xlu0 %v3534, 64
        %v3963 = vpop.permute.xlu0 %3962
        %3964 = vrot.lane.b32.xlu0 %v3535, 64
        %v3965 = vpop.permute.xlu0 %3964
        %3966 = vrot.lane.b32.xlu0 %v3536, 64
        %v3967 = vpop.permute.xlu0 %3966
        %3968 = vrot.lane.b32.xlu0 %v3537, 64
        %v3969 = vpop.permute.xlu0 %3968
        %3970 = vrot.lane.b32.xlu0 %v3538, 64
        %v3971 = vpop.permute.xlu0 %3970
        %3972 = vrot.lane.b32.xlu0 %v3539, 64
        %v3973 = vpop.permute.xlu0 %3972
        %3974 = vrot.lane.b32.xlu0 %v3540, 64
        %v3975 = vpop.permute.xlu0 %3974
        %3976 = vrot.lane.b32.xlu0 %v3541, 64
        %v3977 = vpop.permute.xlu0 %3976
        %3978 = vrot.lane.b32.xlu0 %v3542, 64
        %v3979 = vpop.permute.xlu0 %3978
        %3980 = vrot.lane.b32.xlu0 %v3543, 64
        %v3981 = vpop.permute.xlu0 %3980
        %3982 = vrot.lane.b32.xlu0 %v3544, 64
        %v3983 = vpop.permute.xlu0 %3982
        %3984 = vrot.lane.b32.xlu0 %v3545, 64
        %v3985 = vpop.permute.xlu0 %3984
        %3986 = vrot.lane.b32.xlu0 %v3546, 64
        %v3987 = vpop.permute.xlu0 %3986
        %3988 = vrot.lane.b32.xlu0 %v3547, 64
        %v3989 = vpop.permute.xlu0 %3988
        %3990 = vrot.lane.b32.xlu0 %v3548, 64
        %v3991 = vpop.permute.xlu0 %3990
        %3992 = vrot.lane.b32.xlu0 %v3549, 64
        %v3993 = vpop.permute.xlu0 %3992
        %3994 = vrot.lane.b32.xlu0 %v3550, 64
        %v3995 = vpop.permute.xlu0 %3994
        %3996 = vrot.lane.b32.xlu0 %v3551, 64
        %v3997 = vpop.permute.xlu0 %3996
        %3998 = vrot.lane.b32.xlu0 %v3552, 64
        %v3999 = vpop.permute.xlu0 %3998
        %4000 = vrot.lane.b32.xlu0 %v3553, 64
        %v4001 = vpop.permute.xlu0 %4000
        %4002 = vrot.lane.b32.xlu0 %v3554, 64
        %v4003 = vpop.permute.xlu0 %4002
        %4068 = vrot.lane.b32.xlu0 %v3588, 64
        %v4069 = vpop.permute.xlu0 %4068
        %4070 = vrot.lane.b32.xlu0 %v3589, 64
        %v4071 = vpop.permute.xlu0 %4070
        %4072 = vrot.lane.b32.xlu0 %v3590, 64
        %v4073 = vpop.permute.xlu0 %4072
        %4074 = vrot.lane.b32.xlu0 %v3591, 64
        %v4075 = vpop.permute.xlu0 %4074
        %4076 = vrot.lane.b32.xlu0 %v3592, 64
        %v4077 = vpop.permute.xlu0 %4076
        %4078 = vrot.lane.b32.xlu0 %v3593, 64
        %v4079 = vpop.permute.xlu0 %4078
        %4080 = vrot.lane.b32.xlu0 %v3594, 64
        %v4081 = vpop.permute.xlu0 %4080
        %4082 = vrot.lane.b32.xlu0 %v3595, 64
        %v4083 = vpop.permute.xlu0 %4082
        %4084 = vrot.lane.b32.xlu0 %v3596, 64
        %v4085 = vpop.permute.xlu0 %4084
        %4086 = vrot.lane.b32.xlu0 %v3597, 64
        %v4087 = vpop.permute.xlu0 %4086
        %4088 = vrot.lane.b32.xlu0 %v3598, 64
        %v4089 = vpop.permute.xlu0 %4088
        %4090 = vrot.lane.b32.xlu0 %v3599, 64
        %v4091 = vpop.permute.xlu0 %4090
        %4092 = vrot.lane.b32.xlu0 %v3600, 64
        %v4093 = vpop.permute.xlu0 %4092
        %4094 = vrot.lane.b32.xlu0 %v3601, 64
        %v4095 = vpop.permute.xlu0 %4094
        %4096 = vrot.lane.b32.xlu0 %v3602, 64
        %v4097 = vpop.permute.xlu0 %4096
        %4098 = vrot.lane.b32.xlu0 %v3603, 64
        %v4099 = vpop.permute.xlu0 %4098
        %4100 = vrot.lane.b32.xlu0 %v3604, 64
        %v4101 = vpop.permute.xlu0 %4100
        %4102 = vrot.lane.b32.xlu0 %v3605, 64
        %v4103 = vpop.permute.xlu0 %4102
        %4104 = vrot.lane.b32.xlu0 %v3606, 64
        %v4105 = vpop.permute.xlu0 %4104
        %4106 = vrot.lane.b32.xlu0 %v3607, 64
        %v4107 = vpop.permute.xlu0 %4106
        %4108 = vrot.lane.b32.xlu0 %v3608, 64
        %v4109 = vpop.permute.xlu0 %4108
        %4110 = vrot.lane.b32.xlu0 %v3609, 64
        %v4111 = vpop.permute.xlu0 %4110
        %4112 = vrot.lane.b32.xlu0 %v3610, 64
        %v4113 = vpop.permute.xlu0 %4112
        %4114 = vrot.lane.b32.xlu0 %v3611, 64
        %v4115 = vpop.permute.xlu0 %4114
        %4116 = vrot.lane.b32.xlu0 %v3612, 64
        %v4117 = vpop.permute.xlu0 %4116
        %4118 = vrot.lane.b32.xlu0 %v3613, 64
        %v4119 = vpop.permute.xlu0 %4118
        %4120 = vrot.lane.b32.xlu0 %v3614, 64
        %v4121 = vpop.permute.xlu0 %4120
        %4122 = vrot.lane.b32.xlu0 %v3615, 64
        %v4123 = vpop.permute.xlu0 %4122
        %4124 = vrot.lane.b32.xlu0 %v3616, 64
        %v4125 = vpop.permute.xlu0 %4124
        %4126 = vrot.lane.b32.xlu0 %v3617, 64
        %v4127 = vpop.permute.xlu0 %4126
        %4128 = vrot.lane.b32.xlu0 %v3618, 64
        %v4129 = vpop.permute.xlu0 %4128
        %4130 = vrot.lane.b32.xlu0 %v3619, 64
        %v4131 = vpop.permute.xlu0 %4130
        %v4164 = vsel %vm3156, %v3363, %v3685
        %v4165 = vsel %vm3156, %v3364, %v3687
        %v4166 = vsel %vm3156, %v3365, %v3689
        %v4167 = vsel %vm3156, %v3366, %v3691
        %v4168 = vsel %vm3156, %v3367, %v3693
        %v4169 = vsel %vm3156, %v3368, %v3695
        %v4170 = vsel %vm3156, %v3369, %v3697
        %v4171 = vsel %vm3156, %v3370, %v3699
        %v4172 = vsel %vm3156, %v3371, %v3701
        %v4173 = vsel %vm3156, %v3372, %v3703
        %v4174 = vsel %vm3156, %v3373, %v3705
        %v4175 = vsel %vm3156, %v3374, %v3707
        %v4176 = vsel %vm3156, %v3375, %v3709
        %v4177 = vsel %vm3156, %v3376, %v3711
        %v4178 = vsel %vm3156, %v3377, %v3713
        %v4179 = vsel %vm3156, %v3378, %v3715
        %v4180 = vsel %vm3156, %v3379, %v3717
        %v4181 = vsel %vm3156, %v3380, %v3719
        %v4182 = vsel %vm3156, %v3381, %v3721
        %v4183 = vsel %vm3156, %v3382, %v3723
        %v4184 = vsel %vm3156, %v3383, %v3725
        %v4185 = vsel %vm3156, %v3384, %v3727
        %v4186 = vsel %vm3156, %v3385, %v3729
        %v4187 = vsel %vm3156, %v3386, %v3731
        %v4188 = vsel %vm3156, %v3387, %v3733
        %v4189 = vsel %vm3156, %v3388, %v3735
        %v4190 = vsel %vm3156, %v3389, %v3737
        %v4191 = vsel %vm3156, %v3390, %v3739
        %v4192 = vsel %vm3156, %v3391, %v3741
        %v4193 = vsel %vm3156, %v3392, %v3743
        %v4194 = vsel %vm3156, %v3393, %v3745
        %v4195 = vsel %vm3156, %v3394, %v3747
        %v4196 = vsel %vm3156, %v3427, %v3813
        %v4197 = vsel %vm3156, %v3428, %v3815
        %v4198 = vsel %vm3156, %v3429, %v3817
        %v4199 = vsel %vm3156, %v3430, %v3819
        %v4200 = vsel %vm3156, %v3431, %v3821
        %v4201 = vsel %vm3156, %v3432, %v3823
        %v4202 = vsel %vm3156, %v3433, %v3825
        %v4203 = vsel %vm3156, %v3434, %v3827
        %v4204 = vsel %vm3156, %v3435, %v3829
        %v4205 = vsel %vm3156, %v3436, %v3831
        %v4206 = vsel %vm3156, %v3437, %v3833
        %v4207 = vsel %vm3156, %v3438, %v3835
        %v4208 = vsel %vm3156, %v3439, %v3837
        %v4209 = vsel %vm3156, %v3440, %v3839
        %v4210 = vsel %vm3156, %v3441, %v3841
        %v4211 = vsel %vm3156, %v3442, %v3843
        %v4212 = vsel %vm3156, %v3443, %v3845
        %v4213 = vsel %vm3156, %v3444, %v3847
        %v4214 = vsel %vm3156, %v3445, %v3849
        %v4215 = vsel %vm3156, %v3446, %v3851
        %v4216 = vsel %vm3156, %v3447, %v3853
        %v4217 = vsel %vm3156, %v3448, %v3855
        %v4218 = vsel %vm3156, %v3449, %v3857
        %v4219 = vsel %vm3156, %v3450, %v3859
        %v4220 = vsel %vm3156, %v3451, %v3861
        %v4221 = vsel %vm3156, %v3452, %v3863
        %v4222 = vsel %vm3156, %v3453, %v3865
        %v4223 = vsel %vm3156, %v3454, %v3867
        %v4224 = vsel %vm3156, %v3455, %v3869
        %v4225 = vsel %vm3156, %v3456, %v3871
        %v4226 = vsel %vm3156, %v3457, %v3873
        %v4227 = vsel %vm3156, %v3458, %v3875
        %v4228 = vsel %vm3156, %v3491, %v3941
        %v4229 = vsel %vm3156, %v3492, %v3943
        %v4230 = vsel %vm3156, %v3493, %v3945
        %v4231 = vsel %vm3156, %v3494, %v3947
        %v4232 = vsel %vm3156, %v3495, %v3949
        %v4233 = vsel %vm3156, %v3496, %v3951
        %v4234 = vsel %vm3156, %v3497, %v3953
        %v4235 = vsel %vm3156, %v3498, %v3955
        %v4236 = vsel %vm3156, %v3499, %v3957
        %v4237 = vsel %vm3156, %v3500, %v3959
        %v4238 = vsel %vm3156, %v3501, %v3961
        %v4239 = vsel %vm3156, %v3502, %v3963
        %v4240 = vsel %vm3156, %v3503, %v3965
        %v4241 = vsel %vm3156, %v3504, %v3967
        %v4242 = vsel %vm3156, %v3505, %v3969
        %v4243 = vsel %vm3156, %v3506, %v3971
        %v4244 = vsel %vm3156, %v3507, %v3973
        %v4245 = vsel %vm3156, %v3508, %v3975
        %v4246 = vsel %vm3156, %v3509, %v3977
        %v4247 = vsel %vm3156, %v3510, %v3979
        %v4248 = vsel %vm3156, %v3511, %v3981
        %v4249 = vsel %vm3156, %v3512, %v3983
        %v4250 = vsel %vm3156, %v3513, %v3985
        %v4251 = vsel %vm3156, %v3514, %v3987
        %v4252 = vsel %vm3156, %v3515, %v3989
        %v4253 = vsel %vm3156, %v3516, %v3991
        %v4254 = vsel %vm3156, %v3517, %v3993
        %v4255 = vsel %vm3156, %v3518, %v3995
        %v4256 = vsel %vm3156, %v3519, %v3997
        %v4257 = vsel %vm3156, %v3520, %v3999
        %v4258 = vsel %vm3156, %v3521, %v4001
        %v4259 = vsel %vm3156, %v3522, %v4003
        %v4260 = vsel %vm3156, %v3556, %v4069
        %v4261 = vsel %vm3156, %v3557, %v4071
        %v4262 = vsel %vm3156, %v3558, %v4073
        %v4263 = vsel %vm3156, %v3559, %v4075
        %v4264 = vsel %vm3156, %v3560, %v4077
        %v4265 = vsel %vm3156, %v3561, %v4079
        %v4266 = vsel %vm3156, %v3562, %v4081
        %v4267 = vsel %vm3156, %v3563, %v4083
        %v4268 = vsel %vm3156, %v3564, %v4085
        %v4269 = vsel %vm3156, %v3565, %v4087
        %v4270 = vsel %vm3156, %v3566, %v4089
        %v4271 = vsel %vm3156, %v3567, %v4091
        %v4272 = vsel %vm3156, %v3568, %v4093
        %v4273 = vsel %vm3156, %v3569, %v4095
        %v4274 = vsel %vm3156, %v3570, %v4097
        %v4275 = vsel %vm3156, %v3571, %v4099
        %v4276 = vsel %vm3156, %v3572, %v4101
        %v4277 = vsel %vm3156, %v3573, %v4103
        %v4278 = vsel %vm3156, %v3574, %v4105
        %v4279 = vsel %vm3156, %v3575, %v4107
        %v4280 = vsel %vm3156, %v3576, %v4109
        %v4281 = vsel %vm3156, %v3577, %v4111
        %v4282 = vsel %vm3156, %v3578, %v4113
        %v4283 = vsel %vm3156, %v3579, %v4115
        %v4284 = vsel %vm3156, %v3580, %v4117
        %v4285 = vsel %vm3156, %v3581, %v4119
        %v4286 = vsel %vm3156, %v3582, %v4121
        %v4287 = vsel %vm3156, %v3583, %v4123
        %v4288 = vsel %vm3156, %v3584, %v4125
        %v4289 = vsel %vm3156, %v3585, %v4127
        %v4290 = vsel %vm3156, %v3586, %v4129
        %v4291 = vsel %vm3156, %v3587, %v4131
        %v4292 = vpack.c.bf16 %v4165, %v4164
        %v4293 = vpack.c.bf16 %v4197, %v4196
        %v4294 = vpack.c.bf16 %v4229, %v4228
        %v4295 = vpack.c.bf16 %v4261, %v4260
        %v4296 = vpack.c.bf16 %v3621, %v3620
        %v4297 = vpack.c.bf16 %v4167, %v4166
        %v4298 = vpack.c.bf16 %v4199, %v4198
        %v4299 = vpack.c.bf16 %v4231, %v4230
        %v4300 = vpack.c.bf16 %v4263, %v4262
        %v4301 = vpack.c.bf16 %v3623, %v3622
        %v4302 = vpack.c.bf16 %v4169, %v4168
        %v4303 = vpack.c.bf16 %v4201, %v4200
        %v4304 = vpack.c.bf16 %v4233, %v4232
        %v4305 = vpack.c.bf16 %v4265, %v4264
        %v4306 = vpack.c.bf16 %v3625, %v3624
        %v4307 = vpack.c.bf16 %v4171, %v4170
        %v4308 = vpack.c.bf16 %v4203, %v4202
        %v4309 = vpack.c.bf16 %v4235, %v4234
        %v4310 = vpack.c.bf16 %v4267, %v4266
        %v4311 = vpack.c.bf16 %v3627, %v3626
        %v4312 = vpack.c.bf16 %v4173, %v4172
        %v4313 = vpack.c.bf16 %v4205, %v4204
        %v4314 = vpack.c.bf16 %v4237, %v4236
        %v4315 = vpack.c.bf16 %v4269, %v4268
        %v4316 = vpack.c.bf16 %v3629, %v3628
        %v4317 = vpack.c.bf16 %v4175, %v4174
        %v4318 = vpack.c.bf16 %v4207, %v4206
        %v4319 = vpack.c.bf16 %v4239, %v4238
        %v4320 = vpack.c.bf16 %v4271, %v4270
        %v4321 = vpack.c.bf16 %v3631, %v3630
        %v4322 = vpack.c.bf16 %v4177, %v4176
        %v4323 = vpack.c.bf16 %v4209, %v4208
        %v4324 = vpack.c.bf16 %v4241, %v4240
        %v4325 = vpack.c.bf16 %v4273, %v4272
        %v4326 = vpack.c.bf16 %v3633, %v3632
        %v4327 = vpack.c.bf16 %v4179, %v4178
        %v4328 = vpack.c.bf16 %v4211, %v4210
        %v4329 = vpack.c.bf16 %v4243, %v4242
        %v4330 = vpack.c.bf16 %v4275, %v4274
        %v4331 = vpack.c.bf16 %v3635, %v3634
        %v4332 = vpack.c.bf16 %v4181, %v4180
        %v4333 = vpack.c.bf16 %v4213, %v4212
        %v4334 = vpack.c.bf16 %v4245, %v4244
        %v4335 = vpack.c.bf16 %v4277, %v4276
        %v4336 = vpack.c.bf16 %v3637, %v3636
        %v4337 = vpack.c.bf16 %v4183, %v4182
        %v4338 = vpack.c.bf16 %v4215, %v4214
        %v4339 = vpack.c.bf16 %v4247, %v4246
        %v4340 = vpack.c.bf16 %v4279, %v4278
        %v4341 = vpack.c.bf16 %v3639, %v3638
        %v4342 = vpack.c.bf16 %v4185, %v4184
        %v4343 = vpack.c.bf16 %v4217, %v4216
        %v4344 = vpack.c.bf16 %v4249, %v4248
        %v4345 = vpack.c.bf16 %v4281, %v4280
        %v4346 = vpack.c.bf16 %v3641, %v3640
        %v4347 = vpack.c.bf16 %v4187, %v4186
        %v4348 = vpack.c.bf16 %v4219, %v4218
        %v4349 = vpack.c.bf16 %v4251, %v4250
        %v4350 = vpack.c.bf16 %v4283, %v4282
        %v4351 = vpack.c.bf16 %v3643, %v3642
        %v4352 = vpack.c.bf16 %v4189, %v4188
        %v4353 = vpack.c.bf16 %v4221, %v4220
        %v4354 = vpack.c.bf16 %v4253, %v4252
        %v4355 = vpack.c.bf16 %v4285, %v4284
        %v4356 = vpack.c.bf16 %v3645, %v3644
        %v4357 = vpack.c.bf16 %v4191, %v4190
        %v4358 = vpack.c.bf16 %v4223, %v4222
        %v4359 = vpack.c.bf16 %v4255, %v4254
        %v4360 = vpack.c.bf16 %v4287, %v4286
        %v4361 = vpack.c.bf16 %v3647, %v3646
        %v4362 = vpack.c.bf16 %v4193, %v4192
        %v4363 = vpack.c.bf16 %v4225, %v4224
        %v4364 = vpack.c.bf16 %v4257, %v4256
        %v4365 = vpack.c.bf16 %v4289, %v4288
        %v4366 = vpack.c.bf16 %v3649, %v3648
        %v4367 = vpack.c.bf16 %v4195, %v4194
        %v4368 = vpack.c.bf16 %v4227, %v4226
        %v4369 = vpack.c.bf16 %v4259, %v4258
        %v4370 = vpack.c.bf16 %v4291, %v4290
        %v4371 = vpack.c.bf16 %v3651, %v3650
        %v4372 = vld [vmem:[%s3] sm:$0xf]
        %v4373 = vld [vmem:[%s3 + $0x4] sm:$0xf]
        %v4374 = vld [vmem:[%s3 + $0x8] sm:$0xf]
        %v4375 = vld [vmem:[%s3 + $0xc] sm:$0xf]
        %v4376 = vld [vmem:[%s3 + $0x10] sm:$0xf]
        %v4377 = vld [vmem:[%s3 + $0x14] sm:$0xf]
        %v4378 = vld [vmem:[%s3 + $0x18] sm:$0xf]
        %v4379 = vld [vmem:[%s3 + $0x1c] sm:$0xf]
        %v4380 = vld [vmem:[%s3 + $0x20] sm:$0xf]
        %v4381 = vld [vmem:[%s3 + $0x24] sm:$0xf]
        %v4382 = vld [vmem:[%s3 + $0x28] sm:$0xf]
        %v4383 = vld [vmem:[%s3 + $0x2c] sm:$0xf]
        %v4384 = vld [vmem:[%s3 + $0x30] sm:$0xf]
        %v4385 = vld [vmem:[%s3 + $0x34] sm:$0xf]
        %v4386 = vld [vmem:[%s3 + $0x38] sm:$0xf]
        %v4387 = vld [vmem:[%s3 + $0x3c] sm:$0xf]
        %v4388 = vld [vmem:[%s3 + $0x40] sm:$0xf]
        %v4389 = vld [vmem:[%s3 + $0x44] sm:$0xf]
        %v4390 = vld [vmem:[%s3 + $0x48] sm:$0xf]
        %v4391 = vld [vmem:[%s3 + $0x4c] sm:$0xf]
        %v4392 = vld [vmem:[%s3 + $0x50] sm:$0xf]
        %v4393 = vld [vmem:[%s3 + $0x54] sm:$0xf]
        %v4394 = vld [vmem:[%s3 + $0x58] sm:$0xf]
        %v4395 = vld [vmem:[%s3 + $0x5c] sm:$0xf]
        %v4396 = vld [vmem:[%s3 + $0x60] sm:$0xf]
        %v4397 = vld [vmem:[%s3 + $0x64] sm:$0xf]
        %v4398 = vld [vmem:[%s3 + $0x68] sm:$0xf]
        %v4399 = vld [vmem:[%s3 + $0x6c] sm:$0xf]
        %v4400 = vld [vmem:[%s3 + $0x70] sm:$0xf]
        %v4401 = vld [vmem:[%s3 + $0x74] sm:$0xf]
        %v4402 = vld [vmem:[%s3 + $0x78] sm:$0xf]
        %v4403 = vld [vmem:[%s3 + $0x7c] sm:$0xf]
        %v4404 = vld [vmem:[%s3 + $0x80] sm:$0xf]
        %v4405 = vld [vmem:[%s3 + $0x84] sm:$0xf]
        %v4406 = vld [vmem:[%s3 + $0x88] sm:$0xf]
        %v4407 = vld [vmem:[%s3 + $0x8c] sm:$0xf]
        %v4408 = vld [vmem:[%s3 + $0x90] sm:$0xf]
        %v4409 = vld [vmem:[%s3 + $0x94] sm:$0xf]
        %v4410 = vld [vmem:[%s3 + $0x98] sm:$0xf]
        %v4411 = vld [vmem:[%s3 + $0x9c] sm:$0xf]
        %v4412 = vld [vmem:[%s3 + $0xa0] sm:$0xf]
        %v4413 = vld [vmem:[%s3 + $0xa4] sm:$0xf]
        %v4414 = vld [vmem:[%s3 + $0xa8] sm:$0xf]
        %v4415 = vld [vmem:[%s3 + $0xac] sm:$0xf]
        %v4416 = vld [vmem:[%s3 + $0xb0] sm:$0xf]
        %v4417 = vld [vmem:[%s3 + $0xb4] sm:$0xf]
        %v4418 = vld [vmem:[%s3 + $0xb8] sm:$0xf]
        %v4419 = vld [vmem:[%s3 + $0xbc] sm:$0xf]
        %v4420 = vld [vmem:[%s3 + $0xc0] sm:$0xf]
        %v4421 = vld [vmem:[%s3 + $0xc4] sm:$0xf]
        %v4422 = vld [vmem:[%s3 + $0xc8] sm:$0xf]
        %v4423 = vld [vmem:[%s3 + $0xcc] sm:$0xf]
        %v4424 = vld [vmem:[%s3 + $0xd0] sm:$0xf]
        %v4425 = vld [vmem:[%s3 + $0xd4] sm:$0xf]
        %v4426 = vld [vmem:[%s3 + $0xd8] sm:$0xf]
        %v4427 = vld [vmem:[%s3 + $0xdc] sm:$0xf]
        %v4428 = vld [vmem:[%s3 + $0xe0] sm:$0xf]
        %v4429 = vld [vmem:[%s3 + $0xe4] sm:$0xf]
        %v4430 = vld [vmem:[%s3 + $0xe8] sm:$0xf]
        %v4431 = vld [vmem:[%s3 + $0xec] sm:$0xf]
        %v4432 = vld [vmem:[%s3 + $0xf0] sm:$0xf]
        %v4433 = vld [vmem:[%s3 + $0xf4] sm:$0xf]
        %v4434 = vld [vmem:[%s3 + $0xf8] sm:$0xf]
        %v4435 = vld [vmem:[%s3 + $0xfc] sm:$0xf]
        %v4436 = vld [vmem:[%s3 + $0x100] sm:$0xf]
        %v4437 = vld [vmem:[%s3 + $0x104] sm:$0xf]
        %v4438 = vld [vmem:[%s3 + $0x108] sm:$0xf]
        %v4439 = vld [vmem:[%s3 + $0x10c] sm:$0xf]
        %v4440 = vld [vmem:[%s3 + $0x110] sm:$0xf]
        %v4441 = vld [vmem:[%s3 + $0x114] sm:$0xf]
        %v4442 = vld [vmem:[%s3 + $0x118] sm:$0xf]
        %v4443 = vld [vmem:[%s3 + $0x11c] sm:$0xf]
        %v4516 = vunpack.c.l.b16 %v4372
        %v4517 = vunpack.c.l.b16 %v4373
        %v4518 = vunpack.c.l.b16 %v4374
        %v4519 = vunpack.c.l.b16 %v4375
        %v4520 = vunpack.c.l.b16 %v4376
        %v4521 = vunpack.c.l.b16 %v4377
        %v4522 = vunpack.c.l.b16 %v4378
        %v4523 = vunpack.c.l.b16 %v4379
        %v4524 = vunpack.c.l.b16 %v4380
        %v4525 = vunpack.c.l.b16 %v4381
        %v4526 = vunpack.c.l.b16 %v4382
        %v4527 = vunpack.c.l.b16 %v4383
        %v4528 = vunpack.c.l.b16 %v4384
        %v4529 = vunpack.c.l.b16 %v4385
        %v4530 = vunpack.c.l.b16 %v4386
        %v4531 = vunpack.c.l.b16 %v4387
        %v4532 = vunpack.c.l.b16 %v4388
        %v4533 = vunpack.c.l.b16 %v4389
        %v4534 = vunpack.c.l.b16 %v4390
        %v4535 = vunpack.c.l.b16 %v4391
        %v4536 = vunpack.c.l.b16 %v4392
        %v4537 = vunpack.c.l.b16 %v4393
        %v4538 = vunpack.c.l.b16 %v4394
        %v4539 = vunpack.c.l.b16 %v4395
        %v4540 = vunpack.c.l.b16 %v4396
        %v4541 = vunpack.c.l.b16 %v4397
        %v4542 = vunpack.c.l.b16 %v4398
        %v4543 = vunpack.c.l.b16 %v4399
        %v4544 = vunpack.c.l.b16 %v4400
        %v4545 = vunpack.c.l.b16 %v4401
        %v4546 = vunpack.c.l.b16 %v4402
        %v4547 = vunpack.c.l.b16 %v4403
        %v4548 = vunpack.c.l.b16 %v4404
        %v4549 = vunpack.c.l.b16 %v4405
        %v4550 = vunpack.c.l.b16 %v4406
        %v4551 = vunpack.c.l.b16 %v4407
        %v4552 = vunpack.c.l.b16 %v4408
        %v4553 = vunpack.c.l.b16 %v4409
        %v4554 = vunpack.c.l.b16 %v4410
        %v4555 = vunpack.c.l.b16 %v4411
        %v4556 = vunpack.c.l.b16 %v4412
        %v4557 = vunpack.c.l.b16 %v4413
        %v4558 = vunpack.c.l.b16 %v4414
        %v4559 = vunpack.c.l.b16 %v4415
        %v4560 = vunpack.c.l.b16 %v4416
        %v4561 = vunpack.c.l.b16 %v4417
        %v4562 = vunpack.c.l.b16 %v4418
        %v4563 = vunpack.c.l.b16 %v4419
        %v4564 = vunpack.c.l.b16 %v4420
        %v4565 = vunpack.c.l.b16 %v4421
        %v4566 = vunpack.c.l.b16 %v4422
        %v4567 = vunpack.c.l.b16 %v4423
        %v4568 = vunpack.c.l.b16 %v4424
        %v4569 = vunpack.c.l.b16 %v4425
        %v4570 = vunpack.c.l.b16 %v4426
        %v4571 = vunpack.c.l.b16 %v4427
        %v4572 = vunpack.c.l.b16 %v4428
        %v4573 = vunpack.c.l.b16 %v4429
        %v4574 = vunpack.c.l.b16 %v4430
        %v4575 = vunpack.c.l.b16 %v4431
        %v4576 = vunpack.c.l.b16 %v4432
        %v4577 = vunpack.c.l.b16 %v4433
        %v4578 = vunpack.c.l.b16 %v4434
        %v4579 = vunpack.c.l.b16 %v4435
        %v4580 = vunpack.c.l.b16 %v4436
        %v4581 = vunpack.c.l.b16 %v4437
        %v4582 = vunpack.c.l.b16 %v4438
        %v4583 = vunpack.c.l.b16 %v4439
        %v4584 = vunpack.c.l.b16 %v4440
        %v4585 = vunpack.c.l.b16 %v4441
        %v4586 = vunpack.c.l.b16 %v4442
        %v4587 = vunpack.c.l.b16 %v4443
        %v4588 = vpack.c.b16 %v4517, %v4516
        %v4589 = vpack.c.b16 %v4519, %v4518
        %v4590 = vpack.c.b16 %v4521, %v4520
        %v4591 = vpack.c.b16 %v4523, %v4522
        %v4592 = vpack.c.b16 %v4525, %v4524
        %v4593 = vpack.c.b16 %v4527, %v4526
        %v4594 = vpack.c.b16 %v4529, %v4528
        %v4595 = vpack.c.b16 %v4531, %v4530
        %v4596 = vpack.c.b16 %v4533, %v4532
        %v4597 = vpack.c.b16 %v4535, %v4534
        %v4598 = vpack.c.b16 %v4537, %v4536
        %v4599 = vpack.c.b16 %v4539, %v4538
        %v4600 = vpack.c.b16 %v4541, %v4540
        %v4601 = vpack.c.b16 %v4543, %v4542
        %v4602 = vpack.c.b16 %v4545, %v4544
        %v4603 = vpack.c.b16 %v4547, %v4546
        %v4604 = vpack.c.b16 %v4549, %v4548
        %v4605 = vpack.c.b16 %v4551, %v4550
        %v4606 = vpack.c.b16 %v4553, %v4552
        %v4607 = vpack.c.b16 %v4555, %v4554
        %v4608 = vpack.c.b16 %v4557, %v4556
        %v4609 = vpack.c.b16 %v4559, %v4558
        %v4610 = vpack.c.b16 %v4561, %v4560
        %v4611 = vpack.c.b16 %v4563, %v4562
        %v4612 = vpack.c.b16 %v4565, %v4564
        %v4613 = vpack.c.b16 %v4567, %v4566
        %v4614 = vpack.c.b16 %v4569, %v4568
        %v4615 = vpack.c.b16 %v4571, %v4570
        %v4616 = vpack.c.b16 %v4573, %v4572
        %v4617 = vpack.c.b16 %v4575, %v4574
        %v4618 = vpack.c.b16 %v4577, %v4576
        %v4619 = vpack.c.b16 %v4579, %v4578
        %v4620 = vpack.c.b16 %v4581, %v4580
        %v4621 = vpack.c.b16 %v4583, %v4582
        %v4622 = vpack.c.b16 %v4585, %v4584
        %v4623 = vpack.c.b16 %v4587, %v4586
        %v4661 = vsel %vm3156, %v4296, 0
        %v4664 = vsel %vm3156, %v4301, 0
        %v4667 = vsel %vm3156, %v4306, 0
        %v4670 = vsel %vm3156, %v4311, 0
        %v4673 = vsel %vm3156, %v4316, 0
        %v4676 = vsel %vm3156, %v4321, 0
        %v4679 = vsel %vm3156, %v4326, 0
        %v4682 = vsel %vm3156, %v4331, 0
        %v4685 = vsel %vm3156, %v4336, 0
        %v4688 = vsel %vm3156, %v4341, 0
        %v4691 = vsel %vm3156, %v4346, 0
        %v4694 = vsel %vm3156, %v4351, 0
        %v4697 = vsel %vm3156, %v4356, 0
        %v4700 = vsel %vm3156, %v4361, 0
        %v4703 = vsel %vm3156, %v4366, 0
        %v4706 = vsel %vm3156, %v4371, 0
        %4708 = vmatpush.bf16.msra.mxu0 %v4595
        %4709 = vmatpush.bf16.msra.mxu0 %v4594
        %4710 = vmatpush.bf16.msra.mxu0 %v4593
        %4711 = vmatpush.bf16.msra.mxu0 %v4592
        %4712 = vmatpush.bf16.msra.mxu0 %v4591
        %4713 = vmatpush.bf16.msra.mxu0 %v4590
        %4714 = vmatpush.bf16.msra.mxu0 %v4589
        %4715 = vmatpush.bf16.msra.mxu0 %v4588
        %4716 = vmatmul.bf16.gmra.mxu0 %v4292
        %v4717 = vpop.f32.mrf.mxu0
        %v4718 = vadd.f32 0.0, %v4717
        %v4719 = vpop.f32.mrf.mxu0
        %v4720 = vadd.f32 0.0, %v4719
        %4721 = vmatmul.bf16.gmra.mxu0 %v4297
        %v4722 = vpop.f32.mrf.mxu0
        %v4723 = vadd.f32 0.0, %v4722
        %v4724 = vpop.f32.mrf.mxu0
        %v4725 = vadd.f32 0.0, %v4724
        %4726 = vmatmul.bf16.gmra.mxu0 %v4302
        %v4727 = vpop.f32.mrf.mxu0
        %v4728 = vadd.f32 0.0, %v4727
        %v4729 = vpop.f32.mrf.mxu0
        %v4730 = vadd.f32 0.0, %v4729
        %4731 = vmatmul.bf16.gmra.mxu0 %v4307
        %v4732 = vpop.f32.mrf.mxu0
        %v4733 = vadd.f32 0.0, %v4732
        %v4734 = vpop.f32.mrf.mxu0
        %v4735 = vadd.f32 0.0, %v4734
        %4736 = vmatmul.bf16.gmra.mxu0 %v4312
        %v4737 = vpop.f32.mrf.mxu0
        %v4738 = vadd.f32 0.0, %v4737
        %v4739 = vpop.f32.mrf.mxu0
        %v4740 = vadd.f32 0.0, %v4739
        %4741 = vmatmul.bf16.gmra.mxu0 %v4317
        %v4742 = vpop.f32.mrf.mxu0
        %v4743 = vadd.f32 0.0, %v4742
        %v4744 = vpop.f32.mrf.mxu0
        %v4745 = vadd.f32 0.0, %v4744
        %4746 = vmatmul.bf16.gmra.mxu0 %v4322
        %v4747 = vpop.f32.mrf.mxu0
        %v4748 = vadd.f32 0.0, %v4747
        %v4749 = vpop.f32.mrf.mxu0
        %v4750 = vadd.f32 0.0, %v4749
        %4751 = vmatmul.bf16.gmra.mxu0 %v4327
        %v4752 = vpop.f32.mrf.mxu0
        %v4753 = vadd.f32 0.0, %v4752
        %v4754 = vpop.f32.mrf.mxu0
        %v4755 = vadd.f32 0.0, %v4754
        %4756 = vmatmul.bf16.gmra.mxu0 %v4332
        %v4757 = vpop.f32.mrf.mxu0
        %v4758 = vadd.f32 0.0, %v4757
        %v4759 = vpop.f32.mrf.mxu0
        %v4760 = vadd.f32 0.0, %v4759
        %4761 = vmatmul.bf16.gmra.mxu0 %v4337
        %v4762 = vpop.f32.mrf.mxu0
        %v4763 = vadd.f32 0.0, %v4762
        %v4764 = vpop.f32.mrf.mxu0
        %v4765 = vadd.f32 0.0, %v4764
        %4766 = vmatmul.bf16.gmra.mxu0 %v4342
        %v4767 = vpop.f32.mrf.mxu0
        %v4768 = vadd.f32 0.0, %v4767
        %v4769 = vpop.f32.mrf.mxu0
        %v4770 = vadd.f32 0.0, %v4769
        %4771 = vmatmul.bf16.gmra.mxu0 %v4347
        %v4772 = vpop.f32.mrf.mxu0
        %v4773 = vadd.f32 0.0, %v4772
        %v4774 = vpop.f32.mrf.mxu0
        %v4775 = vadd.f32 0.0, %v4774
        %4776 = vmatmul.bf16.gmra.mxu0 %v4352
        %v4777 = vpop.f32.mrf.mxu0
        %v4778 = vadd.f32 0.0, %v4777
        %v4779 = vpop.f32.mrf.mxu0
        %v4780 = vadd.f32 0.0, %v4779
        %4781 = vmatmul.bf16.gmra.mxu0 %v4357
        %v4782 = vpop.f32.mrf.mxu0
        %v4783 = vadd.f32 0.0, %v4782
        %v4784 = vpop.f32.mrf.mxu0
        %v4785 = vadd.f32 0.0, %v4784
        %4786 = vmatmul.bf16.gmra.mxu0 %v4362
        %v4787 = vpop.f32.mrf.mxu0
        %v4788 = vadd.f32 0.0, %v4787
        %v4789 = vpop.f32.mrf.mxu0
        %v4790 = vadd.f32 0.0, %v4789
        %4791 = vmatmul.bf16.gmra.mxu0 %v4367
        %v4792 = vpop.f32.mrf.mxu0
        %v4793 = vadd.f32 0.0, %v4792
        %v4794 = vpop.f32.mrf.mxu0
        %v4795 = vadd.f32 0.0, %v4794
        %4796 = vdwg.mxu0
        %4797 = vmatpush.bf16.msra.mxu0 %v4603
        %4798 = vmatpush.bf16.msra.mxu0 %v4602
        %4799 = vmatpush.bf16.msra.mxu0 %v4601
        %4800 = vmatpush.bf16.msra.mxu0 %v4600
        %4801 = vmatpush.bf16.msra.mxu0 %v4599
        %4802 = vmatpush.bf16.msra.mxu0 %v4598
        %4803 = vmatpush.bf16.msra.mxu0 %v4597
        %4804 = vmatpush.bf16.msra.mxu0 %v4596
        %4805 = vmatmul.bf16.gmra.mxu0 %v4293
        %v4806 = vpop.f32.mrf.mxu0
        %v4807 = vadd.f32 %v4718, %v4806
        %v4808 = vpop.f32.mrf.mxu0
        %v4809 = vadd.f32 %v4720, %v4808
        %4810 = vmatmul.bf16.gmra.mxu0 %v4298
        %v4811 = vpop.f32.mrf.mxu0
        %v4812 = vadd.f32 %v4723, %v4811
        %v4813 = vpop.f32.mrf.mxu0
        %v4814 = vadd.f32 %v4725, %v4813
        %4815 = vmatmul.bf16.gmra.mxu0 %v4303
        %v4816 = vpop.f32.mrf.mxu0
        %v4817 = vadd.f32 %v4728, %v4816
        %v4818 = vpop.f32.mrf.mxu0
        %v4819 = vadd.f32 %v4730, %v4818
        %4820 = vmatmul.bf16.gmra.mxu0 %v4308
        %v4821 = vpop.f32.mrf.mxu0
        %v4822 = vadd.f32 %v4733, %v4821
        %v4823 = vpop.f32.mrf.mxu0
        %v4824 = vadd.f32 %v4735, %v4823
        %4825 = vmatmul.bf16.gmra.mxu0 %v4313
        %v4826 = vpop.f32.mrf.mxu0
        %v4827 = vadd.f32 %v4738, %v4826
        %v4828 = vpop.f32.mrf.mxu0
        %v4829 = vadd.f32 %v4740, %v4828
        %4830 = vmatmul.bf16.gmra.mxu0 %v4318
        %v4831 = vpop.f32.mrf.mxu0
        %v4832 = vadd.f32 %v4743, %v4831
        %v4833 = vpop.f32.mrf.mxu0
        %v4834 = vadd.f32 %v4745, %v4833
        %4835 = vmatmul.bf16.gmra.mxu0 %v4323
        %v4836 = vpop.f32.mrf.mxu0
        %v4837 = vadd.f32 %v4748, %v4836
        %v4838 = vpop.f32.mrf.mxu0
        %v4839 = vadd.f32 %v4750, %v4838
        %4840 = vmatmul.bf16.gmra.mxu0 %v4328
        %v4841 = vpop.f32.mrf.mxu0
        %v4842 = vadd.f32 %v4753, %v4841
        %v4843 = vpop.f32.mrf.mxu0
        %v4844 = vadd.f32 %v4755, %v4843
        %4845 = vmatmul.bf16.gmra.mxu0 %v4333
        %v4846 = vpop.f32.mrf.mxu0
        %v4847 = vadd.f32 %v4758, %v4846
        %v4848 = vpop.f32.mrf.mxu0
        %v4849 = vadd.f32 %v4760, %v4848
        %4850 = vmatmul.bf16.gmra.mxu0 %v4338
        %v4851 = vpop.f32.mrf.mxu0
        %v4852 = vadd.f32 %v4763, %v4851
        %v4853 = vpop.f32.mrf.mxu0
        %v4854 = vadd.f32 %v4765, %v4853
        %4855 = vmatmul.bf16.gmra.mxu0 %v4343
        %v4856 = vpop.f32.mrf.mxu0
        %v4857 = vadd.f32 %v4768, %v4856
        %v4858 = vpop.f32.mrf.mxu0
        %v4859 = vadd.f32 %v4770, %v4858
        %4860 = vmatmul.bf16.gmra.mxu0 %v4348
        %v4861 = vpop.f32.mrf.mxu0
        %v4862 = vadd.f32 %v4773, %v4861
        %v4863 = vpop.f32.mrf.mxu0
        %v4864 = vadd.f32 %v4775, %v4863
        %4865 = vmatmul.bf16.gmra.mxu0 %v4353
        %v4866 = vpop.f32.mrf.mxu0
        %v4867 = vadd.f32 %v4778, %v4866
        %v4868 = vpop.f32.mrf.mxu0
        %v4869 = vadd.f32 %v4780, %v4868
        %4870 = vmatmul.bf16.gmra.mxu0 %v4358
        %v4871 = vpop.f32.mrf.mxu0
        %v4872 = vadd.f32 %v4783, %v4871
        %v4873 = vpop.f32.mrf.mxu0
        %v4874 = vadd.f32 %v4785, %v4873
        %4875 = vmatmul.bf16.gmra.mxu0 %v4363
        %v4876 = vpop.f32.mrf.mxu0
        %v4877 = vadd.f32 %v4788, %v4876
        %v4878 = vpop.f32.mrf.mxu0
        %v4879 = vadd.f32 %v4790, %v4878
        %4880 = vmatmul.bf16.gmra.mxu0 %v4368
        %v4881 = vpop.f32.mrf.mxu0
        %v4882 = vadd.f32 %v4793, %v4881
        %v4883 = vpop.f32.mrf.mxu0
        %v4884 = vadd.f32 %v4795, %v4883
        %4885 = vdwg.mxu0
        %4886 = vmatpush.bf16.msra.mxu0 %v4611
        %4887 = vmatpush.bf16.msra.mxu0 %v4610
        %4888 = vmatpush.bf16.msra.mxu0 %v4609
        %4889 = vmatpush.bf16.msra.mxu0 %v4608
        %4890 = vmatpush.bf16.msra.mxu0 %v4607
        %4891 = vmatpush.bf16.msra.mxu0 %v4606
        %4892 = vmatpush.bf16.msra.mxu0 %v4605
        %4893 = vmatpush.bf16.msra.mxu0 %v4604
        %4894 = vmatmul.bf16.gmra.mxu0 %v4294
        %v4895 = vpop.f32.mrf.mxu0
        %v4896 = vadd.f32 %v4807, %v4895
        %v4897 = vpop.f32.mrf.mxu0
        %v4898 = vadd.f32 %v4809, %v4897
        %4899 = vmatmul.bf16.gmra.mxu0 %v4299
        %v4900 = vpop.f32.mrf.mxu0
        %v4901 = vadd.f32 %v4812, %v4900
        %v4902 = vpop.f32.mrf.mxu0
        %v4903 = vadd.f32 %v4814, %v4902
        %4904 = vmatmul.bf16.gmra.mxu0 %v4304
        %v4905 = vpop.f32.mrf.mxu0
        %v4906 = vadd.f32 %v4817, %v4905
        %v4907 = vpop.f32.mrf.mxu0
        %v4908 = vadd.f32 %v4819, %v4907
        %4909 = vmatmul.bf16.gmra.mxu0 %v4309
        %v4910 = vpop.f32.mrf.mxu0
        %v4911 = vadd.f32 %v4822, %v4910
        %v4912 = vpop.f32.mrf.mxu0
        %v4913 = vadd.f32 %v4824, %v4912
        %4914 = vmatmul.bf16.gmra.mxu0 %v4314
        %v4915 = vpop.f32.mrf.mxu0
        %v4916 = vadd.f32 %v4827, %v4915
        %v4917 = vpop.f32.mrf.mxu0
        %v4918 = vadd.f32 %v4829, %v4917
        %4919 = vmatmul.bf16.gmra.mxu0 %v4319
        %v4920 = vpop.f32.mrf.mxu0
        %v4921 = vadd.f32 %v4832, %v4920
        %v4922 = vpop.f32.mrf.mxu0
        %v4923 = vadd.f32 %v4834, %v4922
        %4924 = vmatmul.bf16.gmra.mxu0 %v4324
        %v4925 = vpop.f32.mrf.mxu0
        %v4926 = vadd.f32 %v4837, %v4925
        %v4927 = vpop.f32.mrf.mxu0
        %v4928 = vadd.f32 %v4839, %v4927
        %4929 = vmatmul.bf16.gmra.mxu0 %v4329
        %v4930 = vpop.f32.mrf.mxu0
        %v4931 = vadd.f32 %v4842, %v4930
        %v4932 = vpop.f32.mrf.mxu0
        %v4933 = vadd.f32 %v4844, %v4932
        %4934 = vmatmul.bf16.gmra.mxu0 %v4334
        %v4935 = vpop.f32.mrf.mxu0
        %v4936 = vadd.f32 %v4847, %v4935
        %v4937 = vpop.f32.mrf.mxu0
        %v4938 = vadd.f32 %v4849, %v4937
        %4939 = vmatmul.bf16.gmra.mxu0 %v4339
        %v4940 = vpop.f32.mrf.mxu0
        %v4941 = vadd.f32 %v4852, %v4940
        %v4942 = vpop.f32.mrf.mxu0
        %v4943 = vadd.f32 %v4854, %v4942
        %4944 = vmatmul.bf16.gmra.mxu0 %v4344
        %v4945 = vpop.f32.mrf.mxu0
        %v4946 = vadd.f32 %v4857, %v4945
        %v4947 = vpop.f32.mrf.mxu0
        %v4948 = vadd.f32 %v4859, %v4947
        %4949 = vmatmul.bf16.gmra.mxu0 %v4349
        %v4950 = vpop.f32.mrf.mxu0
        %v4951 = vadd.f32 %v4862, %v4950
        %v4952 = vpop.f32.mrf.mxu0
        %v4953 = vadd.f32 %v4864, %v4952
        %4954 = vmatmul.bf16.gmra.mxu0 %v4354
        %v4955 = vpop.f32.mrf.mxu0
        %v4956 = vadd.f32 %v4867, %v4955
        %v4957 = vpop.f32.mrf.mxu0
        %v4958 = vadd.f32 %v4869, %v4957
        %4959 = vmatmul.bf16.gmra.mxu0 %v4359
        %v4960 = vpop.f32.mrf.mxu0
        %v4961 = vadd.f32 %v4872, %v4960
        %v4962 = vpop.f32.mrf.mxu0
        %v4963 = vadd.f32 %v4874, %v4962
        %4964 = vmatmul.bf16.gmra.mxu0 %v4364
        %v4965 = vpop.f32.mrf.mxu0
        %v4966 = vadd.f32 %v4877, %v4965
        %v4967 = vpop.f32.mrf.mxu0
        %v4968 = vadd.f32 %v4879, %v4967
        %4969 = vmatmul.bf16.gmra.mxu0 %v4369
        %v4970 = vpop.f32.mrf.mxu0
        %v4971 = vadd.f32 %v4882, %v4970
        %v4972 = vpop.f32.mrf.mxu0
        %v4973 = vadd.f32 %v4884, %v4972
        %4974 = vdwg.mxu0
        %4975 = vmatpush.bf16.msra.mxu0 %v4619
        %4976 = vmatpush.bf16.msra.mxu0 %v4618
        %4977 = vmatpush.bf16.msra.mxu0 %v4617
        %4978 = vmatpush.bf16.msra.mxu0 %v4616
        %4979 = vmatpush.bf16.msra.mxu0 %v4615
        %4980 = vmatpush.bf16.msra.mxu0 %v4614
        %4981 = vmatpush.bf16.msra.mxu0 %v4613
        %4982 = vmatpush.bf16.msra.mxu0 %v4612
        %4983 = vmatmul.bf16.gmra.mxu0 %v4295
        %v4984 = vpop.f32.mrf.mxu0
        %v4985 = vadd.f32 %v4896, %v4984
        %v4986 = vpop.f32.mrf.mxu0
        %v4987 = vadd.f32 %v4898, %v4986
        %4988 = vmatmul.bf16.gmra.mxu0 %v4300
        %v4989 = vpop.f32.mrf.mxu0
        %v4990 = vadd.f32 %v4901, %v4989
        %v4991 = vpop.f32.mrf.mxu0
        %v4992 = vadd.f32 %v4903, %v4991
        %4993 = vmatmul.bf16.gmra.mxu0 %v4305
        %v4994 = vpop.f32.mrf.mxu0
        %v4995 = vadd.f32 %v4906, %v4994
        %v4996 = vpop.f32.mrf.mxu0
        %v4997 = vadd.f32 %v4908, %v4996
        %4998 = vmatmul.bf16.gmra.mxu0 %v4310
        %v4999 = vpop.f32.mrf.mxu0
        %v5000 = vadd.f32 %v4911, %v4999
        %v5001 = vpop.f32.mrf.mxu0
        %v5002 = vadd.f32 %v4913, %v5001
        %5003 = vmatmul.bf16.gmra.mxu0 %v4315
        %v5004 = vpop.f32.mrf.mxu0
        %v5005 = vadd.f32 %v4916, %v5004
        %v5006 = vpop.f32.mrf.mxu0
        %v5007 = vadd.f32 %v4918, %v5006
        %5008 = vmatmul.bf16.gmra.mxu0 %v4320
        %v5009 = vpop.f32.mrf.mxu0
        %v5010 = vadd.f32 %v4921, %v5009
        %v5011 = vpop.f32.mrf.mxu0
        %v5012 = vadd.f32 %v4923, %v5011
        %5013 = vmatmul.bf16.gmra.mxu0 %v4325
        %v5014 = vpop.f32.mrf.mxu0
        %v5015 = vadd.f32 %v4926, %v5014
        %v5016 = vpop.f32.mrf.mxu0
        %v5017 = vadd.f32 %v4928, %v5016
        %5018 = vmatmul.bf16.gmra.mxu0 %v4330
        %v5019 = vpop.f32.mrf.mxu0
        %v5020 = vadd.f32 %v4931, %v5019
        %v5021 = vpop.f32.mrf.mxu0
        %v5022 = vadd.f32 %v4933, %v5021
        %5023 = vmatmul.bf16.gmra.mxu0 %v4335
        %v5024 = vpop.f32.mrf.mxu0
        %v5025 = vadd.f32 %v4936, %v5024
        %v5026 = vpop.f32.mrf.mxu0
        %v5027 = vadd.f32 %v4938, %v5026
        %5028 = vmatmul.bf16.gmra.mxu0 %v4340
        %v5029 = vpop.f32.mrf.mxu0
        %v5030 = vadd.f32 %v4941, %v5029
        %v5031 = vpop.f32.mrf.mxu0
        %v5032 = vadd.f32 %v4943, %v5031
        %5033 = vmatmul.bf16.gmra.mxu0 %v4345
        %v5034 = vpop.f32.mrf.mxu0
        %v5035 = vadd.f32 %v4946, %v5034
        %v5036 = vpop.f32.mrf.mxu0
        %v5037 = vadd.f32 %v4948, %v5036
        %5038 = vmatmul.bf16.gmra.mxu0 %v4350
        %v5039 = vpop.f32.mrf.mxu0
        %v5040 = vadd.f32 %v4951, %v5039
        %v5041 = vpop.f32.mrf.mxu0
        %v5042 = vadd.f32 %v4953, %v5041
        %5043 = vmatmul.bf16.gmra.mxu0 %v4355
        %v5044 = vpop.f32.mrf.mxu0
        %v5045 = vadd.f32 %v4956, %v5044
        %v5046 = vpop.f32.mrf.mxu0
        %v5047 = vadd.f32 %v4958, %v5046
        %5048 = vmatmul.bf16.gmra.mxu0 %v4360
        %v5049 = vpop.f32.mrf.mxu0
        %v5050 = vadd.f32 %v4961, %v5049
        %v5051 = vpop.f32.mrf.mxu0
        %v5052 = vadd.f32 %v4963, %v5051
        %5053 = vmatmul.bf16.gmra.mxu0 %v4365
        %v5054 = vpop.f32.mrf.mxu0
        %v5055 = vadd.f32 %v4966, %v5054
        %v5056 = vpop.f32.mrf.mxu0
        %v5057 = vadd.f32 %v4968, %v5056
        %5058 = vmatmul.bf16.gmra.mxu0 %v4370
        %v5059 = vpop.f32.mrf.mxu0
        %v5060 = vadd.f32 %v4971, %v5059
        %v5061 = vpop.f32.mrf.mxu0
        %v5062 = vadd.f32 %v4973, %v5061
        %5063 = vdwg.mxu0
        %5064 = vmatpush.bf16.msra.mxu0 0
        %5065 = vmatpush.bf16.msra.mxu0 0
        %5066 = vmatpush.bf16.msra.mxu0 0
        %5067 = vmatpush.bf16.msra.mxu0 0
        %5068 = vmatpush.bf16.msra.mxu0 %v4623
        %5069 = vmatpush.bf16.msra.mxu0 %v4622
        %5070 = vmatpush.bf16.msra.mxu0 %v4621
        %5071 = vmatpush.bf16.msra.mxu0 %v4620
        %5072 = vmatmul.bf16.gmra.mxu0 %v4661
        %v5073 = vpop.f32.mrf.mxu0
        %v5074 = vadd.f32 %v4985, %v5073
        %v5075 = vpop.f32.mrf.mxu0
        %v5076 = vadd.f32 %v4987, %v5075
        %5077 = vmatmul.bf16.gmra.mxu0 %v4664
        %v5078 = vpop.f32.mrf.mxu0
        %v5079 = vadd.f32 %v4990, %v5078
        %v5080 = vpop.f32.mrf.mxu0
        %v5081 = vadd.f32 %v4992, %v5080
        %5082 = vmatmul.bf16.gmra.mxu0 %v4667
        %v5083 = vpop.f32.mrf.mxu0
        %v5084 = vadd.f32 %v4995, %v5083
        %v5085 = vpop.f32.mrf.mxu0
        %v5086 = vadd.f32 %v4997, %v5085
        %5087 = vmatmul.bf16.gmra.mxu0 %v4670
        %v5088 = vpop.f32.mrf.mxu0
        %v5089 = vadd.f32 %v5000, %v5088
        %v5090 = vpop.f32.mrf.mxu0
        %v5091 = vadd.f32 %v5002, %v5090
        %5092 = vmatmul.bf16.gmra.mxu0 %v4673
        %v5093 = vpop.f32.mrf.mxu0
        %v5094 = vadd.f32 %v5005, %v5093
        %v5095 = vpop.f32.mrf.mxu0
        %v5096 = vadd.f32 %v5007, %v5095
        %5097 = vmatmul.bf16.gmra.mxu0 %v4676
        %v5098 = vpop.f32.mrf.mxu0
        %v5099 = vadd.f32 %v5010, %v5098
        %v5100 = vpop.f32.mrf.mxu0
        %v5101 = vadd.f32 %v5012, %v5100
        %5102 = vmatmul.bf16.gmra.mxu0 %v4679
        %v5103 = vpop.f32.mrf.mxu0
        %v5104 = vadd.f32 %v5015, %v5103
        %v5105 = vpop.f32.mrf.mxu0
        %v5106 = vadd.f32 %v5017, %v5105
        %5107 = vmatmul.bf16.gmra.mxu0 %v4682
        %v5108 = vpop.f32.mrf.mxu0
        %v5109 = vadd.f32 %v5020, %v5108
        %v5110 = vpop.f32.mrf.mxu0
        %v5111 = vadd.f32 %v5022, %v5110
        %5112 = vmatmul.bf16.gmra.mxu0 %v4685
        %v5113 = vpop.f32.mrf.mxu0
        %v5114 = vadd.f32 %v5025, %v5113
        %v5115 = vpop.f32.mrf.mxu0
        %v5116 = vadd.f32 %v5027, %v5115
        %5117 = vmatmul.bf16.gmra.mxu0 %v4688
        %v5118 = vpop.f32.mrf.mxu0
        %v5119 = vadd.f32 %v5030, %v5118
        %v5120 = vpop.f32.mrf.mxu0
        %v5121 = vadd.f32 %v5032, %v5120
        %5122 = vmatmul.bf16.gmra.mxu0 %v4691
        %v5123 = vpop.f32.mrf.mxu0
        %v5124 = vadd.f32 %v5035, %v5123
        %v5125 = vpop.f32.mrf.mxu0
        %v5126 = vadd.f32 %v5037, %v5125
        %5127 = vmatmul.bf16.gmra.mxu0 %v4694
        %v5128 = vpop.f32.mrf.mxu0
        %v5129 = vadd.f32 %v5040, %v5128
        %v5130 = vpop.f32.mrf.mxu0
        %v5131 = vadd.f32 %v5042, %v5130
        %5132 = vmatmul.bf16.gmra.mxu0 %v4697
        %v5133 = vpop.f32.mrf.mxu0
        %v5134 = vadd.f32 %v5045, %v5133
        %v5135 = vpop.f32.mrf.mxu0
        %v5136 = vadd.f32 %v5047, %v5135
        %5137 = vmatmul.bf16.gmra.mxu0 %v4700
        %v5138 = vpop.f32.mrf.mxu0
        %v5139 = vadd.f32 %v5050, %v5138
        %v5140 = vpop.f32.mrf.mxu0
        %v5141 = vadd.f32 %v5052, %v5140
        %5142 = vmatmul.bf16.gmra.mxu0 %v4703
        %v5143 = vpop.f32.mrf.mxu0
        %v5144 = vadd.f32 %v5055, %v5143
        %v5145 = vpop.f32.mrf.mxu0
        %v5146 = vadd.f32 %v5057, %v5145
        %5147 = vmatmul.bf16.gmra.mxu0 %v4706
        %v5148 = vpop.f32.mrf.mxu0
        %v5149 = vadd.f32 %v5060, %v5148
        %v5150 = vpop.f32.mrf.mxu0
        %v5151 = vadd.f32 %v5062, %v5150
        %5152 = vdwg.mxu0
        %5185 = vrot.lane.b32.xlu0 %v5074, 64
        %v5186 = vpop.permute.xlu0 %5185
        %5187 = vrot.lane.b32.xlu0 %v5076, 64
        %v5188 = vpop.permute.xlu0 %5187
        %5189 = vrot.lane.b32.xlu0 %v5079, 64
        %v5190 = vpop.permute.xlu0 %5189
        %5191 = vrot.lane.b32.xlu0 %v5081, 64
        %v5192 = vpop.permute.xlu0 %5191
        %5193 = vrot.lane.b32.xlu0 %v5084, 64
        %v5194 = vpop.permute.xlu0 %5193
        %5195 = vrot.lane.b32.xlu0 %v5086, 64
        %v5196 = vpop.permute.xlu0 %5195
        %5197 = vrot.lane.b32.xlu0 %v5089, 64
        %v5198 = vpop.permute.xlu0 %5197
        %5199 = vrot.lane.b32.xlu0 %v5091, 64
        %v5200 = vpop.permute.xlu0 %5199
        %5201 = vrot.lane.b32.xlu0 %v5094, 64
        %v5202 = vpop.permute.xlu0 %5201
        %5203 = vrot.lane.b32.xlu0 %v5096, 64
        %v5204 = vpop.permute.xlu0 %5203
        %5205 = vrot.lane.b32.xlu0 %v5099, 64
        %v5206 = vpop.permute.xlu0 %5205
        %5207 = vrot.lane.b32.xlu0 %v5101, 64
        %v5208 = vpop.permute.xlu0 %5207
        %5209 = vrot.lane.b32.xlu0 %v5104, 64
        %v5210 = vpop.permute.xlu0 %5209
        %5211 = vrot.lane.b32.xlu0 %v5106, 64
        %v5212 = vpop.permute.xlu0 %5211
        %5213 = vrot.lane.b32.xlu0 %v5109, 64
        %v5214 = vpop.permute.xlu0 %5213
        %5215 = vrot.lane.b32.xlu0 %v5111, 64
        %v5216 = vpop.permute.xlu0 %5215
        %5217 = vrot.lane.b32.xlu0 %v5114, 64
        %v5218 = vpop.permute.xlu0 %5217
        %5219 = vrot.lane.b32.xlu0 %v5116, 64
        %v5220 = vpop.permute.xlu0 %5219
        %5221 = vrot.lane.b32.xlu0 %v5119, 64
        %v5222 = vpop.permute.xlu0 %5221
        %5223 = vrot.lane.b32.xlu0 %v5121, 64
        %v5224 = vpop.permute.xlu0 %5223
        %5225 = vrot.lane.b32.xlu0 %v5124, 64
        %v5226 = vpop.permute.xlu0 %5225
        %5227 = vrot.lane.b32.xlu0 %v5126, 64
        %v5228 = vpop.permute.xlu0 %5227
        %5229 = vrot.lane.b32.xlu0 %v5129, 64
        %v5230 = vpop.permute.xlu0 %5229
        %5231 = vrot.lane.b32.xlu0 %v5131, 64
        %v5232 = vpop.permute.xlu0 %5231
        %5233 = vrot.lane.b32.xlu0 %v5134, 64
        %v5234 = vpop.permute.xlu0 %5233
        %5235 = vrot.lane.b32.xlu0 %v5136, 64
        %v5236 = vpop.permute.xlu0 %5235
        %5237 = vrot.lane.b32.xlu0 %v5139, 64
        %v5238 = vpop.permute.xlu0 %5237
        %5239 = vrot.lane.b32.xlu0 %v5141, 64
        %v5240 = vpop.permute.xlu0 %5239
        %5241 = vrot.lane.b32.xlu0 %v5144, 64
        %v5242 = vpop.permute.xlu0 %5241
        %5243 = vrot.lane.b32.xlu0 %v5146, 64
        %v5244 = vpop.permute.xlu0 %5243
        %5245 = vrot.lane.b32.xlu0 %v5149, 64
        %v5246 = vpop.permute.xlu0 %5245
        %5247 = vrot.lane.b32.xlu0 %v5151, 64
        %v5248 = vpop.permute.xlu0 %5247
        %v5281 = vadd.f32 %v2053, %v5186
        %v5282 = vadd.f32 %v2055, %v5188
        %v5283 = vadd.f32 %v2058, %v5190
        %v5284 = vadd.f32 %v2060, %v5192
        %v5285 = vadd.f32 %v2063, %v5194
        %v5286 = vadd.f32 %v2065, %v5196
        %v5287 = vadd.f32 %v2068, %v5198
        %v5288 = vadd.f32 %v2070, %v5200
        %v5289 = vadd.f32 %v2073, %v5202
        %v5290 = vadd.f32 %v2075, %v5204
        %v5291 = vadd.f32 %v2078, %v5206
        %v5292 = vadd.f32 %v2080, %v5208
        %v5293 = vadd.f32 %v2083, %v5210
        %v5294 = vadd.f32 %v2085, %v5212
        %v5295 = vadd.f32 %v2088, %v5214
        %v5296 = vadd.f32 %v2090, %v5216
        %v5297 = vadd.f32 %v2093, %v5218
        %v5298 = vadd.f32 %v2095, %v5220
        %v5299 = vadd.f32 %v2098, %v5222
        %v5300 = vadd.f32 %v2100, %v5224
        %v5301 = vadd.f32 %v2103, %v5226
        %v5302 = vadd.f32 %v2105, %v5228
        %v5303 = vadd.f32 %v2108, %v5230
        %v5304 = vadd.f32 %v2110, %v5232
        %v5305 = vadd.f32 %v2113, %v5234
        %v5306 = vadd.f32 %v2115, %v5236
        %v5307 = vadd.f32 %v2118, %v5238
        %v5308 = vadd.f32 %v2120, %v5240
        %v5309 = vadd.f32 %v2123, %v5242
        %v5310 = vadd.f32 %v2125, %v5244
        %v5311 = vadd.f32 %v2128, %v5246
        %v5312 = vadd.f32 %v2130, %v5248
        %v5313 = vxor.u32 %v5281, 2147483648
        %v5314 = vxor.u32 %v5282, 2147483648
        %v5315 = vxor.u32 %v5283, 2147483648
        %v5316 = vxor.u32 %v5284, 2147483648
        %v5317 = vxor.u32 %v5285, 2147483648
        %v5318 = vxor.u32 %v5286, 2147483648
        %v5319 = vxor.u32 %v5287, 2147483648
        %v5320 = vxor.u32 %v5288, 2147483648
        %v5321 = vxor.u32 %v5289, 2147483648
        %v5322 = vxor.u32 %v5290, 2147483648
        %v5323 = vxor.u32 %v5291, 2147483648
        %v5324 = vxor.u32 %v5292, 2147483648
        %v5325 = vxor.u32 %v5293, 2147483648
        %v5326 = vxor.u32 %v5294, 2147483648
        %v5327 = vxor.u32 %v5295, 2147483648
        %v5328 = vxor.u32 %v5296, 2147483648
        %v5329 = vxor.u32 %v5297, 2147483648
        %v5330 = vxor.u32 %v5298, 2147483648
        %v5331 = vxor.u32 %v5299, 2147483648
        %v5332 = vxor.u32 %v5300, 2147483648
        %v5333 = vxor.u32 %v5301, 2147483648
        %v5334 = vxor.u32 %v5302, 2147483648
        %v5335 = vxor.u32 %v5303, 2147483648
        %v5336 = vxor.u32 %v5304, 2147483648
        %v5337 = vxor.u32 %v5305, 2147483648
        %v5338 = vxor.u32 %v5306, 2147483648
        %v5339 = vxor.u32 %v5307, 2147483648
        %v5340 = vxor.u32 %v5308, 2147483648
        %v5341 = vxor.u32 %v5309, 2147483648
        %v5342 = vxor.u32 %v5310, 2147483648
        %v5343 = vxor.u32 %v5311, 2147483648
        %v5344 = vxor.u32 %v5312, 2147483648
        %v5345 = vmul.f32 %v5313, 1.442695
        %v5346 = vpow.pop %v5345
        %v5347 = vmul.f32 %v5314, 1.442695
        %v5348 = vpow.pop %v5347
        %v5349 = vmul.f32 %v5315, 1.442695
        %v5350 = vpow.pop %v5349
        %v5351 = vmul.f32 %v5316, 1.442695
        %v5352 = vpow.pop %v5351
        %v5353 = vmul.f32 %v5317, 1.442695
        %v5354 = vpow.pop %v5353
        %v5355 = vmul.f32 %v5318, 1.442695
        %v5356 = vpow.pop %v5355
        %v5357 = vmul.f32 %v5319, 1.442695
        %v5358 = vpow.pop %v5357
        %v5359 = vmul.f32 %v5320, 1.442695
        %v5360 = vpow.pop %v5359
        %v5361 = vmul.f32 %v5321, 1.442695
        %v5362 = vpow.pop %v5361
        %v5363 = vmul.f32 %v5322, 1.442695
        %v5364 = vpow.pop %v5363
        %v5365 = vmul.f32 %v5323, 1.442695
        %v5366 = vpow.pop %v5365
        %v5367 = vmul.f32 %v5324, 1.442695
        %v5368 = vpow.pop %v5367
        %v5369 = vmul.f32 %v5325, 1.442695
        %v5370 = vpow.pop %v5369
        %v5371 = vmul.f32 %v5326, 1.442695
        %v5372 = vpow.pop %v5371
        %v5373 = vmul.f32 %v5327, 1.442695
        %v5374 = vpow.pop %v5373
        %v5375 = vmul.f32 %v5328, 1.442695
        %v5376 = vpow.pop %v5375
        %v5377 = vmul.f32 %v5329, 1.442695
        %v5378 = vpow.pop %v5377
        %v5379 = vmul.f32 %v5330, 1.442695
        %v5380 = vpow.pop %v5379
        %v5381 = vmul.f32 %v5331, 1.442695
        %v5382 = vpow.pop %v5381
        %v5383 = vmul.f32 %v5332, 1.442695
        %v5384 = vpow.pop %v5383
        %v5385 = vmul.f32 %v5333, 1.442695
        %v5386 = vpow.pop %v5385
        %v5387 = vmul.f32 %v5334, 1.442695
        %v5388 = vpow.pop %v5387
        %v5389 = vmul.f32 %v5335, 1.442695
        %v5390 = vpow.pop %v5389
        %v5391 = vmul.f32 %v5336, 1.442695
        %v5392 = vpow.pop %v5391
        %v5393 = vmul.f32 %v5337, 1.442695
        %v5394 = vpow.pop %v5393
        %v5395 = vmul.f32 %v5338, 1.442695
        %v5396 = vpow.pop %v5395
        %v5397 = vmul.f32 %v5339, 1.442695
        %v5398 = vpow.pop %v5397
        %v5399 = vmul.f32 %v5340, 1.442695
        %v5400 = vpow.pop %v5399
        %v5401 = vmul.f32 %v5341, 1.442695
        %v5402 = vpow.pop %v5401
        %v5403 = vmul.f32 %v5342, 1.442695
        %v5404 = vpow.pop %v5403
        %v5405 = vmul.f32 %v5343, 1.442695
        %v5406 = vpow.pop %v5405
        %v5407 = vmul.f32 %v5344, 1.442695
        %v5408 = vpow.pop %v5407
        %v5409 = vadd.f32 %v5346, 1.0
        %v5410 = vadd.f32 %v5348, 1.0
        %v5411 = vadd.f32 %v5350, 1.0
        %v5412 = vadd.f32 %v5352, 1.0
        %v5413 = vadd.f32 %v5354, 1.0
        %v5414 = vadd.f32 %v5356, 1.0
        %v5415 = vadd.f32 %v5358, 1.0
        %v5416 = vadd.f32 %v5360, 1.0
        %v5417 = vadd.f32 %v5362, 1.0
        %v5418 = vadd.f32 %v5364, 1.0
        %v5419 = vadd.f32 %v5366, 1.0
        %v5420 = vadd.f32 %v5368, 1.0
        %v5421 = vadd.f32 %v5370, 1.0
        %v5422 = vadd.f32 %v5372, 1.0
        %v5423 = vadd.f32 %v5374, 1.0
        %v5424 = vadd.f32 %v5376, 1.0
        %v5425 = vadd.f32 %v5378, 1.0
        %v5426 = vadd.f32 %v5380, 1.0
        %v5427 = vadd.f32 %v5382, 1.0
        %v5428 = vadd.f32 %v5384, 1.0
        %v5429 = vadd.f32 %v5386, 1.0
        %v5430 = vadd.f32 %v5388, 1.0
        %v5431 = vadd.f32 %v5390, 1.0
        %v5432 = vadd.f32 %v5392, 1.0
        %v5433 = vadd.f32 %v5394, 1.0
        %v5434 = vadd.f32 %v5396, 1.0
        %v5435 = vadd.f32 %v5398, 1.0
        %v5436 = vadd.f32 %v5400, 1.0
        %v5437 = vadd.f32 %v5402, 1.0
        %v5438 = vadd.f32 %v5404, 1.0
        %v5439 = vadd.f32 %v5406, 1.0
        %v5440 = vadd.f32 %v5408, 1.0
        %v5441 = vrcp.pop %v5409
        %v5442 = vmul.f32 %v5409, %v5441
        %v5443 = vsub.f32 1.0, %v5442
        %v5444 = vmul.f32 %v5441, %v5443
        %v5445 = vadd.f32 %v5441, %v5444
        %vm5446 = vweird.f32 %v5409
        %vm5447 = vweird.f32 %v5441
        %vm5448 = vmor %vm5446, %vm5447
        %v5449 = vsel %vm5448, %v5441, %v5445
        %v5450 = vand.u32 2147483647, %v5409
        %vm5451 = vcmp.eq.f32.partialorder %v5450, 8.507059e+37
        %v5452 = vand.u32 %v5409, 2147483648
        %v5453 = vor.u32 1.1754944e-38, %v5452
        %v5454 = vsel %vm5451, %v5453, %v5449
        %v5455 = vmul.f32 1.0, %v5454
        %v5456 = vrcp.pop %v5410
        %v5457 = vmul.f32 %v5410, %v5456
        %v5458 = vsub.f32 1.0, %v5457
        %v5459 = vmul.f32 %v5456, %v5458
        %v5460 = vadd.f32 %v5456, %v5459
        %vm5461 = vweird.f32 %v5410
        %vm5462 = vweird.f32 %v5456
        %vm5463 = vmor %vm5461, %vm5462
        %v5464 = vsel %vm5463, %v5456, %v5460
        %v5465 = vand.u32 2147483647, %v5410
        %vm5466 = vcmp.eq.f32.partialorder %v5465, 8.507059e+37
        %v5467 = vand.u32 %v5410, 2147483648
        %v5468 = vor.u32 1.1754944e-38, %v5467
        %v5469 = vsel %vm5466, %v5468, %v5464
        %v5470 = vmul.f32 1.0, %v5469
        %v5471 = vrcp.pop %v5411
        %v5472 = vmul.f32 %v5411, %v5471
        %v5473 = vsub.f32 1.0, %v5472
        %v5474 = vmul.f32 %v5471, %v5473
        %v5475 = vadd.f32 %v5471, %v5474
        %vm5476 = vweird.f32 %v5411
        %vm5477 = vweird.f32 %v5471
        %vm5478 = vmor %vm5476, %vm5477
        %v5479 = vsel %vm5478, %v5471, %v5475
        %v5480 = vand.u32 2147483647, %v5411
        %vm5481 = vcmp.eq.f32.partialorder %v5480, 8.507059e+37
        %v5482 = vand.u32 %v5411, 2147483648
        %v5483 = vor.u32 1.1754944e-38, %v5482
        %v5484 = vsel %vm5481, %v5483, %v5479
        %v5485 = vmul.f32 1.0, %v5484
        %v5486 = vrcp.pop %v5412
        %v5487 = vmul.f32 %v5412, %v5486
        %v5488 = vsub.f32 1.0, %v5487
        %v5489 = vmul.f32 %v5486, %v5488
        %v5490 = vadd.f32 %v5486, %v5489
        %vm5491 = vweird.f32 %v5412
        %vm5492 = vweird.f32 %v5486
        %vm5493 = vmor %vm5491, %vm5492
        %v5494 = vsel %vm5493, %v5486, %v5490
        %v5495 = vand.u32 2147483647, %v5412
        %vm5496 = vcmp.eq.f32.partialorder %v5495, 8.507059e+37
        %v5497 = vand.u32 %v5412, 2147483648
        %v5498 = vor.u32 1.1754944e-38, %v5497
        %v5499 = vsel %vm5496, %v5498, %v5494
        %v5500 = vmul.f32 1.0, %v5499
        %v5501 = vrcp.pop %v5413
        %v5502 = vmul.f32 %v5413, %v5501
        %v5503 = vsub.f32 1.0, %v5502
        %v5504 = vmul.f32 %v5501, %v5503
        %v5505 = vadd.f32 %v5501, %v5504
        %vm5506 = vweird.f32 %v5413
        %vm5507 = vweird.f32 %v5501
        %vm5508 = vmor %vm5506, %vm5507
        %v5509 = vsel %vm5508, %v5501, %v5505
        %v5510 = vand.u32 2147483647, %v5413
        %vm5511 = vcmp.eq.f32.partialorder %v5510, 8.507059e+37
        %v5512 = vand.u32 %v5413, 2147483648
        %v5513 = vor.u32 1.1754944e-38, %v5512
        %v5514 = vsel %vm5511, %v5513, %v5509
        %v5515 = vmul.f32 1.0, %v5514
        %v5516 = vrcp.pop %v5414
        %v5517 = vmul.f32 %v5414, %v5516
        %v5518 = vsub.f32 1.0, %v5517
        %v5519 = vmul.f32 %v5516, %v5518
        %v5520 = vadd.f32 %v5516, %v5519
        %vm5521 = vweird.f32 %v5414
        %vm5522 = vweird.f32 %v5516
        %vm5523 = vmor %vm5521, %vm5522
        %v5524 = vsel %vm5523, %v5516, %v5520
        %v5525 = vand.u32 2147483647, %v5414
        %vm5526 = vcmp.eq.f32.partialorder %v5525, 8.507059e+37
        %v5527 = vand.u32 %v5414, 2147483648
        %v5528 = vor.u32 1.1754944e-38, %v5527
        %v5529 = vsel %vm5526, %v5528, %v5524
        %v5530 = vmul.f32 1.0, %v5529
        %v5531 = vrcp.pop %v5415
        %v5532 = vmul.f32 %v5415, %v5531
        %v5533 = vsub.f32 1.0, %v5532
        %v5534 = vmul.f32 %v5531, %v5533
        %v5535 = vadd.f32 %v5531, %v5534
        %vm5536 = vweird.f32 %v5415
        %vm5537 = vweird.f32 %v5531
        %vm5538 = vmor %vm5536, %vm5537
        %v5539 = vsel %vm5538, %v5531, %v5535
        %v5540 = vand.u32 2147483647, %v5415
        %vm5541 = vcmp.eq.f32.partialorder %v5540, 8.507059e+37
        %v5542 = vand.u32 %v5415, 2147483648
        %v5543 = vor.u32 1.1754944e-38, %v5542
        %v5544 = vsel %vm5541, %v5543, %v5539
        %v5545 = vmul.f32 1.0, %v5544
        %v5546 = vrcp.pop %v5416
        %v5547 = vmul.f32 %v5416, %v5546
        %v5548 = vsub.f32 1.0, %v5547
        %v5549 = vmul.f32 %v5546, %v5548
        %v5550 = vadd.f32 %v5546, %v5549
        %vm5551 = vweird.f32 %v5416
        %vm5552 = vweird.f32 %v5546
        %vm5553 = vmor %vm5551, %vm5552
        %v5554 = vsel %vm5553, %v5546, %v5550
        %v5555 = vand.u32 2147483647, %v5416
        %vm5556 = vcmp.eq.f32.partialorder %v5555, 8.507059e+37
        %v5557 = vand.u32 %v5416, 2147483648
        %v5558 = vor.u32 1.1754944e-38, %v5557
        %v5559 = vsel %vm5556, %v5558, %v5554
        %v5560 = vmul.f32 1.0, %v5559
        %v5561 = vrcp.pop %v5417
        %v5562 = vmul.f32 %v5417, %v5561
        %v5563 = vsub.f32 1.0, %v5562
        %v5564 = vmul.f32 %v5561, %v5563
        %v5565 = vadd.f32 %v5561, %v5564
        %vm5566 = vweird.f32 %v5417
        %vm5567 = vweird.f32 %v5561
        %vm5568 = vmor %vm5566, %vm5567
        %v5569 = vsel %vm5568, %v5561, %v5565
        %v5570 = vand.u32 2147483647, %v5417
        %vm5571 = vcmp.eq.f32.partialorder %v5570, 8.507059e+37
        %v5572 = vand.u32 %v5417, 2147483648
        %v5573 = vor.u32 1.1754944e-38, %v5572
        %v5574 = vsel %vm5571, %v5573, %v5569
        %v5575 = vmul.f32 1.0, %v5574
        %v5576 = vrcp.pop %v5418
        %v5577 = vmul.f32 %v5418, %v5576
        %v5578 = vsub.f32 1.0, %v5577
        %v5579 = vmul.f32 %v5576, %v5578
        %v5580 = vadd.f32 %v5576, %v5579
        %vm5581 = vweird.f32 %v5418
        %vm5582 = vweird.f32 %v5576
        %vm5583 = vmor %vm5581, %vm5582
        %v5584 = vsel %vm5583, %v5576, %v5580
        %v5585 = vand.u32 2147483647, %v5418
        %vm5586 = vcmp.eq.f32.partialorder %v5585, 8.507059e+37
        %v5587 = vand.u32 %v5418, 2147483648
        %v5588 = vor.u32 1.1754944e-38, %v5587
        %v5589 = vsel %vm5586, %v5588, %v5584
        %v5590 = vmul.f32 1.0, %v5589
        %v5591 = vrcp.pop %v5419
        %v5592 = vmul.f32 %v5419, %v5591
        %v5593 = vsub.f32 1.0, %v5592
        %v5594 = vmul.f32 %v5591, %v5593
        %v5595 = vadd.f32 %v5591, %v5594
        %vm5596 = vweird.f32 %v5419
        %vm5597 = vweird.f32 %v5591
        %vm5598 = vmor %vm5596, %vm5597
        %v5599 = vsel %vm5598, %v5591, %v5595
        %v5600 = vand.u32 2147483647, %v5419
        %vm5601 = vcmp.eq.f32.partialorder %v5600, 8.507059e+37
        %v5602 = vand.u32 %v5419, 2147483648
        %v5603 = vor.u32 1.1754944e-38, %v5602
        %v5604 = vsel %vm5601, %v5603, %v5599
        %v5605 = vmul.f32 1.0, %v5604
        %v5606 = vrcp.pop %v5420
        %v5607 = vmul.f32 %v5420, %v5606
        %v5608 = vsub.f32 1.0, %v5607
        %v5609 = vmul.f32 %v5606, %v5608
        %v5610 = vadd.f32 %v5606, %v5609
        %vm5611 = vweird.f32 %v5420
        %vm5612 = vweird.f32 %v5606
        %vm5613 = vmor %vm5611, %vm5612
        %v5614 = vsel %vm5613, %v5606, %v5610
        %v5615 = vand.u32 2147483647, %v5420
        %vm5616 = vcmp.eq.f32.partialorder %v5615, 8.507059e+37
        %v5617 = vand.u32 %v5420, 2147483648
        %v5618 = vor.u32 1.1754944e-38, %v5617
        %v5619 = vsel %vm5616, %v5618, %v5614
        %v5620 = vmul.f32 1.0, %v5619
        %v5621 = vrcp.pop %v5421
        %v5622 = vmul.f32 %v5421, %v5621
        %v5623 = vsub.f32 1.0, %v5622
        %v5624 = vmul.f32 %v5621, %v5623
        %v5625 = vadd.f32 %v5621, %v5624
        %vm5626 = vweird.f32 %v5421
        %vm5627 = vweird.f32 %v5621
        %vm5628 = vmor %vm5626, %vm5627
        %v5629 = vsel %vm5628, %v5621, %v5625
        %v5630 = vand.u32 2147483647, %v5421
        %vm5631 = vcmp.eq.f32.partialorder %v5630, 8.507059e+37
        %v5632 = vand.u32 %v5421, 2147483648
        %v5633 = vor.u32 1.1754944e-38, %v5632
        %v5634 = vsel %vm5631, %v5633, %v5629
        %v5635 = vmul.f32 1.0, %v5634
        %v5636 = vrcp.pop %v5422
        %v5637 = vmul.f32 %v5422, %v5636
        %v5638 = vsub.f32 1.0, %v5637
        %v5639 = vmul.f32 %v5636, %v5638
        %v5640 = vadd.f32 %v5636, %v5639
        %vm5641 = vweird.f32 %v5422
        %vm5642 = vweird.f32 %v5636
        %vm5643 = vmor %vm5641, %vm5642
        %v5644 = vsel %vm5643, %v5636, %v5640
        %v5645 = vand.u32 2147483647, %v5422
        %vm5646 = vcmp.eq.f32.partialorder %v5645, 8.507059e+37
        %v5647 = vand.u32 %v5422, 2147483648
        %v5648 = vor.u32 1.1754944e-38, %v5647
        %v5649 = vsel %vm5646, %v5648, %v5644
        %v5650 = vmul.f32 1.0, %v5649
        %v5651 = vrcp.pop %v5423
        %v5652 = vmul.f32 %v5423, %v5651
        %v5653 = vsub.f32 1.0, %v5652
        %v5654 = vmul.f32 %v5651, %v5653
        %v5655 = vadd.f32 %v5651, %v5654
        %vm5656 = vweird.f32 %v5423
        %vm5657 = vweird.f32 %v5651
        %vm5658 = vmor %vm5656, %vm5657
        %v5659 = vsel %vm5658, %v5651, %v5655
        %v5660 = vand.u32 2147483647, %v5423
        %vm5661 = vcmp.eq.f32.partialorder %v5660, 8.507059e+37
        %v5662 = vand.u32 %v5423, 2147483648
        %v5663 = vor.u32 1.1754944e-38, %v5662
        %v5664 = vsel %vm5661, %v5663, %v5659
        %v5665 = vmul.f32 1.0, %v5664
        %v5666 = vrcp.pop %v5424
        %v5667 = vmul.f32 %v5424, %v5666
        %v5668 = vsub.f32 1.0, %v5667
        %v5669 = vmul.f32 %v5666, %v5668
        %v5670 = vadd.f32 %v5666, %v5669
        %vm5671 = vweird.f32 %v5424
        %vm5672 = vweird.f32 %v5666
        %vm5673 = vmor %vm5671, %vm5672
        %v5674 = vsel %vm5673, %v5666, %v5670
        %v5675 = vand.u32 2147483647, %v5424
        %vm5676 = vcmp.eq.f32.partialorder %v5675, 8.507059e+37
        %v5677 = vand.u32 %v5424, 2147483648
        %v5678 = vor.u32 1.1754944e-38, %v5677
        %v5679 = vsel %vm5676, %v5678, %v5674
        %v5680 = vmul.f32 1.0, %v5679
        %v5681 = vrcp.pop %v5425
        %v5682 = vmul.f32 %v5425, %v5681
        %v5683 = vsub.f32 1.0, %v5682
        %v5684 = vmul.f32 %v5681, %v5683
        %v5685 = vadd.f32 %v5681, %v5684
        %vm5686 = vweird.f32 %v5425
        %vm5687 = vweird.f32 %v5681
        %vm5688 = vmor %vm5686, %vm5687
        %v5689 = vsel %vm5688, %v5681, %v5685
        %v5690 = vand.u32 2147483647, %v5425
        %vm5691 = vcmp.eq.f32.partialorder %v5690, 8.507059e+37
        %v5692 = vand.u32 %v5425, 2147483648
        %v5693 = vor.u32 1.1754944e-38, %v5692
        %v5694 = vsel %vm5691, %v5693, %v5689
        %v5695 = vmul.f32 1.0, %v5694
        %v5696 = vrcp.pop %v5426
        %v5697 = vmul.f32 %v5426, %v5696
        %v5698 = vsub.f32 1.0, %v5697
        %v5699 = vmul.f32 %v5696, %v5698
        %v5700 = vadd.f32 %v5696, %v5699
        %vm5701 = vweird.f32 %v5426
        %vm5702 = vweird.f32 %v5696
        %vm5703 = vmor %vm5701, %vm5702
        %v5704 = vsel %vm5703, %v5696, %v5700
        %v5705 = vand.u32 2147483647, %v5426
        %vm5706 = vcmp.eq.f32.partialorder %v5705, 8.507059e+37
        %v5707 = vand.u32 %v5426, 2147483648
        %v5708 = vor.u32 1.1754944e-38, %v5707
        %v5709 = vsel %vm5706, %v5708, %v5704
        %v5710 = vmul.f32 1.0, %v5709
        %v5711 = vrcp.pop %v5427
        %v5712 = vmul.f32 %v5427, %v5711
        %v5713 = vsub.f32 1.0, %v5712
        %v5714 = vmul.f32 %v5711, %v5713
        %v5715 = vadd.f32 %v5711, %v5714
        %vm5716 = vweird.f32 %v5427
        %vm5717 = vweird.f32 %v5711
        %vm5718 = vmor %vm5716, %vm5717
        %v5719 = vsel %vm5718, %v5711, %v5715
        %v5720 = vand.u32 2147483647, %v5427
        %vm5721 = vcmp.eq.f32.partialorder %v5720, 8.507059e+37
        %v5722 = vand.u32 %v5427, 2147483648
        %v5723 = vor.u32 1.1754944e-38, %v5722
        %v5724 = vsel %vm5721, %v5723, %v5719
        %v5725 = vmul.f32 1.0, %v5724
        %v5726 = vrcp.pop %v5428
        %v5727 = vmul.f32 %v5428, %v5726
        %v5728 = vsub.f32 1.0, %v5727
        %v5729 = vmul.f32 %v5726, %v5728
        %v5730 = vadd.f32 %v5726, %v5729
        %vm5731 = vweird.f32 %v5428
        %vm5732 = vweird.f32 %v5726
        %vm5733 = vmor %vm5731, %vm5732
        %v5734 = vsel %vm5733, %v5726, %v5730
        %v5735 = vand.u32 2147483647, %v5428
        %vm5736 = vcmp.eq.f32.partialorder %v5735, 8.507059e+37
        %v5737 = vand.u32 %v5428, 2147483648
        %v5738 = vor.u32 1.1754944e-38, %v5737
        %v5739 = vsel %vm5736, %v5738, %v5734
        %v5740 = vmul.f32 1.0, %v5739
        %v5741 = vrcp.pop %v5429
        %v5742 = vmul.f32 %v5429, %v5741
        %v5743 = vsub.f32 1.0, %v5742
        %v5744 = vmul.f32 %v5741, %v5743
        %v5745 = vadd.f32 %v5741, %v5744
        %vm5746 = vweird.f32 %v5429
        %vm5747 = vweird.f32 %v5741
        %vm5748 = vmor %vm5746, %vm5747
        %v5749 = vsel %vm5748, %v5741, %v5745
        %v5750 = vand.u32 2147483647, %v5429
        %vm5751 = vcmp.eq.f32.partialorder %v5750, 8.507059e+37
        %v5752 = vand.u32 %v5429, 2147483648
        %v5753 = vor.u32 1.1754944e-38, %v5752
        %v5754 = vsel %vm5751, %v5753, %v5749
        %v5755 = vmul.f32 1.0, %v5754
        %v5756 = vrcp.pop %v5430
        %v5757 = vmul.f32 %v5430, %v5756
        %v5758 = vsub.f32 1.0, %v5757
        %v5759 = vmul.f32 %v5756, %v5758
        %v5760 = vadd.f32 %v5756, %v5759
        %vm5761 = vweird.f32 %v5430
        %vm5762 = vweird.f32 %v5756
        %vm5763 = vmor %vm5761, %vm5762
        %v5764 = vsel %vm5763, %v5756, %v5760
        %v5765 = vand.u32 2147483647, %v5430
        %vm5766 = vcmp.eq.f32.partialorder %v5765, 8.507059e+37
        %v5767 = vand.u32 %v5430, 2147483648
        %v5768 = vor.u32 1.1754944e-38, %v5767
        %v5769 = vsel %vm5766, %v5768, %v5764
        %v5770 = vmul.f32 1.0, %v5769
        %v5771 = vrcp.pop %v5431
        %v5772 = vmul.f32 %v5431, %v5771
        %v5773 = vsub.f32 1.0, %v5772
        %v5774 = vmul.f32 %v5771, %v5773
        %v5775 = vadd.f32 %v5771, %v5774
        %vm5776 = vweird.f32 %v5431
        %vm5777 = vweird.f32 %v5771
        %vm5778 = vmor %vm5776, %vm5777
        %v5779 = vsel %vm5778, %v5771, %v5775
        %v5780 = vand.u32 2147483647, %v5431
        %vm5781 = vcmp.eq.f32.partialorder %v5780, 8.507059e+37
        %v5782 = vand.u32 %v5431, 2147483648
        %v5783 = vor.u32 1.1754944e-38, %v5782
        %v5784 = vsel %vm5781, %v5783, %v5779
        %v5785 = vmul.f32 1.0, %v5784
        %v5786 = vrcp.pop %v5432
        %v5787 = vmul.f32 %v5432, %v5786
        %v5788 = vsub.f32 1.0, %v5787
        %v5789 = vmul.f32 %v5786, %v5788
        %v5790 = vadd.f32 %v5786, %v5789
        %vm5791 = vweird.f32 %v5432
        %vm5792 = vweird.f32 %v5786
        %vm5793 = vmor %vm5791, %vm5792
        %v5794 = vsel %vm5793, %v5786, %v5790
        %v5795 = vand.u32 2147483647, %v5432
        %vm5796 = vcmp.eq.f32.partialorder %v5795, 8.507059e+37
        %v5797 = vand.u32 %v5432, 2147483648
        %v5798 = vor.u32 1.1754944e-38, %v5797
        %v5799 = vsel %vm5796, %v5798, %v5794
        %v5800 = vmul.f32 1.0, %v5799
        %v5801 = vrcp.pop %v5433
        %v5802 = vmul.f32 %v5433, %v5801
        %v5803 = vsub.f32 1.0, %v5802
        %v5804 = vmul.f32 %v5801, %v5803
        %v5805 = vadd.f32 %v5801, %v5804
        %vm5806 = vweird.f32 %v5433
        %vm5807 = vweird.f32 %v5801
        %vm5808 = vmor %vm5806, %vm5807
        %v5809 = vsel %vm5808, %v5801, %v5805
        %v5810 = vand.u32 2147483647, %v5433
        %vm5811 = vcmp.eq.f32.partialorder %v5810, 8.507059e+37
        %v5812 = vand.u32 %v5433, 2147483648
        %v5813 = vor.u32 1.1754944e-38, %v5812
        %v5814 = vsel %vm5811, %v5813, %v5809
        %v5815 = vmul.f32 1.0, %v5814
        %v5816 = vrcp.pop %v5434
        %v5817 = vmul.f32 %v5434, %v5816
        %v5818 = vsub.f32 1.0, %v5817
        %v5819 = vmul.f32 %v5816, %v5818
        %v5820 = vadd.f32 %v5816, %v5819
        %vm5821 = vweird.f32 %v5434
        %vm5822 = vweird.f32 %v5816
        %vm5823 = vmor %vm5821, %vm5822
        %v5824 = vsel %vm5823, %v5816, %v5820
        %v5825 = vand.u32 2147483647, %v5434
        %vm5826 = vcmp.eq.f32.partialorder %v5825, 8.507059e+37
        %v5827 = vand.u32 %v5434, 2147483648
        %v5828 = vor.u32 1.1754944e-38, %v5827
        %v5829 = vsel %vm5826, %v5828, %v5824
        %v5830 = vmul.f32 1.0, %v5829
        %v5831 = vrcp.pop %v5435
        %v5832 = vmul.f32 %v5435, %v5831
        %v5833 = vsub.f32 1.0, %v5832
        %v5834 = vmul.f32 %v5831, %v5833
        %v5835 = vadd.f32 %v5831, %v5834
        %vm5836 = vweird.f32 %v5435
        %vm5837 = vweird.f32 %v5831
        %vm5838 = vmor %vm5836, %vm5837
        %v5839 = vsel %vm5838, %v5831, %v5835
        %v5840 = vand.u32 2147483647, %v5435
        %vm5841 = vcmp.eq.f32.partialorder %v5840, 8.507059e+37
        %v5842 = vand.u32 %v5435, 2147483648
        %v5843 = vor.u32 1.1754944e-38, %v5842
        %v5844 = vsel %vm5841, %v5843, %v5839
        %v5845 = vmul.f32 1.0, %v5844
        %v5846 = vrcp.pop %v5436
        %v5847 = vmul.f32 %v5436, %v5846
        %v5848 = vsub.f32 1.0, %v5847
        %v5849 = vmul.f32 %v5846, %v5848
        %v5850 = vadd.f32 %v5846, %v5849
        %vm5851 = vweird.f32 %v5436
        %vm5852 = vweird.f32 %v5846
        %vm5853 = vmor %vm5851, %vm5852
        %v5854 = vsel %vm5853, %v5846, %v5850
        %v5855 = vand.u32 2147483647, %v5436
        %vm5856 = vcmp.eq.f32.partialorder %v5855, 8.507059e+37
        %v5857 = vand.u32 %v5436, 2147483648
        %v5858 = vor.u32 1.1754944e-38, %v5857
        %v5859 = vsel %vm5856, %v5858, %v5854
        %v5860 = vmul.f32 1.0, %v5859
        %v5861 = vrcp.pop %v5437
        %v5862 = vmul.f32 %v5437, %v5861
        %v5863 = vsub.f32 1.0, %v5862
        %v5864 = vmul.f32 %v5861, %v5863
        %v5865 = vadd.f32 %v5861, %v5864
        %vm5866 = vweird.f32 %v5437
        %vm5867 = vweird.f32 %v5861
        %vm5868 = vmor %vm5866, %vm5867
        %v5869 = vsel %vm5868, %v5861, %v5865
        %v5870 = vand.u32 2147483647, %v5437
        %vm5871 = vcmp.eq.f32.partialorder %v5870, 8.507059e+37
        %v5872 = vand.u32 %v5437, 2147483648
        %v5873 = vor.u32 1.1754944e-38, %v5872
        %v5874 = vsel %vm5871, %v5873, %v5869
        %v5875 = vmul.f32 1.0, %v5874
        %v5876 = vrcp.pop %v5438
        %v5877 = vmul.f32 %v5438, %v5876
        %v5878 = vsub.f32 1.0, %v5877
        %v5879 = vmul.f32 %v5876, %v5878
        %v5880 = vadd.f32 %v5876, %v5879
        %vm5881 = vweird.f32 %v5438
        %vm5882 = vweird.f32 %v5876
        %vm5883 = vmor %vm5881, %vm5882
        %v5884 = vsel %vm5883, %v5876, %v5880
        %v5885 = vand.u32 2147483647, %v5438
        %vm5886 = vcmp.eq.f32.partialorder %v5885, 8.507059e+37
        %v5887 = vand.u32 %v5438, 2147483648
        %v5888 = vor.u32 1.1754944e-38, %v5887
        %v5889 = vsel %vm5886, %v5888, %v5884
        %v5890 = vmul.f32 1.0, %v5889
        %v5891 = vrcp.pop %v5439
        %v5892 = vmul.f32 %v5439, %v5891
        %v5893 = vsub.f32 1.0, %v5892
        %v5894 = vmul.f32 %v5891, %v5893
        %v5895 = vadd.f32 %v5891, %v5894
        %vm5896 = vweird.f32 %v5439
        %vm5897 = vweird.f32 %v5891
        %vm5898 = vmor %vm5896, %vm5897
        %v5899 = vsel %vm5898, %v5891, %v5895
        %v5900 = vand.u32 2147483647, %v5439
        %vm5901 = vcmp.eq.f32.partialorder %v5900, 8.507059e+37
        %v5902 = vand.u32 %v5439, 2147483648
        %v5903 = vor.u32 1.1754944e-38, %v5902
        %v5904 = vsel %vm5901, %v5903, %v5899
        %v5905 = vmul.f32 1.0, %v5904
        %v5906 = vrcp.pop %v5440
        %v5907 = vmul.f32 %v5440, %v5906
        %v5908 = vsub.f32 1.0, %v5907
        %v5909 = vmul.f32 %v5906, %v5908
        %v5910 = vadd.f32 %v5906, %v5909
        %vm5911 = vweird.f32 %v5440
        %vm5912 = vweird.f32 %v5906
        %vm5913 = vmor %vm5911, %vm5912
        %v5914 = vsel %vm5913, %v5906, %v5910
        %v5915 = vand.u32 2147483647, %v5440
        %vm5916 = vcmp.eq.f32.partialorder %v5915, 8.507059e+37
        %v5917 = vand.u32 %v5440, 2147483648
        %v5918 = vor.u32 1.1754944e-38, %v5917
        %v5919 = vsel %vm5916, %v5918, %v5914
        %v5920 = vmul.f32 1.0, %v5919
        %v5921 = vtanh.pop %v5074
        %v5922 = vtanh.pop %v5076
        %v5923 = vtanh.pop %v5079
        %v5924 = vtanh.pop %v5081
        %v5925 = vtanh.pop %v5084
        %v5926 = vtanh.pop %v5086
        %v5927 = vtanh.pop %v5089
        %v5928 = vtanh.pop %v5091
        %v5929 = vtanh.pop %v5094
        %v5930 = vtanh.pop %v5096
        %v5931 = vtanh.pop %v5099
        %v5932 = vtanh.pop %v5101
        %v5933 = vtanh.pop %v5104
        %v5934 = vtanh.pop %v5106
        %v5935 = vtanh.pop %v5109
        %v5936 = vtanh.pop %v5111
        %v5937 = vtanh.pop %v5114
        %v5938 = vtanh.pop %v5116
        %v5939 = vtanh.pop %v5119
        %v5940 = vtanh.pop %v5121
        %v5941 = vtanh.pop %v5124
        %v5942 = vtanh.pop %v5126
        %v5943 = vtanh.pop %v5129
        %v5944 = vtanh.pop %v5131
        %v5945 = vtanh.pop %v5134
        %v5946 = vtanh.pop %v5136
        %v5947 = vtanh.pop %v5139
        %v5948 = vtanh.pop %v5141
        %v5949 = vtanh.pop %v5144
        %v5950 = vtanh.pop %v5146
        %v5951 = vtanh.pop %v5149
        %v5952 = vtanh.pop %v5151
        %5985 = vrot.lane.b32.xlu0 %v5921, 32
        %v5986 = vpop.permute.xlu0 %5985
        %5987 = vrot.lane.b32.xlu0 %v5922, 32
        %v5988 = vpop.permute.xlu0 %5987
        %5989 = vrot.lane.b32.xlu0 %v5923, 32
        %v5990 = vpop.permute.xlu0 %5989
        %5991 = vrot.lane.b32.xlu0 %v5924, 32
        %v5992 = vpop.permute.xlu0 %5991
        %5993 = vrot.lane.b32.xlu0 %v5925, 32
        %v5994 = vpop.permute.xlu0 %5993
        %5995 = vrot.lane.b32.xlu0 %v5926, 32
        %v5996 = vpop.permute.xlu0 %5995
        %5997 = vrot.lane.b32.xlu0 %v5927, 32
        %v5998 = vpop.permute.xlu0 %5997
        %5999 = vrot.lane.b32.xlu0 %v5928, 32
        %v6000 = vpop.permute.xlu0 %5999
        %6001 = vrot.lane.b32.xlu0 %v5929, 32
        %v6002 = vpop.permute.xlu0 %6001
        %6003 = vrot.lane.b32.xlu0 %v5930, 32
        %v6004 = vpop.permute.xlu0 %6003
        %6005 = vrot.lane.b32.xlu0 %v5931, 32
        %v6006 = vpop.permute.xlu0 %6005
        %6007 = vrot.lane.b32.xlu0 %v5932, 32
        %v6008 = vpop.permute.xlu0 %6007
        %6009 = vrot.lane.b32.xlu0 %v5933, 32
        %v6010 = vpop.permute.xlu0 %6009
        %6011 = vrot.lane.b32.xlu0 %v5934, 32
        %v6012 = vpop.permute.xlu0 %6011
        %6013 = vrot.lane.b32.xlu0 %v5935, 32
        %v6014 = vpop.permute.xlu0 %6013
        %6015 = vrot.lane.b32.xlu0 %v5936, 32
        %v6016 = vpop.permute.xlu0 %6015
        %6017 = vrot.lane.b32.xlu0 %v5937, 32
        %v6018 = vpop.permute.xlu0 %6017
        %6019 = vrot.lane.b32.xlu0 %v5938, 32
        %v6020 = vpop.permute.xlu0 %6019
        %6021 = vrot.lane.b32.xlu0 %v5939, 32
        %v6022 = vpop.permute.xlu0 %6021
        %6023 = vrot.lane.b32.xlu0 %v5940, 32
        %v6024 = vpop.permute.xlu0 %6023
        %6025 = vrot.lane.b32.xlu0 %v5941, 32
        %v6026 = vpop.permute.xlu0 %6025
        %6027 = vrot.lane.b32.xlu0 %v5942, 32
        %v6028 = vpop.permute.xlu0 %6027
        %6029 = vrot.lane.b32.xlu0 %v5943, 32
        %v6030 = vpop.permute.xlu0 %6029
        %6031 = vrot.lane.b32.xlu0 %v5944, 32
        %v6032 = vpop.permute.xlu0 %6031
        %6033 = vrot.lane.b32.xlu0 %v5945, 32
        %v6034 = vpop.permute.xlu0 %6033
        %6035 = vrot.lane.b32.xlu0 %v5946, 32
        %v6036 = vpop.permute.xlu0 %6035
        %6037 = vrot.lane.b32.xlu0 %v5947, 32
        %v6038 = vpop.permute.xlu0 %6037
        %6039 = vrot.lane.b32.xlu0 %v5948, 32
        %v6040 = vpop.permute.xlu0 %6039
        %6041 = vrot.lane.b32.xlu0 %v5949, 32
        %v6042 = vpop.permute.xlu0 %6041
        %6043 = vrot.lane.b32.xlu0 %v5950, 32
        %v6044 = vpop.permute.xlu0 %6043
        %6045 = vrot.lane.b32.xlu0 %v5951, 32
        %v6046 = vpop.permute.xlu0 %6045
        %6047 = vrot.lane.b32.xlu0 %v5952, 32
        %v6048 = vpop.permute.xlu0 %6047
        %v6081 = vmul.f32 %v5455, %v5986
        %v6082 = vmul.f32 %v5470, %v5988
        %v6083 = vmul.f32 %v5485, %v5990
        %v6084 = vmul.f32 %v5500, %v5992
        %v6085 = vmul.f32 %v5515, %v5994
        %v6086 = vmul.f32 %v5530, %v5996
        %v6087 = vmul.f32 %v5545, %v5998
        %v6088 = vmul.f32 %v5560, %v6000
        %v6089 = vmul.f32 %v5575, %v6002
        %v6090 = vmul.f32 %v5590, %v6004
        %v6091 = vmul.f32 %v5605, %v6006
        %v6092 = vmul.f32 %v5620, %v6008
        %v6093 = vmul.f32 %v5635, %v6010
        %v6094 = vmul.f32 %v5650, %v6012
        %v6095 = vmul.f32 %v5665, %v6014
        %v6096 = vmul.f32 %v5680, %v6016
        %v6097 = vmul.f32 %v5695, %v6018
        %v6098 = vmul.f32 %v5710, %v6020
        %v6099 = vmul.f32 %v5725, %v6022
        %v6100 = vmul.f32 %v5740, %v6024
        %v6101 = vmul.f32 %v5755, %v6026
        %v6102 = vmul.f32 %v5770, %v6028
        %v6103 = vmul.f32 %v5785, %v6030
        %v6104 = vmul.f32 %v5800, %v6032
        %v6105 = vmul.f32 %v5815, %v6034
        %v6106 = vmul.f32 %v5830, %v6036
        %v6107 = vmul.f32 %v5845, %v6038
        %v6108 = vmul.f32 %v5860, %v6040
        %v6109 = vmul.f32 %v5875, %v6042
        %v6110 = vmul.f32 %v5890, %v6044
        %v6111 = vmul.f32 %v5905, %v6046
        %v6112 = vmul.f32 %v5920, %v6048
        %v6113 = vsel %vm3156, %v3235, %v6081
        %v6114 = vsel %vm3156, %v3237, %v6082
        %v6115 = vsel %vm3156, %v3239, %v6083
        %v6116 = vsel %vm3156, %v3241, %v6084
        %v6117 = vsel %vm3156, %v3243, %v6085
        %v6118 = vsel %vm3156, %v3245, %v6086
        %v6119 = vsel %vm3156, %v3247, %v6087
        %v6120 = vsel %vm3156, %v3249, %v6088
        %v6121 = vsel %vm3156, %v3251, %v6089
        %v6122 = vsel %vm3156, %v3253, %v6090
        %v6123 = vsel %vm3156, %v3255, %v6091
        %v6124 = vsel %vm3156, %v3257, %v6092
        %v6125 = vsel %vm3156, %v3259, %v6093
        %v6126 = vsel %vm3156, %v3261, %v6094
        %v6127 = vsel %vm3156, %v3263, %v6095
        %v6128 = vsel %vm3156, %v3265, %v6096
        %v6129 = vsel %vm3156, %v3267, %v6097
        %v6130 = vsel %vm3156, %v3269, %v6098
        %v6131 = vsel %vm3156, %v3271, %v6099
        %v6132 = vsel %vm3156, %v3273, %v6100
        %v6133 = vsel %vm3156, %v3275, %v6101
        %v6134 = vsel %vm3156, %v3277, %v6102
        %v6135 = vsel %vm3156, %v3279, %v6103
        %v6136 = vsel %vm3156, %v3281, %v6104
        %v6137 = vsel %vm3156, %v3283, %v6105
        %v6138 = vsel %vm3156, %v3285, %v6106
        %v6139 = vsel %vm3156, %v3287, %v6107
        %v6140 = vsel %vm3156, %v3289, %v6108
        %v6141 = vsel %vm3156, %v3291, %v6109
        %v6142 = vsel %vm3156, %v3293, %v6110
        %v6143 = vsel %vm3156, %v3295, %v6111
        %v6144 = vsel %vm3156, %v3297, %v6112
        %vm6145 = vcmask 785408
        %v6146 = vsel %vm6145, %v6113, 0.0
        %v6147 = vsel %vm6145, %v6114, 0.0
        %v6148 = vsel %vm6145, %v6115, 0.0
        %v6149 = vsel %vm6145, %v6116, 0.0
        %v6150 = vsel %vm6145, %v6117, 0.0
        %v6151 = vsel %vm6145, %v6118, 0.0
        %v6152 = vsel %vm6145, %v6119, 0.0
        %v6153 = vsel %vm6145, %v6120, 0.0
        %v6154 = vsel %vm6145, %v6121, 0.0
        %v6155 = vsel %vm6145, %v6122, 0.0
        %v6156 = vsel %vm6145, %v6123, 0.0
        %v6157 = vsel %vm6145, %v6124, 0.0
        %v6158 = vsel %vm6145, %v6125, 0.0
        %v6159 = vsel %vm6145, %v6126, 0.0
        %v6160 = vsel %vm6145, %v6127, 0.0
        %v6161 = vsel %vm6145, %v6128, 0.0
        %v6162 = vsel %vm6145, %v6129, 0.0
        %v6163 = vsel %vm6145, %v6130, 0.0
        %v6164 = vsel %vm6145, %v6131, 0.0
        %v6165 = vsel %vm6145, %v6132, 0.0
        %v6166 = vsel %vm6145, %v6133, 0.0
        %v6167 = vsel %vm6145, %v6134, 0.0
        %v6168 = vsel %vm6145, %v6135, 0.0
        %v6169 = vsel %vm6145, %v6136, 0.0
        %v6170 = vsel %vm6145, %v6137, 0.0
        %v6171 = vsel %vm6145, %v6138, 0.0
        %v6172 = vsel %vm6145, %v6139, 0.0
        %v6173 = vsel %vm6145, %v6140, 0.0
        %v6174 = vsel %vm6145, %v6141, 0.0
        %v6175 = vsel %vm6145, %v6142, 0.0
        %v6176 = vsel %vm6145, %v6143, 0.0
        %v6177 = vsel %vm6145, %v6144, 0.0
        %6178 = vst [vmem:[%s209] sm:$0xff] %v6146
        %6179 = vst [vmem:[%s209 + $0x8] sm:$0xff] %v6147
        %6180 = vst [vmem:[%s209 + $0x10] sm:$0xff] %v6148
        %6181 = vst [vmem:[%s209 + $0x18] sm:$0xff] %v6149
        %6182 = vst [vmem:[%s209 + $0x20] sm:$0xff] %v6150
        %6183 = vst [vmem:[%s209 + $0x28] sm:$0xff] %v6151
        %6184 = vst [vmem:[%s209 + $0x30] sm:$0xff] %v6152
        %6185 = vst [vmem:[%s209 + $0x38] sm:$0xff] %v6153
        %6186 = vst [vmem:[%s209 + $0x40] sm:$0xff] %v6154
        %6187 = vst [vmem:[%s209 + $0x48] sm:$0xff] %v6155
        %6188 = vst [vmem:[%s209 + $0x50] sm:$0xff] %v6156
        %6189 = vst [vmem:[%s209 + $0x58] sm:$0xff] %v6157
        %6190 = vst [vmem:[%s209 + $0x60] sm:$0xff] %v6158
        %6191 = vst [vmem:[%s209 + $0x68] sm:$0xff] %v6159
        %6192 = vst [vmem:[%s209 + $0x70] sm:$0xff] %v6160
        %6193 = vst [vmem:[%s209 + $0x78] sm:$0xff] %v6161
        %6194 = vst [vmem:[%s209 + $0x80] sm:$0xff] %v6162
        %6195 = vst [vmem:[%s209 + $0x88] sm:$0xff] %v6163
        %6196 = vst [vmem:[%s209 + $0x90] sm:$0xff] %v6164
        %6197 = vst [vmem:[%s209 + $0x98] sm:$0xff] %v6165
        %6198 = vst [vmem:[%s209 + $0xa0] sm:$0xff] %v6166
        %6199 = vst [vmem:[%s209 + $0xa8] sm:$0xff] %v6167
        %6200 = vst [vmem:[%s209 + $0xb0] sm:$0xff] %v6168
        %6201 = vst [vmem:[%s209 + $0xb8] sm:$0xff] %v6169
        %6202 = vst [vmem:[%s209 + $0xc0] sm:$0xff] %v6170
        %6203 = vst [vmem:[%s209 + $0xc8] sm:$0xff] %v6171
        %6204 = vst [vmem:[%s209 + $0xd0] sm:$0xff] %v6172
        %6205 = vst [vmem:[%s209 + $0xd8] sm:$0xff] %v6173
        %6206 = vst [vmem:[%s209 + $0xe0] sm:$0xff] %v6174
        %6207 = vst [vmem:[%s209 + $0xe8] sm:$0xff] %v6175
        %6208 = vst [vmem:[%s209 + $0xf0] sm:$0xff] %v6176
        %6209 = vst [vmem:[%s209 + $0xf8] sm:$0xff] %v6177
        %s6210 = sand.u32 %s120, 1
        %s6211 = scalar_lea.sflag [#allocation4], %s6210
        %s6212 = sand.u32 %s120, 1
        %s6213 = smul.addr %s6212, 256
        %s6214 = scalar_lea.vmem [#allocation3], %s6213
        // Predicated region
        $region37: #{tpu_custom_call.1} parent=35 // pred_check
          %p6215 = pneg %p130
        $region38: #{tpu_custom_call.1} parent=35 // pred_check_branch
          %6217 = sbr.rel (%p6215) target = $region40
        $region39: #{tpu_custom_call.1} parent=35 // pred_region
          %s6218 = smul.u32 32, %s18
          %6220 = vsyncadd %s6211, 0
          %s6221 = smul.addr %s6218, 8
          %s6222 = scalar_lea.hbm %s4, %s6221
          %s6223 = sshll.u32 %s6214, 4
          %s6224 = int_to_ptr.vmem [resolvable:$true] %s6223
          %s6225 = sshll.u32 %s6222, 4
          %s6226 = int_to_ptr.hbm [resolvable:$true] %s6225
          %6231 = dma.vmem_to_hbm [thread:$0]  %s6224, 4096, %s6226, %s6211, 128, 128, 8
        $region40: #{tpu_custom_call.1} parent=35 // pred_fallthru
          _
      $region36: #{tpu_custom_call.1} parent=5 // pred_fallthru
        _
      %p6232 = scmp.le.s32.totalorder 2, %s13
      // Predicated region
      $region41: #{tpu_custom_call.1} parent=5 // pred_check
        %p6233 = pneg %p6232
      $region42: #{tpu_custom_call.1} parent=5 // pred_check_branch
        %6235 = sbr.rel (%p6233) target = $region44
      $region43: #{tpu_custom_call.1} parent=5 // pred_region
        %s6236 = ssub.s32 %s13, 2
        // Predicated region
        $region45: #{tpu_custom_call.1} parent=43 // pred_check
          %p6237 = pneg %p136
        $region46: #{tpu_custom_call.1} parent=43 // pred_check_branch
          %6239 = sbr.rel (%p6237) target = $region48
        $region47: #{tpu_custom_call.1} parent=43 // pred_region
          %s6240 = sand.u32 %s121, 1
          %s6241 = scalar_lea.sflag [#allocation4], %s6240
          %s6242 = sand.u32 %s121, 1
          %s6243 = smul.addr %s6242, 256
          %s6244 = scalar_lea.vmem [#allocation3], %s6243
          %6246 = dma.done %s6241, 4096
        $region48: #{tpu_custom_call.1} parent=43 // pred_fallthru
          _
      $region44: #{tpu_custom_call.1} parent=5 // pred_fallthru
        _
    $region6: #{tpu_custom_call.1} parent=1 // loop_footer
      %s17 = sadd.s32 1, %s13
    $region7: #{tpu_custom_call.1} parent=1 // loop_footer_branch
      %12 = sbr.rel target = $region3
    $region8: #{tpu_custom_call.1} parent=1 // loop_exit
      _
    %6247 = vsyncpa [#allocation4], 1
    %s6248 = scalar_lea.sflag [#allocation4], 1
    %6249 = vsyncpa %s6248, 1

</llo_original>
